<compile_context>
chip_gen: v7x
topology: tpu7x:2x2x1
jax: 0.10.0
libtpu: 0.0.40
codegen_flags: <defaults>
</compile_context>

<pallas_src>
import functools
import math

import jax
import jax.numpy as jnp
from jax.experimental import pallas as pl
from jax.experimental.pallas import tpu as pltpu

BN_EPS = 1e-5     # torch.nn.BatchNorm1d eps
GEN_EPS = 1e-7    # GENConv message eps
LN_EPS = 1e-5     # torch.nn.LayerNorm eps
LANE = 128

# MXU-input dtype: bf16 inputs + f32 accumulation is ~4-8x faster on v6e/v7x
# and halves adjacency/EP HBM+VMEM traffic.  Set to jnp.float32 for bit-closer
# parity with the f32 PyTorch reference (accumulation is always f32).
MXU_DTYPE = jnp.bfloat16

# Explicit scoped-VMEM budget (defaults: 16 MiB v5e / 32 MiB v6e,v7x).
_VMEM_LIMIT_BYTES = 48 * 1024 * 1024

# Tile sizing guidance (largest that fits VMEM with double buffering):
#   v5e / v6e (128 MiB VMEM): tile_n = 256..512, tile_k = 512..2048
#   v7x       (64 MiB VMEM):  tile_n = 128..256, tile_k = 512..1024
# Defaults below are sized for the small demo graph.


# ----------------------------------------------------------------------------
# Kernels
# ----------------------------------------------------------------------------
def _pre_kernel(x_ref, bn_g_ref, bn_b_ref, bn_m_ref, bn_v_ref, t_ref,
                h_ref, cmax_ref):
    """BatchNorm(eval) + ReLU per row tile, plus running per-feature max of
    the GENConv softmax logits t*(h+eps) over all source nodes."""
    i = pl.program_id(0)
    x = x_ref[...]
    h = (x - bn_m_ref[...]) * jax.lax.rsqrt(bn_v_ref[...] + BN_EPS)
    h = h * bn_g_ref[...] + bn_b_ref[...]
    h = jnp.maximum(h, 0.0)
    # Dropout: identity in eval mode.
    h_ref[...] = h

    t = t_ref[0, 0]
    tile_max = jnp.max(t * (h + GEN_EPS), axis=0, keepdims=True)  # (1, CP)

    @pl.when(i == 0)
    def _():
        cmax_ref[...] = tile_max

    @pl.when(i > 0)
    def _():
        cmax_ref[...] = jnp.maximum(cmax_ref[...], tile_max)


def _ep_kernel(c_pad, h_ref, cmax_ref, t_ref, ep_ref):
    """Precompute the softmax-aggregation operands once per layer:
    E = exp(t*m - colmax) and P = E*m, packed as [E | P] in bf16 so the main
    O(N^2) loop is a single adj @ EP matmul with no EUP/VPU work."""
    t = t_ref[0, 0]
    m = h_ref[...] + GEN_EPS                              # messages (f32)
    e = jnp.exp(t * m - cmax_ref[...])                    # f32 on EUP; <= 1
    ep_ref[:, :c_pad] = e.astype(ep_ref.dtype)            # denominator operand
    ep_ref[:, c_pad:] = (e * m).astype(ep_ref.dtype)      # numerator operand


def _agg_layer_kernel(inv_hidden_count, c_pad,
                      adj_ref, ep_ref, h_tgt_ref, x_ref,
                      w1_ref, b1_ref, ln_g_ref, ln_b_ref, w2_ref, b2_ref,
                      out_ref, acc_ref):
    """GENConv softmax aggregation (one fused MXU matmul over source tiles)
    + MLP + 'res+' residual, for one target row tile."""
    k = pl.program_id(1)

    @pl.when(k == 0)
    def _():
        acc_ref[...] = jnp.zeros_like(acc_ref)

    # --- aggregation: one matmul accumulates [denom | num] ------------------
    acc_ref[...] += jnp.dot(adj_ref[...], ep_ref[...],
                            preferred_element_type=jnp.float32)

    # --- finalize: normalize, root add, GENConv MLP, 'res+' residual --------
    @pl.when(k == pl.num_programs(1) - 1)
    def _():
        d = acc_ref[:, :c_pad]                            # (TN, CP) denom
        num = acc_ref[:, c_pad:]                          # (TN, CP) numerator
        agg = jnp.where(d > 0.0, num / d, 0.0)
        z = agg + h_tgt_ref[...]
        y = jnp.dot(z.astype(MXU_DTYPE), w1_ref[...],
                    preferred_element_type=jnp.float32) + b1_ref[...]  # (TN, HP)
        # Per-node LayerNorm over the real 2*C hidden features.  Padded
        # columns of y are exactly zero (zero-padded w1/b1), so full-row sums
        # divided by the real count are exact.
        mu = jnp.sum(y, axis=-1, keepdims=True) * inv_hidden_count
        var = jnp.sum(y * y, axis=-1, keepdims=True) * inv_hidden_count - mu * mu
        var = jnp.maximum(var, 0.0)
        y = (y - mu) * jax.lax.rsqrt(var + LN_EPS)
        y = y * ln_g_ref[...] + ln_b_ref[...]
        y = jnp.maximum(y, 0.0)
        y = jnp.dot(y.astype(MXU_DTYPE), w2_ref[...],
                    preferred_element_type=jnp.float32) + b2_ref[...]  # (TN, CP)
        out_ref[...] = x_ref[...] + y                     # 'res+' residual


def _final_linear_kernel(x_ref, w_ref, b_ref, out_ref):
    out_ref[...] = (jnp.dot(x_ref[...].astype(MXU_DTYPE), w_ref[...],
                            preferred_element_type=jnp.float32) + b_ref[...])


# ----------------------------------------------------------------------------
# pallas_call wrappers
# ----------------------------------------------------------------------------
def _round_up(v, m):
    return (v + m - 1) // m * m


def _pad2(a, rows, cols, value=0.0):
    return jnp.pad(a, ((0, rows - a.shape[0]), (0, cols - a.shape[1])),
                   constant_values=value)


def _compiler_params(dims):
    return pltpu.CompilerParams(dimension_semantics=dims,
                                vmem_limit_bytes=_VMEM_LIMIT_BYTES)


def _pre_call(xp, lp, tile_n):
    n_pad, cp = xp.shape
    num_i = n_pad // tile_n
    row = lambda i: (i, 0)
    const = lambda i: (0, 0)
    return pl.pallas_call(
        _pre_kernel,
        out_shape=(jax.ShapeDtypeStruct((n_pad, cp), jnp.float32),
                   jax.ShapeDtypeStruct((1, cp), jnp.float32)),
        grid=(num_i,),
        in_specs=[
            pl.BlockSpec((tile_n, cp), row),                       # x
            pl.BlockSpec((1, cp), const),                          # bn_gamma
            pl.BlockSpec((1, cp), const),                          # bn_beta
            pl.BlockSpec((1, cp), const),                          # bn_mean
            pl.BlockSpec((1, cp), const),                          # bn_var
            pl.BlockSpec(memory_space=pltpu.MemorySpace.SMEM),     # t (scalar)
        ],
        out_specs=(pl.BlockSpec((tile_n, cp), row),                # h
                   pl.BlockSpec((1, cp), const)),                  # colmax acc
        # colmax accumulates across row tiles -> axis must be 'arbitrary'.
        compiler_params=_compiler_params(("arbitrary",)),
    )(xp, lp["bn_gamma"], lp["bn_beta"], lp["bn_mean"], lp["bn_var"], lp["t"])


def _ep_call(h, cmax, t, tile_n):
    n_pad, cp = h.shape
    num_i = n_pad // tile_n
    kern = functools.partial(_ep_kernel, cp)
    return pl.pallas_call(
        kern,
        out_shape=jax.ShapeDtypeStruct((n_pad, 2 * cp), MXU_DTYPE),
        grid=(num_i,),
        in_specs=[
            pl.BlockSpec((tile_n, cp), lambda i: (i, 0)),          # h
            pl.BlockSpec((1, cp), lambda i: (0, 0)),               # colmax
            pl.BlockSpec(memory_space=pltpu.MemorySpace.SMEM),     # t (scalar)
        ],
        out_specs=pl.BlockSpec((tile_n, 2 * cp), lambda i: (i, 0)),
        compiler_params=_compiler_params(("parallel",)),
    )(h, cmax, t)


def _layer_call(adj_p, ep, h, xp, lp, c_real, tile_n, tile_k):
    n_pad, cp = xp.shape
    hp = lp["w1"].shape[1]
    num_i, num_k = n_pad // tile_n, n_pad // tile_k
    kern = functools.partial(_agg_layer_kernel, 1.0 / float(2 * c_real), cp)
    tgt = lambda i, k: (i, 0)
    src = lambda i, k: (k, 0)
    const = lambda i, k: (0, 0)
    return pl.pallas_call(
        kern,
        out_shape=jax.ShapeDtypeStruct((n_pad, cp), jnp.float32),
        grid=(num_i, num_k),
        in_specs=[
            pl.BlockSpec((tile_n, tile_k), lambda i, k: (i, k)),   # adj tile
            pl.BlockSpec((tile_k, 2 * cp), src),                   # [E | E*m]
            pl.BlockSpec((tile_n, cp), tgt),                       # h (targets)
            pl.BlockSpec((tile_n, cp), tgt),                       # x (residual)
            pl.BlockSpec((cp, hp), const),                         # w1 (bf16)
            pl.BlockSpec((1, hp), const),                          # b1
            pl.BlockSpec((1, hp), const),                          # ln_gamma
            pl.BlockSpec((1, hp), const),                          # ln_beta
            pl.BlockSpec((hp, cp), const),                         # w2 (bf16)
            pl.BlockSpec((1, cp), const),                          # b2
        ],
        out_specs=pl.BlockSpec((tile_n, cp), tgt),
        scratch_shapes=[pltpu.VMEM((tile_n, 2 * cp), jnp.float32)],  # [d | num]
        compiler_params=_compiler_params(("parallel", "arbitrary")),
    )(adj_p, ep, h, xp,
      lp["w1"], lp["b1"], lp["ln_gamma"], lp["ln_beta"], lp["w2"], lp["b2"])


def _final_call(xp, w, b, tile_n):
    n_pad, cp = xp.shape
    num_i = n_pad // tile_n
    return pl.pallas_call(
        _final_linear_kernel,
        out_shape=jax.ShapeDtypeStruct((n_pad, LANE), jnp.float32),
        grid=(num_i,),
        in_specs=[pl.BlockSpec((tile_n, cp), lambda i: (i, 0)),
                  pl.BlockSpec((cp, LANE), lambda i: (0, 0)),
                  pl.BlockSpec((1, LANE), lambda i: (0, 0))],
        out_specs=pl.BlockSpec((tile_n, LANE), lambda i: (i, 0)),
        compiler_params=_compiler_params(("parallel",)),
    )(xp, w, b)


@functools.partial(jax.jit, static_argnames=("tile_n", "tile_k"))
def deeper_gcn_forward(x, adj, params, *, tile_n=128, tile_k=128):
    """DeeperGCN forward.  x: (N, C) f32; adj: (N, N) f32 dense adjacency
    (adj[i, j] == 1  <=>  edge j -> i).  Returns (N, 1) f32."""
    assert tile_n % LANE == 0 and tile_k % LANE == 0
    n_real, c_real = x.shape
    cp = _round_up(c_real, LANE)
    hp = _round_up(2 * c_real, LANE)
    n_pad = _round_up(n_real, math.lcm(tile_n, tile_k))

    xp = _pad2(x, n_pad, cp)
    # adjacency in the MXU input dtype (0/1 values are exact in bf16);
    # halves the dominant HBM stream when MXU_DTYPE is bf16.
    adj_p = _pad2(adj, n_pad, n_pad).astype(MXU_DTYPE)

    for lp in params["layers"]:
        lpp = {
            "bn_gamma": _pad2(lp["bn_gamma"], 1, cp),
            "bn_beta": _pad2(lp["bn_beta"], 1, cp),
            "bn_mean": _pad2(lp["bn_mean"], 1, cp),
            "bn_var": _pad2(lp["bn_var"], 1, cp, value=1.0),
            "t": lp["t"],
            "w1": _pad2(lp["w1"], cp, hp).astype(MXU_DTYPE),
            "b1": _pad2(lp["b1"], 1, hp),
            "ln_gamma": _pad2(lp["ln_gamma"], 1, hp),
            "ln_beta": _pad2(lp["ln_beta"], 1, hp),
            "w2": _pad2(lp["w2"], hp, cp).astype(MXU_DTYPE),
            "b2": _pad2(lp["b2"], 1, cp),
        }
        h, cmax = _pre_call(xp, lpp, tile_n)
        ep = _ep_call(h, cmax, lpp["t"], tile_n)
        xp = _layer_call(adj_p, ep, h, xp, lpp, c_real, tile_n, tile_k)

    w_final = _pad2(params["w_final"], cp, LANE).astype(MXU_DTYPE)
    b_final = _pad2(params["b_final"], 1, LANE)
    yp = _final_call(xp, w_final, b_final, tile_n)
    return yp[:n_real, :1]


# ----------------------------------------------------------------------------
# Deterministic parameter construction (mirrors the PyTorch module shapes)
# ----------------------------------------------------------------------------
def init_params(key, input_dim, num_layers):
    c = input_dim
    params = {"layers": []}
    for _ in range(num_layers):
        key, k1, k2, k3, k4 = jax.random.split(key, 5)
        params["layers"].append({
            # BatchNorm(input_dim): affine + running stats (eval mode)
            "bn_gamma": jnp.ones((1, c), jnp.float32),
            "bn_beta": jnp.zeros((1, c), jnp.float32),
            "bn_mean": jnp.zeros((1, c), jnp.float32),
            "bn_var": jnp.ones((1, c), jnp.float32),
            # GENConv learnable temperature (learn_t=True, t=1.0)
            "t": jnp.ones((1, 1), jnp.float32),
            # GENConv MLP: Linear(C,2C) -> LayerNorm(2C) -> ReLU -> Linear(2C,C)
            "w1": 0.1 * jax.random.normal(k1, (c, 2 * c), jnp.float32),
            "b1": 0.01 * jax.random.normal(k2, (1, 2 * c), jnp.float32),
            "ln_gamma": jnp.ones((1, 2 * c), jnp.float32),
            "ln_beta": jnp.zeros((1, 2 * c), jnp.float32),
            "w2": 0.1 * jax.random.normal(k3, (2 * c, c), jnp.float32),
            "b2": 0.01 * jax.random.normal(k4, (1, c), jnp.float32),
        })
    key, kf, kb = jax.random.split(key, 3)
    params["w_final"] = 0.1 * jax.random.normal(kf, (c, 1), jnp.float32)
    params["b_final"] = 0.01 * jax.random.normal(kb, (1, 1), jnp.float32)
    return params


if __name__ == "__main__":
    N = 200          # number of nodes (pads to 256 -> exercises a 2x2 tile grid)
    C = 32           # input_dim (= GENConv in/out channels)
    NUM_LAYERS = 2

    key = jax.random.PRNGKey(0)
    key, kx, ka = jax.random.split(key, 3)

    x = jax.random.normal(kx, (N, C), jnp.float32)

    # Random sparse directed adjacency (adj[i, j] = 1 -> edge j -> i) + self
    # loops so every node has at least one incoming neighbor.
    adj = (jax.random.uniform(ka, (N, N)) < 0.05).astype(jnp.float32)
    adj = jnp.maximum(adj, jnp.eye(N, dtype=jnp.float32))

    params = init_params(key, C, NUM_LAYERS)

    out = deeper_gcn_forward(x, adj, params)
    out = jax.block_until_ready(out)

    assert out.shape == (N, 1), out.shape
    assert bool(jnp.all(jnp.isfinite(out)))
    print("KERNEL_OK")
</pallas_src>

<mosaic_0001>
module attributes {stable_mosaic.version = 11 : i64} {
  func.func @_pre_kernel(%arg0: i32, %arg1: memref<128x128xf32, #tpu.memory_space<vmem>>, %arg2: memref<1x128xf32, #tpu.memory_space<vmem>>, %arg3: memref<1x128xf32, #tpu.memory_space<vmem>>, %arg4: memref<1x128xf32, #tpu.memory_space<vmem>>, %arg5: memref<1x128xf32, #tpu.memory_space<vmem>>, %arg6: memref<1x1xf32, #tpu.memory_space<smem>>, %arg7: memref<128x128xf32, #tpu.memory_space<vmem>>, %arg8: memref<1x128xf32, #tpu.memory_space<vmem>>) attributes {dimension_semantics = [#tpu.dimension_semantics<arbitrary>], iteration_bounds = array<i64: 2>, scalar_prefetch = 0 : i64, scratch_operands = 0 : i64, tpu.core_type = #tpu.core_type<tc>, window_params = [{transform_indices = @transform_0, window_bounds = array<i64: 128, 128>}, {pipeline_mode = #tpu.pipeline_mode<synchronous>, transform_indices = @transform_1, window_bounds = array<i64: 1, 128>}, {pipeline_mode = #tpu.pipeline_mode<synchronous>, transform_indices = @transform_2, window_bounds = array<i64: 1, 128>}, {pipeline_mode = #tpu.pipeline_mode<synchronous>, transform_indices = @transform_3, window_bounds = array<i64: 1, 128>}, {pipeline_mode = #tpu.pipeline_mode<synchronous>, transform_indices = @transform_4, window_bounds = array<i64: 1, 128>}, {transform_indices = @transform_5, window_bounds = array<i64: 1, 1>}, {transform_indices = @transform_6, window_bounds = array<i64: 128, 128>}, {pipeline_mode = #tpu.pipeline_mode<synchronous>, transform_indices = @transform_7, window_bounds = array<i64: 1, 128>}]} {
    %c0 = arith.constant 0 : index
    %c0_0 = arith.constant 0 : index
    %0 = vector.load %arg1[%c0, %c0_0] : memref<128x128xf32, #tpu.memory_space<vmem>>, vector<128x128xf32>
    %c0_1 = arith.constant 0 : index
    %c0_2 = arith.constant 0 : index
    %1 = vector.load %arg4[%c0_1, %c0_2] : memref<1x128xf32, #tpu.memory_space<vmem>>, vector<1x128xf32>
    %2 = vector.broadcast %1 : vector<1x128xf32> to vector<128x128xf32>
    %3 = arith.subf %0, %2 : vector<128x128xf32>
    %c0_3 = arith.constant 0 : index
    %c0_4 = arith.constant 0 : index
    %4 = vector.load %arg5[%c0_3, %c0_4] : memref<1x128xf32, #tpu.memory_space<vmem>>, vector<1x128xf32>
    %cst = arith.constant 9.99999974E-6 : f32
    %5 = vector.broadcast %cst : f32 to vector<1x128xf32>
    %6 = arith.addf %4, %5 : vector<1x128xf32>
    %7 = math.rsqrt %6 : vector<1x128xf32>
    %8 = vector.broadcast %7 : vector<1x128xf32> to vector<128x128xf32>
    %9 = arith.mulf %3, %8 : vector<128x128xf32>
    %c0_5 = arith.constant 0 : index
    %c0_6 = arith.constant 0 : index
    %10 = vector.load %arg2[%c0_5, %c0_6] : memref<1x128xf32, #tpu.memory_space<vmem>>, vector<1x128xf32>
    %11 = vector.broadcast %10 : vector<1x128xf32> to vector<128x128xf32>
    %12 = arith.mulf %9, %11 : vector<128x128xf32>
    %c0_7 = arith.constant 0 : index
    %c0_8 = arith.constant 0 : index
    %13 = vector.load %arg3[%c0_7, %c0_8] : memref<1x128xf32, #tpu.memory_space<vmem>>, vector<1x128xf32>
    %14 = vector.broadcast %13 : vector<1x128xf32> to vector<128x128xf32>
    %15 = arith.addf %12, %14 : vector<128x128xf32>
    %cst_9 = arith.constant 0.000000e+00 : f32
    %16 = vector.broadcast %cst_9 : f32 to vector<128x128xf32>
    %17 = arith.maximumf %15, %16 : vector<128x128xf32>
    %c0_10 = arith.constant 0 : index
    %c0_11 = arith.constant 0 : index
    %18 = vector.load %arg7[%c0_10, %c0_11] : memref<128x128xf32, #tpu.memory_space<vmem>>, vector<128x128xf32>
    tpu.vector_store %arg7[%c0_10, %c0_11], %17 {strides = array<i32>} : memref<128x128xf32, #tpu.memory_space<vmem>>, vector<128x128xf32>,
    %c0_12 = arith.constant 0 : index
    %c0_13 = arith.constant 0 : index
    %19 = memref.load %arg6[%c0_12, %c0_13] : memref<1x1xf32, #tpu.memory_space<smem>>
    %cst_14 = arith.constant 1.000000e-07 : f32
    %20 = vector.broadcast %cst_14 : f32 to vector<128x128xf32>
    %21 = arith.addf %17, %20 : vector<128x128xf32>
    %22 = vector.broadcast %19 : f32 to vector<128x128xf32>
    %23 = arith.mulf %22, %21 : vector<128x128xf32>
    %cst_15 = arith.constant dense<0xFF800000> : vector<128xf32>
    %24 = vector.multi_reduction <maximumf>, %23, %cst_15 [0] : vector<128x128xf32> to vector<128xf32>
    %25 = vector.shape_cast %24 : vector<128xf32> to vector<1x128xf32>
    %c0_i32 = arith.constant 0 : i32
    %26 = arith.cmpi eq, %arg0, %c0_i32 : i32
    %27 = arith.extui %26 : i1 to i32
    %c0_i32_16 = arith.constant 0 : i32
    %28 = arith.cmpi ne, %27, %c0_i32_16 : i32
    scf.if %28 {
      %c0_19 = arith.constant 0 : index
      %c0_20 = arith.constant 0 : index
      %32 = vector.load %arg8[%c0_19, %c0_20] : memref<1x128xf32, #tpu.memory_space<vmem>>, vector<1x128xf32>
      tpu.vector_store %arg8[%c0_19, %c0_20], %25 {strides = array<i32>} : memref<1x128xf32, #tpu.memory_space<vmem>>, vector<1x128xf32>,
    } else {
    }
    %c0_i32_17 = arith.constant 0 : i32
    %29 = arith.cmpi sgt, %arg0, %c0_i32_17 : i32
    %30 = arith.extui %29 : i1 to i32
    %c0_i32_18 = arith.constant 0 : i32
    %31 = arith.cmpi ne, %30, %c0_i32_18 : i32
    scf.if %31 {
      %c0_19 = arith.constant 0 : index
      %c0_20 = arith.constant 0 : index
      %32 = vector.load %arg8[%c0_19, %c0_20] : memref<1x128xf32, #tpu.memory_space<vmem>>, vector<1x128xf32>
      %33 = arith.maximumf %32, %25 : vector<1x128xf32>
      %c0_21 = arith.constant 0 : index
      %c0_22 = arith.constant 0 : index
      %34 = vector.load %arg8[%c0_21, %c0_22] : memref<1x128xf32, #tpu.memory_space<vmem>>, vector<1x128xf32>
      tpu.vector_store %arg8[%c0_21, %c0_22], %33 {strides = array<i32>} : memref<1x128xf32, #tpu.memory_space<vmem>>, vector<1x128xf32>,
    } else {
    }
    return
  }
  func.func @transform_0(%arg0: i32) -> (i32, i32) {
    %c0_i32 = arith.constant 0 : i32
    %c0_i32_0 = arith.constant 0 : i32
    return %arg0, %c0_i32 : i32, i32
  }
  func.func @transform_1(%arg0: i32) -> (i32, i32) {
    %c0_i32 = arith.constant 0 : i32
    %c0_i32_0 = arith.constant 0 : i32
    %c0_i32_1 = arith.constant 0 : i32
    return %c0_i32, %c0_i32_0 : i32, i32
  }
  func.func @transform_2(%arg0: i32) -> (i32, i32) {
    %c0_i32 = arith.constant 0 : i32
    %c0_i32_0 = arith.constant 0 : i32
    %c0_i32_1 = arith.constant 0 : i32
    return %c0_i32, %c0_i32_0 : i32, i32
  }
  func.func @transform_3(%arg0: i32) -> (i32, i32) {
    %c0_i32 = arith.constant 0 : i32
    %c0_i32_0 = arith.constant 0 : i32
    %c0_i32_1 = arith.constant 0 : i32
    return %c0_i32, %c0_i32_0 : i32, i32
  }
  func.func @transform_4(%arg0: i32) -> (i32, i32) {
    %c0_i32 = arith.constant 0 : i32
    %c0_i32_0 = arith.constant 0 : i32
    %c0_i32_1 = arith.constant 0 : i32
    return %c0_i32, %c0_i32_0 : i32, i32
  }
  func.func @transform_5(%arg0: i32) -> (i32, i32) {
    %c0_i32 = arith.constant 0 : i32
    %c0_i32_0 = arith.constant 0 : i32
    %c0_i32_1 = arith.constant 0 : i32
    return %c0_i32, %c0_i32_0 : i32, i32
  }
  func.func @transform_6(%arg0: i32) -> (i32, i32) {
    %c0_i32 = arith.constant 0 : i32
    %c0_i32_0 = arith.constant 0 : i32
    return %arg0, %c0_i32 : i32, i32
  }
  func.func @transform_7(%arg0: i32) -> (i32, i32) {
    %c0_i32 = arith.constant 0 : i32
    %c0_i32_0 = arith.constant 0 : i32
    %c0_i32_1 = arith.constant 0 : i32
    return %c0_i32, %c0_i32_0 : i32, i32
  }
}

module attributes {stable_mosaic.version = 11 : i64} {
  func.func @_ep_kernel(%arg0: i32, %arg1: memref<128x128xf32, #tpu.memory_space<vmem>>, %arg2: memref<1x128xf32, #tpu.memory_space<vmem>>, %arg3: memref<1x1xf32, #tpu.memory_space<smem>>, %arg4: memref<128x256xbf16, #tpu.memory_space<vmem>>) attributes {dimension_semantics = [#tpu.dimension_semantics<parallel>], iteration_bounds = array<i64: 2>, scalar_prefetch = 0 : i64, scratch_operands = 0 : i64, tpu.core_type = #tpu.core_type<tc>, window_params = [{transform_indices = @transform_0, window_bounds = array<i64: 128, 128>}, {pipeline_mode = #tpu.pipeline_mode<synchronous>, transform_indices = @transform_1, window_bounds = array<i64: 1, 128>}, {transform_indices = @transform_2, window_bounds = array<i64: 1, 1>}, {transform_indices = @transform_3, window_bounds = array<i64: 128, 256>}]} {
    %c0 = arith.constant 0 : index
    %c0_0 = arith.constant 0 : index
    %0 = memref.load %arg3[%c0, %c0_0] : memref<1x1xf32, #tpu.memory_space<smem>>
    %c0_1 = arith.constant 0 : index
    %c0_2 = arith.constant 0 : index
    %1 = vector.load %arg1[%c0_1, %c0_2] : memref<128x128xf32, #tpu.memory_space<vmem>>, vector<128x128xf32>
    %cst = arith.constant 1.000000e-07 : f32
    %2 = vector.broadcast %cst : f32 to vector<128x128xf32>
    %3 = arith.addf %1, %2 : vector<128x128xf32>
    %4 = vector.broadcast %0 : f32 to vector<128x128xf32>
    %5 = arith.mulf %4, %3 : vector<128x128xf32>
    %c0_3 = arith.constant 0 : index
    %c0_4 = arith.constant 0 : index
    %6 = vector.load %arg2[%c0_3, %c0_4] : memref<1x128xf32, #tpu.memory_space<vmem>>, vector<1x128xf32>
    %7 = vector.broadcast %6 : vector<1x128xf32> to vector<128x128xf32>
    %8 = arith.subf %5, %7 : vector<128x128xf32>
    %9 = math.exp %8 : vector<128x128xf32>
    %10 = arith.truncf %9 : vector<128x128xf32> to vector<128x128xbf16>
    %c0_5 = arith.constant 0 : index
    %c0_6 = arith.constant 0 : index
    %11 = vector.load %arg4[%c0_5, %c0_6] : memref<128x256xbf16, #tpu.memory_space<vmem>>, vector<128x128xbf16>
    tpu.vector_store %arg4[%c0_5, %c0_6], %10 {strides = array<i32>} : memref<128x256xbf16, #tpu.memory_space<vmem>>, vector<128x128xbf16>,
    %12 = arith.mulf %9, %3 : vector<128x128xf32>
    %13 = arith.truncf %12 : vector<128x128xf32> to vector<128x128xbf16>
    %c0_7 = arith.constant 0 : index
    %c128 = arith.constant 128 : index
    %14 = vector.load %arg4[%c0_7, %c128] : memref<128x256xbf16, #tpu.memory_space<vmem>>, vector<128x128xbf16>
    tpu.vector_store %arg4[%c0_7, %c128], %13 {strides = array<i32>} : memref<128x256xbf16, #tpu.memory_space<vmem>>, vector<128x128xbf16>,
    return
  }
  func.func @transform_0(%arg0: i32) -> (i32, i32) {
    %c0_i32 = arith.constant 0 : i32
    %c0_i32_0 = arith.constant 0 : i32
    return %arg0, %c0_i32 : i32, i32
  }
  func.func @transform_1(%arg0: i32) -> (i32, i32) {
    %c0_i32 = arith.constant 0 : i32
    %c0_i32_0 = arith.constant 0 : i32
    %c0_i32_1 = arith.constant 0 : i32
    return %c0_i32, %c0_i32_0 : i32, i32
  }
  func.func @transform_2(%arg0: i32) -> (i32, i32) {
    %c0_i32 = arith.constant 0 : i32
    %c0_i32_0 = arith.constant 0 : i32
    %c0_i32_1 = arith.constant 0 : i32
    return %c0_i32, %c0_i32_0 : i32, i32
  }
  func.func @transform_3(%arg0: i32) -> (i32, i32) {
    %c0_i32 = arith.constant 0 : i32
    %c0_i32_0 = arith.constant 0 : i32
    return %arg0, %c0_i32 : i32, i32
  }
}

module attributes {stable_mosaic.version = 11 : i64} {
  func.func @_agg_layer_kernel(%arg0: i32, %arg1: i32, %arg2: memref<128x128xbf16, #tpu.memory_space<vmem>>, %arg3: memref<128x256xbf16, #tpu.memory_space<vmem>>, %arg4: memref<128x128xf32, #tpu.memory_space<vmem>>, %arg5: memref<128x128xf32, #tpu.memory_space<vmem>>, %arg6: memref<128x128xbf16, #tpu.memory_space<vmem>>, %arg7: memref<1x128xf32, #tpu.memory_space<vmem>>, %arg8: memref<1x128xf32, #tpu.memory_space<vmem>>, %arg9: memref<1x128xf32, #tpu.memory_space<vmem>>, %arg10: memref<128x128xbf16, #tpu.memory_space<vmem>>, %arg11: memref<1x128xf32, #tpu.memory_space<vmem>>, %arg12: memref<128x128xf32, #tpu.memory_space<vmem>>, %arg13: memref<128x256xf32, #tpu.memory_space<vmem>>) attributes {dimension_semantics = [#tpu.dimension_semantics<parallel>, #tpu.dimension_semantics<arbitrary>], iteration_bounds = array<i64: 2, 2>, scalar_prefetch = 0 : i64, scratch_operands = 1 : i64, tpu.core_type = #tpu.core_type<tc>, window_params = [{transform_indices = @transform_0, window_bounds = array<i64: 128, 128>}, {transform_indices = @transform_1, window_bounds = array<i64: 128, 256>}, {transform_indices = @transform_2, window_bounds = array<i64: 128, 128>}, {transform_indices = @transform_3, window_bounds = array<i64: 128, 128>}, {pipeline_mode = #tpu.pipeline_mode<synchronous>, transform_indices = @transform_4, window_bounds = array<i64: 128, 128>}, {pipeline_mode = #tpu.pipeline_mode<synchronous>, transform_indices = @transform_5, window_bounds = array<i64: 1, 128>}, {pipeline_mode = #tpu.pipeline_mode<synchronous>, transform_indices = @transform_6, window_bounds = array<i64: 1, 128>}, {pipeline_mode = #tpu.pipeline_mode<synchronous>, transform_indices = @transform_7, window_bounds = array<i64: 1, 128>}, {pipeline_mode = #tpu.pipeline_mode<synchronous>, transform_indices = @transform_8, window_bounds = array<i64: 128, 128>}, {pipeline_mode = #tpu.pipeline_mode<synchronous>, transform_indices = @transform_9, window_bounds = array<i64: 1, 128>}, {transform_indices = @transform_10, window_bounds = array<i64: 128, 128>}]} {
    %c0_i32 = arith.constant 0 : i32
    %0 = arith.cmpi eq, %arg1, %c0_i32 : i32
    %1 = arith.extui %0 : i1 to i32
    %c0_i32_0 = arith.constant 0 : i32
    %2 = arith.cmpi ne, %1, %c0_i32_0 : i32
    scf.if %2 {
      %cst_9 = arith.constant 0.000000e+00 : f32
      %12 = vector.broadcast %cst_9 : f32 to vector<128x256xf32>
      %c0_10 = arith.constant 0 : index
      %c0_11 = arith.constant 0 : index
      %13 = vector.load %arg13[%c0_10, %c0_11] : memref<128x256xf32, #tpu.memory_space<vmem>>, vector<128x256xf32>
      tpu.vector_store %arg13[%c0_10, %c0_11], %12 {strides = array<i32>} : memref<128x256xf32, #tpu.memory_space<vmem>>, vector<128x256xf32>,
    } else {
    }
    %c0 = arith.constant 0 : index
    %c0_1 = arith.constant 0 : index
    %3 = vector.load %arg13[%c0, %c0_1] : memref<128x256xf32, #tpu.memory_space<vmem>>, vector<128x256xf32>
    %c0_2 = arith.constant 0 : index
    %c0_3 = arith.constant 0 : index
    %4 = vector.load %arg2[%c0_2, %c0_3] : memref<128x128xbf16, #tpu.memory_space<vmem>>, vector<128x128xbf16>
    %c0_4 = arith.constant 0 : index
    %c0_5 = arith.constant 0 : index
    %5 = vector.load %arg3[%c0_4, %c0_5] : memref<128x256xbf16, #tpu.memory_space<vmem>>, vector<128x256xbf16>
    %cst = arith.constant dense<0.000000e+00> : vector<128x256xf32>
    %6 = tpu.matmul %4, %5, %cst {dimension_numbers = #tpu.dot_dimension_numbers<[1], [0], [0], [1], [0, 0, 1, 1], [], []>} : vector<128x128xbf16>, vector<128x256xbf16>, vector<128x256xf32> -> vector<128x256xf32>
    %7 = arith.addf %3, %6 : vector<128x256xf32>
    %c0_6 = arith.constant 0 : index
    %c0_7 = arith.constant 0 : index
    %8 = vector.load %arg13[%c0_6, %c0_7] : memref<128x256xf32, #tpu.memory_space<vmem>>, vector<128x256xf32>
    tpu.vector_store %arg13[%c0_6, %c0_7], %7 {strides = array<i32>} : memref<128x256xf32, #tpu.memory_space<vmem>>, vector<128x256xf32>,
    %c1_i32 = arith.constant 1 : i32
    %9 = arith.cmpi eq, %arg1, %c1_i32 : i32
    %10 = arith.extui %9 : i1 to i32
    %c0_i32_8 = arith.constant 0 : i32
    %11 = arith.cmpi ne, %10, %c0_i32_8 : i32
    scf.if %11 {
      %c0_9 = arith.constant 0 : index
      %c0_10 = arith.constant 0 : index
      %12 = vector.load %arg13[%c0_9, %c0_10] : memref<128x256xf32, #tpu.memory_space<vmem>>, vector<128x128xf32>
      %c0_11 = arith.constant 0 : index
      %c128 = arith.constant 128 : index
      %13 = vector.load %arg13[%c0_11, %c128] : memref<128x256xf32, #tpu.memory_space<vmem>>, vector<128x128xf32>
      %cst_12 = arith.constant 0.000000e+00 : f32
      %14 = vector.broadcast %cst_12 : f32 to vector<128x128xf32>
      %15 = arith.cmpf ogt, %12, %14 : vector<128x128xf32>
      %16 = arith.divf %13, %12 : vector<128x128xf32>
      %cst_13 = arith.constant 0.000000e+00 : f32
      %17 = vector.broadcast %cst_13 : f32 to vector<128x128xf32>
      %18 = arith.select %15, %16, %17 : vector<128x128xi1>, vector<128x128xf32>
      %c0_14 = arith.constant 0 : index
      %c0_15 = arith.constant 0 : index
      %19 = vector.load %arg4[%c0_14, %c0_15] : memref<128x128xf32, #tpu.memory_space<vmem>>, vector<128x128xf32>
      %20 = arith.addf %18, %19 : vector<128x128xf32>
      %21 = arith.truncf %20 : vector<128x128xf32> to vector<128x128xbf16>
      %c0_16 = arith.constant 0 : index
      %c0_17 = arith.constant 0 : index
      %22 = vector.load %arg6[%c0_16, %c0_17] : memref<128x128xbf16, #tpu.memory_space<vmem>>, vector<128x128xbf16>
      %cst_18 = arith.constant dense<0.000000e+00> : vector<128x128xf32>
      %23 = tpu.matmul %21, %22, %cst_18 {dimension_numbers = #tpu.dot_dimension_numbers<[1], [0], [0], [1], [0, 0, 1, 1], [], []>} : vector<128x128xbf16>, vector<128x128xbf16>, vector<128x128xf32> -> vector<128x128xf32>
      %c0_19 = arith.constant 0 : index
      %c0_20 = arith.constant 0 : index
      %24 = vector.load %arg7[%c0_19, %c0_20] : memref<1x128xf32, #tpu.memory_space<vmem>>, vector<1x128xf32>
      %25 = vector.broadcast %24 : vector<1x128xf32> to vector<128x128xf32>
      %26 = arith.addf %23, %25 : vector<128x128xf32>
      %cst_21 = arith.constant dense<0.000000e+00> : vector<128xf32>
      %27 = vector.multi_reduction <add>, %26, %cst_21 [1] : vector<128x128xf32> to vector<128xf32>
      %28 = vector.shape_cast %27 : vector<128xf32> to vector<128x1xf32>
      %cst_22 = arith.constant 1.562500e-02 : f32
      %29 = vector.broadcast %cst_22 : f32 to vector<128x1xf32>
      %30 = arith.mulf %28, %29 : vector<128x1xf32>
      %31 = arith.mulf %26, %26 : vector<128x128xf32>
      %cst_23 = arith.constant dense<0.000000e+00> : vector<128xf32>
      %32 = vector.multi_reduction <add>, %31, %cst_23 [1] : vector<128x128xf32> to vector<128xf32>
      %33 = vector.shape_cast %32 : vector<128xf32> to vector<128x1xf32>
      %cst_24 = arith.constant 1.562500e-02 : f32
      %34 = vector.broadcast %cst_24 : f32 to vector<128x1xf32>
      %35 = arith.mulf %33, %34 : vector<128x1xf32>
      %36 = arith.mulf %30, %30 : vector<128x1xf32>
      %37 = arith.subf %35, %36 : vector<128x1xf32>
      %cst_25 = arith.constant 0.000000e+00 : f32
      %38 = vector.broadcast %cst_25 : f32 to vector<128x1xf32>
      %39 = arith.maximumf %37, %38 : vector<128x1xf32>
      %40 = vector.broadcast %30 : vector<128x1xf32> to vector<128x128xf32>
      %41 = arith.subf %26, %40 : vector<128x128xf32>
      %cst_26 = arith.constant 9.99999974E-6 : f32
      %42 = vector.broadcast %cst_26 : f32 to vector<128x1xf32>
      %43 = arith.addf %39, %42 : vector<128x1xf32>
      %44 = math.rsqrt %43 : vector<128x1xf32>
      %45 = vector.broadcast %44 : vector<128x1xf32> to vector<128x128xf32>
      %46 = arith.mulf %41, %45 : vector<128x128xf32>
      %c0_27 = arith.constant 0 : index
      %c0_28 = arith.constant 0 : index
      %47 = vector.load %arg8[%c0_27, %c0_28] : memref<1x128xf32, #tpu.memory_space<vmem>>, vector<1x128xf32>
      %48 = vector.broadcast %47 : vector<1x128xf32> to vector<128x128xf32>
      %49 = arith.mulf %46, %48 : vector<128x128xf32>
      %c0_29 = arith.constant 0 : index
      %c0_30 = arith.constant 0 : index
      %50 = vector.load %arg9[%c0_29, %c0_30] : memref<1x128xf32, #tpu.memory_space<vmem>>, vector<1x128xf32>
      %51 = vector.broadcast %50 : vector<1x128xf32> to vector<128x128xf32>
      %52 = arith.addf %49, %51 : vector<128x128xf32>
      %cst_31 = arith.constant 0.000000e+00 : f32
      %53 = vector.broadcast %cst_31 : f32 to vector<128x128xf32>
      %54 = arith.maximumf %52, %53 : vector<128x128xf32>
      %55 = arith.truncf %54 : vector<128x128xf32> to vector<128x128xbf16>
      %c0_32 = arith.constant 0 : index
      %c0_33 = arith.constant 0 : index
      %56 = vector.load %arg10[%c0_32, %c0_33] : memref<128x128xbf16, #tpu.memory_space<vmem>>, vector<128x128xbf16>
      %cst_34 = arith.constant dense<0.000000e+00> : vector<128x128xf32>
      %57 = tpu.matmul %55, %56, %cst_34 {dimension_numbers = #tpu.dot_dimension_numbers<[1], [0], [0], [1], [0, 0, 1, 1], [], []>} : vector<128x128xbf16>, vector<128x128xbf16>, vector<128x128xf32> -> vector<128x128xf32>
      %c0_35 = arith.constant 0 : index
      %c0_36 = arith.constant 0 : index
      %58 = vector.load %arg11[%c0_35, %c0_36] : memref<1x128xf32, #tpu.memory_space<vmem>>, vector<1x128xf32>
      %59 = vector.broadcast %58 : vector<1x128xf32> to vector<128x128xf32>
      %60 = arith.addf %57, %59 : vector<128x128xf32>
      %c0_37 = arith.constant 0 : index
      %c0_38 = arith.constant 0 : index
      %61 = vector.load %arg5[%c0_37, %c0_38] : memref<128x128xf32, #tpu.memory_space<vmem>>, vector<128x128xf32>
      %62 = arith.addf %61, %60 : vector<128x128xf32>
      %c0_39 = arith.constant 0 : index
      %c0_40 = arith.constant 0 : index
      %63 = vector.load %arg12[%c0_39, %c0_40] : memref<128x128xf32, #tpu.memory_space<vmem>>, vector<128x128xf32>
      tpu.vector_store %arg12[%c0_39, %c0_40], %62 {strides = array<i32>} : memref<128x128xf32, #tpu.memory_space<vmem>>, vector<128x128xf32>,
    } else {
    }
    return
  }
  func.func @transform_0(%arg0: i32, %arg1: i32) -> (i32, i32) {
    %c0_i32 = arith.constant 0 : i32
    return %arg0, %arg1 : i32, i32
  }
  func.func @transform_1(%arg0: i32, %arg1: i32) -> (i32, i32) {
    %c0_i32 = arith.constant 0 : i32
    %c0_i32_0 = arith.constant 0 : i32
    return %arg1, %c0_i32 : i32, i32
  }
  func.func @transform_2(%arg0: i32, %arg1: i32) -> (i32, i32) {
    %c0_i32 = arith.constant 0 : i32
    %c0_i32_0 = arith.constant 0 : i32
    return %arg0, %c0_i32 : i32, i32
  }
  func.func @transform_3(%arg0: i32, %arg1: i32) -> (i32, i32) {
    %c0_i32 = arith.constant 0 : i32
    %c0_i32_0 = arith.constant 0 : i32
    return %arg0, %c0_i32 : i32, i32
  }
  func.func @transform_4(%arg0: i32, %arg1: i32) -> (i32, i32) {
    %c0_i32 = arith.constant 0 : i32
    %c0_i32_0 = arith.constant 0 : i32
    %c0_i32_1 = arith.constant 0 : i32
    return %c0_i32, %c0_i32_0 : i32, i32
  }
  func.func @transform_5(%arg0: i32, %arg1: i32) -> (i32, i32) {
    %c0_i32 = arith.constant 0 : i32
    %c0_i32_0 = arith.constant 0 : i32
    %c0_i32_1 = arith.constant 0 : i32
    return %c0_i32, %c0_i32_0 : i32, i32
  }
  func.func @transform_6(%arg0: i32, %arg1: i32) -> (i32, i32) {
    %c0_i32 = arith.constant 0 : i32
    %c0_i32_0 = arith.constant 0 : i32
    %c0_i32_1 = arith.constant 0 : i32
    return %c0_i32, %c0_i32_0 : i32, i32
  }
  func.func @transform_7(%arg0: i32, %arg1: i32) -> (i32, i32) {
    %c0_i32 = arith.constant 0 : i32
    %c0_i32_0 = arith.constant 0 : i32
    %c0_i32_1 = arith.constant 0 : i32
    return %c0_i32, %c0_i32_0 : i32, i32
  }
  func.func @transform_8(%arg0: i32, %arg1: i32) -> (i32, i32) {
    %c0_i32 = arith.constant 0 : i32
    %c0_i32_0 = arith.constant 0 : i32
    %c0_i32_1 = arith.constant 0 : i32
    return %c0_i32, %c0_i32_0 : i32, i32
  }
  func.func @transform_9(%arg0: i32, %arg1: i32) -> (i32, i32) {
    %c0_i32 = arith.constant 0 : i32
    %c0_i32_0 = arith.constant 0 : i32
    %c0_i32_1 = arith.constant 0 : i32
    return %c0_i32, %c0_i32_0 : i32, i32
  }
  func.func @transform_10(%arg0: i32, %arg1: i32) -> (i32, i32) {
    %c0_i32 = arith.constant 0 : i32
    %c0_i32_0 = arith.constant 0 : i32
    return %arg0, %c0_i32 : i32, i32
  }
}

module attributes {stable_mosaic.version = 11 : i64} {
  func.func @_final_linear_kernel(%arg0: i32, %arg1: memref<128x128xf32, #tpu.memory_space<vmem>>, %arg2: memref<128x128xbf16, #tpu.memory_space<vmem>>, %arg3: memref<1x128xf32, #tpu.memory_space<vmem>>, %arg4: memref<128x128xf32, #tpu.memory_space<vmem>>) attributes {dimension_semantics = [#tpu.dimension_semantics<parallel>], iteration_bounds = array<i64: 2>, scalar_prefetch = 0 : i64, scratch_operands = 0 : i64, tpu.core_type = #tpu.core_type<tc>, window_params = [{transform_indices = @transform_0, window_bounds = array<i64: 128, 128>}, {pipeline_mode = #tpu.pipeline_mode<synchronous>, transform_indices = @transform_1, window_bounds = array<i64: 128, 128>}, {pipeline_mode = #tpu.pipeline_mode<synchronous>, transform_indices = @transform_2, window_bounds = array<i64: 1, 128>}, {transform_indices = @transform_3, window_bounds = array<i64: 128, 128>}]} {
    %c0 = arith.constant 0 : index
    %c0_0 = arith.constant 0 : index
    %0 = vector.load %arg1[%c0, %c0_0] : memref<128x128xf32, #tpu.memory_space<vmem>>, vector<128x128xf32>
    %1 = arith.truncf %0 : vector<128x128xf32> to vector<128x128xbf16>
    %c0_1 = arith.constant 0 : index
    %c0_2 = arith.constant 0 : index
    %2 = vector.load %arg2[%c0_1, %c0_2] : memref<128x128xbf16, #tpu.memory_space<vmem>>, vector<128x128xbf16>
    %cst = arith.constant dense<0.000000e+00> : vector<128x128xf32>
    %3 = tpu.matmul %1, %2, %cst {dimension_numbers = #tpu.dot_dimension_numbers<[1], [0], [0], [1], [0, 0, 1, 1], [], []>} : vector<128x128xbf16>, vector<128x128xbf16>, vector<128x128xf32> -> vector<128x128xf32>
    %c0_3 = arith.constant 0 : index
    %c0_4 = arith.constant 0 : index
    %4 = vector.load %arg3[%c0_3, %c0_4] : memref<1x128xf32, #tpu.memory_space<vmem>>, vector<1x128xf32>
    %5 = vector.broadcast %4 : vector<1x128xf32> to vector<128x128xf32>
    %6 = arith.addf %3, %5 : vector<128x128xf32>
    %c0_5 = arith.constant 0 : index
    %c0_6 = arith.constant 0 : index
    %7 = vector.load %arg4[%c0_5, %c0_6] : memref<128x128xf32, #tpu.memory_space<vmem>>, vector<128x128xf32>
    tpu.vector_store %arg4[%c0_5, %c0_6], %6 {strides = array<i32>} : memref<128x128xf32, #tpu.memory_space<vmem>>, vector<128x128xf32>,
    return
  }
  func.func @transform_0(%arg0: i32) -> (i32, i32) {
    %c0_i32 = arith.constant 0 : i32
    %c0_i32_0 = arith.constant 0 : i32
    return %arg0, %c0_i32 : i32, i32
  }
  func.func @transform_1(%arg0: i32) -> (i32, i32) {
    %c0_i32 = arith.constant 0 : i32
    %c0_i32_0 = arith.constant 0 : i32
    %c0_i32_1 = arith.constant 0 : i32
    return %c0_i32, %c0_i32_0 : i32, i32
  }
  func.func @transform_2(%arg0: i32) -> (i32, i32) {
    %c0_i32 = arith.constant 0 : i32
    %c0_i32_0 = arith.constant 0 : i32
    %c0_i32_1 = arith.constant 0 : i32
    return %c0_i32, %c0_i32_0 : i32, i32
  }
  func.func @transform_3(%arg0: i32) -> (i32, i32) {
    %c0_i32 = arith.constant 0 : i32
    %c0_i32_0 = arith.constant 0 : i32
    return %arg0, %c0_i32 : i32, i32
  }
}

</mosaic_0001>

<llo_original>
// kernel: deeper_gcn_forward.7
$region0: #{deeper_gcn_forward.7}
  #allocation0 [shape = 'u32[]', space=smem, size = 0x4, offset = 0x4, fixed_abs, tag = 'smem constant byte address 0x4 - core index']
  #allocation1 [shape = 'u32[144,128]{1,0:T(1,128)}', space=vmem, size = 0x12000, scoped, tag = 'internal scratch']
  #allocation2 [shape = 'f32[1,1]{1,0:T(1,128)S(6)}', space=smem, size = 0x200, scoped, tag = 'scoped memory for deeper_gcn_forward.7']
  %s0 = inlined_call_operand.vmem [shape: f32[256,128], index: 0, kind: input, shape index: {}]
  %s1 = inlined_call_operand.vmem [shape: f32[1,128], index: 1, kind: input, shape index: {}]
  %s2 = inlined_call_operand.vmem [shape: f32[1,128], index: 2, kind: input, shape index: {}]
  %s3 = inlined_call_operand.vmem [shape: f32[1,128], index: 3, kind: input, shape index: {}]
  %s4 = inlined_call_operand.vmem [shape: f32[1,128], index: 4, kind: input, shape index: {}]
  %s5 = inlined_call_operand.<no memory space> [shape: f32[1,1], index: 5, kind: input, shape index: {}]
  %s6 = inlined_call_operand.vmem [shape: f32[256,128], index: 6, kind: output, shape index: {0}]
  %s7 = inlined_call_operand.vmem [shape: f32[1,128], index: 7, kind: output, shape index: {1}]
  %8 = xla_tuple %s6, %s7
  %s9 = sld [smem:[#allocation0]]
  $region73: #{deeper_gcn_forward.7} parent=0
    _
  %s11 = ssub.s32 1, %s9
  %s12 = scalar_select 0, %s11, %s9
  %13 = sst [smem:[#allocation2]] %s5
  loop: start=0, step=1, limit=4
  $region2: #{deeper_gcn_forward.7} parent=0 // loop_pre_header
    _
  $region3: #{deeper_gcn_forward.7} parent=0 // loop_header
    %s15 = sphi 0, %s19
    %p16 = scmp.ge.s32.totalorder %s15, 4
    %s25 = sphi 0, %s27
    %s28 = sphi 0, %s25
    %s29 = sphi 0, %s28
    %s45 = sphi 0, %s29
    %s49 = sphi 0, %s49
    %s51 = sphi 0, %s49
    %s52 = sphi 0, %s51
    %s66 = sphi 0, %s52
    %s70 = sphi 0, %s70
    %s72 = sphi 0, %s70
    %s73 = sphi 0, %s72
    %s87 = sphi 0, %s73
    %s91 = sphi 0, %s91
    %s93 = sphi 0, %s91
    %s94 = sphi 0, %s93
    %s108 = sphi 0, %s94
    %s112 = sphi 0, %s112
    %s114 = sphi 0, %s112
    %s115 = sphi 0, %s114
    %s129 = sphi 0, %s115
    %s133 = sphi 0, %s133
    %s135 = sphi 0, %s133
    %s136 = sphi 0, %s135
    %s150 = sphi 0, %s136
    %s156 = sphi 0, %s158
    %s159 = sphi 0, %s156
    %s160 = sphi 0, %s159
    %s176 = sphi 0, %s160
    %s180 = sphi 0, %s180
    %s182 = sphi 0, %s180
    %s183 = sphi 0, %s182
    %s197 = sphi 0, %s183
  $region4: #{deeper_gcn_forward.7} parent=0 // loop_header_branch
    %18 = sbr.rel (%p16) target = $region8
  $region5: #{deeper_gcn_forward.7} parent=0 // loop_body
    %s20 = ssub.s32 %s15, 1
    %s21 = ssub.s32 %s15, 2
    %s22 = sadd.s32 %s15, 1
    %s23 = ssub.s32 %s15, %s22
    %p24 = scmp.eq.s32.totalorder %s23, 0
    %s26 = sadd.s32 %s25, 1
    %s27 = scalar_select %p24, %s25, %s26
    %p30 = pneg %p24
    %p31 = scmp.eq.s32.totalorder %s15, 1
    %p32 = por %p30, %p31
    %p33 = scmp.ne.s32.totalorder %s25, %s28
    %p34 = scmp.eq.s32.totalorder %s15, 0
    %p35 = por %p33, %p34
    %p36 = scmp.ne.s32.totalorder %s25, %s28
    %p37 = scmp.eq.s32.totalorder %s20, 1
    %p38 = por %p36, %p37
    %p39 = scmp.ne.s32.totalorder %s28, %s29
    %p40 = scmp.eq.s32.totalorder %s20, 0
    %p41 = por %p39, %p40
    %p42 = scmp.ne.s32.totalorder %s28, %s29
    %p43 = scmp.eq.s32.totalorder %s21, 1
    %p44 = por %p42, %p43
    %p46 = scmp.ne.s32.totalorder %s29, %s45
    %p47 = scmp.eq.s32.totalorder %s21, 0
    %p48 = por %p46, %p47
    %s50 = sadd.s32 %s49, 1
    %p53 = scmp.eq.s32.totalorder %s15, 1
    %p54 = scmp.ne.s32.totalorder %s49, %s51
    %p55 = scmp.eq.s32.totalorder %s15, 0
    %p56 = por %p54, %p55
    %p57 = scmp.ne.s32.totalorder %s49, %s51
    %p58 = scmp.eq.s32.totalorder %s20, 1
    %p59 = por %p57, %p58
    %p60 = scmp.ne.s32.totalorder %s51, %s52
    %p61 = scmp.eq.s32.totalorder %s20, 0
    %p62 = por %p60, %p61
    %p63 = scmp.ne.s32.totalorder %s51, %s52
    %p64 = scmp.eq.s32.totalorder %s21, 1
    %p65 = por %p63, %p64
    %p67 = scmp.ne.s32.totalorder %s52, %s66
    %p68 = scmp.eq.s32.totalorder %s21, 0
    %p69 = por %p67, %p68
    %s71 = sadd.s32 %s70, 1
    %p74 = scmp.eq.s32.totalorder %s15, 1
    %p75 = scmp.ne.s32.totalorder %s70, %s72
    %p76 = scmp.eq.s32.totalorder %s15, 0
    %p77 = por %p75, %p76
    %p78 = scmp.ne.s32.totalorder %s70, %s72
    %p79 = scmp.eq.s32.totalorder %s20, 1
    %p80 = por %p78, %p79
    %p81 = scmp.ne.s32.totalorder %s72, %s73
    %p82 = scmp.eq.s32.totalorder %s20, 0
    %p83 = por %p81, %p82
    %p84 = scmp.ne.s32.totalorder %s72, %s73
    %p85 = scmp.eq.s32.totalorder %s21, 1
    %p86 = por %p84, %p85
    %p88 = scmp.ne.s32.totalorder %s73, %s87
    %p89 = scmp.eq.s32.totalorder %s21, 0
    %p90 = por %p88, %p89
    %s92 = sadd.s32 %s91, 1
    %p95 = scmp.eq.s32.totalorder %s15, 1
    %p96 = scmp.ne.s32.totalorder %s91, %s93
    %p97 = scmp.eq.s32.totalorder %s15, 0
    %p98 = por %p96, %p97
    %p99 = scmp.ne.s32.totalorder %s91, %s93
    %p100 = scmp.eq.s32.totalorder %s20, 1
    %p101 = por %p99, %p100
    %p102 = scmp.ne.s32.totalorder %s93, %s94
    %p103 = scmp.eq.s32.totalorder %s20, 0
    %p104 = por %p102, %p103
    %p105 = scmp.ne.s32.totalorder %s93, %s94
    %p106 = scmp.eq.s32.totalorder %s21, 1
    %p107 = por %p105, %p106
    %p109 = scmp.ne.s32.totalorder %s94, %s108
    %p110 = scmp.eq.s32.totalorder %s21, 0
    %p111 = por %p109, %p110
    %s113 = sadd.s32 %s112, 1
    %p116 = scmp.eq.s32.totalorder %s15, 1
    %p117 = scmp.ne.s32.totalorder %s112, %s114
    %p118 = scmp.eq.s32.totalorder %s15, 0
    %p119 = por %p117, %p118
    %p120 = scmp.ne.s32.totalorder %s112, %s114
    %p121 = scmp.eq.s32.totalorder %s20, 1
    %p122 = por %p120, %p121
    %p123 = scmp.ne.s32.totalorder %s114, %s115
    %p124 = scmp.eq.s32.totalorder %s20, 0
    %p125 = por %p123, %p124
    %p126 = scmp.ne.s32.totalorder %s114, %s115
    %p127 = scmp.eq.s32.totalorder %s21, 1
    %p128 = por %p126, %p127
    %p130 = scmp.ne.s32.totalorder %s115, %s129
    %p131 = scmp.eq.s32.totalorder %s21, 0
    %p132 = por %p130, %p131
    %s134 = sadd.s32 %s133, 1
    %p137 = scmp.eq.s32.totalorder %s15, 1
    %p138 = scmp.ne.s32.totalorder %s133, %s135
    %p139 = scmp.eq.s32.totalorder %s15, 0
    %p140 = por %p138, %p139
    %p141 = scmp.ne.s32.totalorder %s133, %s135
    %p142 = scmp.eq.s32.totalorder %s20, 1
    %p143 = por %p141, %p142
    %p144 = scmp.ne.s32.totalorder %s135, %s136
    %p145 = scmp.eq.s32.totalorder %s20, 0
    %p146 = por %p144, %p145
    %p147 = scmp.ne.s32.totalorder %s135, %s136
    %p148 = scmp.eq.s32.totalorder %s21, 1
    %p149 = por %p147, %p148
    %p151 = scmp.ne.s32.totalorder %s136, %s150
    %p152 = scmp.eq.s32.totalorder %s21, 0
    %p153 = por %p151, %p152
    %s154 = ssub.s32 %s15, %s22
    %p155 = scmp.eq.s32.totalorder %s154, 0
    %s157 = sadd.s32 %s156, 1
    %s158 = scalar_select %p155, %s156, %s157
    %p161 = pneg %p155
    %p162 = scmp.eq.s32.totalorder %s15, 1
    %p163 = por %p161, %p162
    %p164 = scmp.ne.s32.totalorder %s156, %s159
    %p165 = scmp.eq.s32.totalorder %s15, 0
    %p166 = por %p164, %p165
    %p167 = scmp.ne.s32.totalorder %s156, %s159
    %p168 = scmp.eq.s32.totalorder %s20, 1
    %p169 = por %p167, %p168
    %p170 = scmp.ne.s32.totalorder %s159, %s160
    %p171 = scmp.eq.s32.totalorder %s20, 0
    %p172 = por %p170, %p171
    %p173 = scmp.ne.s32.totalorder %s159, %s160
    %p174 = scmp.eq.s32.totalorder %s21, 1
    %p175 = por %p173, %p174
    %p177 = scmp.ne.s32.totalorder %s160, %s176
    %p178 = scmp.eq.s32.totalorder %s21, 0
    %p179 = por %p177, %p178
    %s181 = sadd.s32 %s180, 1
    %p184 = scmp.eq.s32.totalorder %s15, 1
    %p185 = scmp.ne.s32.totalorder %s180, %s182
    %p186 = scmp.eq.s32.totalorder %s15, 0
    %p187 = por %p185, %p186
    %p188 = scmp.ne.s32.totalorder %s180, %s182
    %p189 = scmp.eq.s32.totalorder %s20, 1
    %p190 = por %p188, %p189
    %p191 = scmp.ne.s32.totalorder %s182, %s183
    %p192 = scmp.eq.s32.totalorder %s20, 0
    %p193 = por %p191, %p192
    %p194 = scmp.ne.s32.totalorder %s182, %s183
    %p195 = scmp.eq.s32.totalorder %s21, 1
    %p196 = por %p194, %p195
    %p198 = scmp.ne.s32.totalorder %s183, %s197
    %p199 = scmp.eq.s32.totalorder %s21, 0
    %p200 = por %p198, %p199
    %p201 = scmp.le.s32.totalorder 1, %s15
    %p202 = scmp.lt.s32.totalorder %s15, 3
    %p203 = pnand %p201, %p202
    %p204 = pneg %p203
    // Predicated region
    $region9: #{deeper_gcn_forward.7} parent=5 // pred_check
      _
    $region10: #{deeper_gcn_forward.7} parent=5 // pred_check_branch
      %206 = sbr.rel (%p203) target = $region12
    $region11: #{deeper_gcn_forward.7} parent=5 // pred_region
      %s207 = ssub.s32 %s15, 1
      // Predicated region
      $region13: #{deeper_gcn_forward.7} parent=11 // pred_check
        %p208 = pneg %p62
      $region14: #{deeper_gcn_forward.7} parent=11 // pred_check_branch
        %210 = sbr.rel (%p208) target = $region16
      $region15: #{deeper_gcn_forward.7} parent=11 // pred_region
        _
      $region16: #{deeper_gcn_forward.7} parent=11 // pred_fallthru
        _
      // Predicated region
      $region17: #{deeper_gcn_forward.7} parent=11 // pred_check
        %p211 = pneg %p83
      $region18: #{deeper_gcn_forward.7} parent=11 // pred_check_branch
        %213 = sbr.rel (%p211) target = $region20
      $region19: #{deeper_gcn_forward.7} parent=11 // pred_region
        _
      $region20: #{deeper_gcn_forward.7} parent=11 // pred_fallthru
        _
      // Predicated region
      $region21: #{deeper_gcn_forward.7} parent=11 // pred_check
        %p214 = pneg %p104
      $region22: #{deeper_gcn_forward.7} parent=11 // pred_check_branch
        %216 = sbr.rel (%p214) target = $region24
      $region23: #{deeper_gcn_forward.7} parent=11 // pred_region
        _
      $region24: #{deeper_gcn_forward.7} parent=11 // pred_fallthru
        _
      // Predicated region
      $region25: #{deeper_gcn_forward.7} parent=11 // pred_check
        %p217 = pneg %p125
      $region26: #{deeper_gcn_forward.7} parent=11 // pred_check_branch
        %219 = sbr.rel (%p217) target = $region28
      $region27: #{deeper_gcn_forward.7} parent=11 // pred_region
        _
      $region28: #{deeper_gcn_forward.7} parent=11 // pred_fallthru
        _
      // Predicated region
      $region29: #{deeper_gcn_forward.7} parent=11 // pred_check
        %p220 = pneg %p146
      $region30: #{deeper_gcn_forward.7} parent=11 // pred_check_branch
        %222 = sbr.rel (%p220) target = $region32
      $region31: #{deeper_gcn_forward.7} parent=11 // pred_region
        _
      $region32: #{deeper_gcn_forward.7} parent=11 // pred_fallthru
        _
    $region12: #{deeper_gcn_forward.7} parent=5 // pred_fallthru
      _
    %p223 = scmp.lt.s32.totalorder %s15, 2
    // Predicated region
    $region33: #{deeper_gcn_forward.7} parent=5 // pred_check
      %p224 = pneg %p223
    $region34: #{deeper_gcn_forward.7} parent=5 // pred_check_branch
      %226 = sbr.rel (%p224) target = $region36
    $region35: #{deeper_gcn_forward.7} parent=5 // pred_region
      // Predicated region
      $region37: #{deeper_gcn_forward.7} parent=35 // pred_check
        %p227 = pneg %p35
      $region38: #{deeper_gcn_forward.7} parent=35 // pred_check_branch
        %229 = sbr.rel (%p227) target = $region40
      $region39: #{deeper_gcn_forward.7} parent=35 // pred_region
        %s230 = smul.u32 16, %s15
        %p231 = scmp.lt.s32.totalorder %s230, 31
        %s232 = scalar_select %p231, %s230, 31
        %s233 = smul.addr %s232, 8
        %s234 = scalar_lea.vmem %s0, %s233
        %s235 = smul.u32 16, %s15
      $region40: #{deeper_gcn_forward.7} parent=35 // pred_fallthru
        _
    $region36: #{deeper_gcn_forward.7} parent=5 // pred_fallthru
      _
    %p236 = scmp.le.s32.totalorder 1, %s15
    %p237 = scmp.lt.s32.totalorder %s15, 3
    %p238 = pnand %p236, %p237
    %p239 = pneg %p238
    // Predicated region
    $region41: #{deeper_gcn_forward.7} parent=5 // pred_check
      _
    $region42: #{deeper_gcn_forward.7} parent=5 // pred_check_branch
      %241 = sbr.rel (%p238) target = $region44
    $region43: #{deeper_gcn_forward.7} parent=5 // pred_region
      %s242 = ssub.s32 %s15, 1
      %s243 = smul.u32 16, %s20
      %p244 = scmp.lt.s32.totalorder %s243, 31
      %s245 = scalar_select %p244, %s243, 31
      %s246 = smul.addr %s245, 8
      %s247 = scalar_lea.vmem %s0, %s246
      %p248 = pneg %p41
      %p249 = pneg %p38
      %p250 = pneg %p62
      %p251 = pneg %p59
      %p252 = pneg %p83
      %p253 = pneg %p80
      %p254 = pneg %p104
      %p255 = pneg %p101
      %p256 = pneg %p125
      %p257 = pneg %p122
      %p258 = pneg %p146
      %p259 = pneg %p143
      %p260 = pneg %p172
      %p261 = pneg %p169
      %s262 = smul.u32 16, %s20
      %p263 = scmp.lt.s32.totalorder %s262, 31
      %s264 = scalar_select %p263, %s262, 31
      %s265 = smul.addr %s264, 8
      %s266 = scalar_lea.vmem %s6, %s265
      %p267 = pneg %p193
      %p268 = pneg %p190
      %s269 = smul.u32 16, %s20
      %p270 = scmp.lt.s32.totalorder %s269, 31
      %s271 = scalar_select %p270, %s269, 31
      %s272 = smul.addr %s271, 8
      %s273 = scalar_lea.vmem %s0, %s272
      %s274 = smul.u32 16, %s20
      %s275 = smul.u32 16, %s20
      %p276 = scmp.lt.s32.totalorder %s275, 31
      %s277 = scalar_select %p276, %s275, 31
      %s278 = smul.addr %s277, 8
      %s279 = scalar_lea.vmem %s6, %s278
      %s280 = smul.u32 16, %s20
      %v281 = vld [vmem:[%s273] sm:$0xff]
      %v282 = vld [vmem:[%s273 + $0x8] sm:$0xff]
      %v283 = vld [vmem:[%s273 + $0x10] sm:$0xff]
      %v284 = vld [vmem:[%s273 + $0x18] sm:$0xff]
      %v285 = vld [vmem:[%s273 + $0x20] sm:$0xff]
      %v286 = vld [vmem:[%s273 + $0x28] sm:$0xff]
      %v287 = vld [vmem:[%s273 + $0x30] sm:$0xff]
      %v288 = vld [vmem:[%s273 + $0x38] sm:$0xff]
      %v289 = vld [vmem:[%s273 + $0x40] sm:$0xff]
      %v290 = vld [vmem:[%s273 + $0x48] sm:$0xff]
      %v291 = vld [vmem:[%s273 + $0x50] sm:$0xff]
      %v292 = vld [vmem:[%s273 + $0x58] sm:$0xff]
      %v293 = vld [vmem:[%s273 + $0x60] sm:$0xff]
      %v294 = vld [vmem:[%s273 + $0x68] sm:$0xff]
      %v295 = vld [vmem:[%s273 + $0x70] sm:$0xff]
      %v296 = vld [vmem:[%s273 + $0x78] sm:$0xff]
      %v297 = vld [vmem:[%s3] sm:$0x1]
      %v299 = vlaneseq
      %v300 = vshrl.u32 %v299, 7
      %v301 = vsub.s32 0, %v300
      %v302 = vrot.slane %v297, %v301
      %v304 = vsub.f32 %v281, %v302
      %v305 = vsub.f32 %v282, %v302
      %v306 = vsub.f32 %v283, %v302
      %v307 = vsub.f32 %v284, %v302
      %v308 = vsub.f32 %v285, %v302
      %v309 = vsub.f32 %v286, %v302
      %v310 = vsub.f32 %v287, %v302
      %v311 = vsub.f32 %v288, %v302
      %v312 = vsub.f32 %v289, %v302
      %v313 = vsub.f32 %v290, %v302
      %v314 = vsub.f32 %v291, %v302
      %v315 = vsub.f32 %v292, %v302
      %v316 = vsub.f32 %v293, %v302
      %v317 = vsub.f32 %v294, %v302
      %v318 = vsub.f32 %v295, %v302
      %v319 = vsub.f32 %v296, %v302
      %v320 = vld [vmem:[%s4] sm:$0x1]
      %v321 = vadd.f32 %v320, 1e-05
      %v322 = vrsqrt.pop %v321
      %v324 = vlaneseq
      %v325 = vshrl.u32 %v324, 7
      %v326 = vsub.s32 0, %v325
      %v327 = vrot.slane %v322, %v326
      %v329 = vmul.f32 %v304, %v327
      %v330 = vmul.f32 %v305, %v327
      %v331 = vmul.f32 %v306, %v327
      %v332 = vmul.f32 %v307, %v327
      %v333 = vmul.f32 %v308, %v327
      %v334 = vmul.f32 %v309, %v327
      %v335 = vmul.f32 %v310, %v327
      %v336 = vmul.f32 %v311, %v327
      %v337 = vmul.f32 %v312, %v327
      %v338 = vmul.f32 %v313, %v327
      %v339 = vmul.f32 %v314, %v327
      %v340 = vmul.f32 %v315, %v327
      %v341 = vmul.f32 %v316, %v327
      %v342 = vmul.f32 %v317, %v327
      %v343 = vmul.f32 %v318, %v327
      %v344 = vmul.f32 %v319, %v327
      %v345 = vld [vmem:[%s1] sm:$0x1]
      %v347 = vlaneseq
      %v348 = vshrl.u32 %v347, 7
      %v349 = vsub.s32 0, %v348
      %v350 = vrot.slane %v345, %v349
      %v352 = vmul.f32 %v329, %v350
      %v353 = vmul.f32 %v330, %v350
      %v354 = vmul.f32 %v331, %v350
      %v355 = vmul.f32 %v332, %v350
      %v356 = vmul.f32 %v333, %v350
      %v357 = vmul.f32 %v334, %v350
      %v358 = vmul.f32 %v335, %v350
      %v359 = vmul.f32 %v336, %v350
      %v360 = vmul.f32 %v337, %v350
      %v361 = vmul.f32 %v338, %v350
      %v362 = vmul.f32 %v339, %v350
      %v363 = vmul.f32 %v340, %v350
      %v364 = vmul.f32 %v341, %v350
      %v365 = vmul.f32 %v342, %v350
      %v366 = vmul.f32 %v343, %v350
      %v367 = vmul.f32 %v344, %v350
      %v368 = vld [vmem:[%s2] sm:$0x1]
      %v370 = vlaneseq
      %v371 = vshrl.u32 %v370, 7
      %v372 = vsub.s32 0, %v371
      %v373 = vrot.slane %v368, %v372
      %v375 = vadd.f32 %v352, %v373
      %v376 = vadd.f32 %v353, %v373
      %v377 = vadd.f32 %v354, %v373
      %v378 = vadd.f32 %v355, %v373
      %v379 = vadd.f32 %v356, %v373
      %v380 = vadd.f32 %v357, %v373
      %v381 = vadd.f32 %v358, %v373
      %v382 = vadd.f32 %v359, %v373
      %v383 = vadd.f32 %v360, %v373
      %v384 = vadd.f32 %v361, %v373
      %v385 = vadd.f32 %v362, %v373
      %v386 = vadd.f32 %v363, %v373
      %v387 = vadd.f32 %v364, %v373
      %v388 = vadd.f32 %v365, %v373
      %v389 = vadd.f32 %v366, %v373
      %v390 = vadd.f32 %v367, %v373
      %v391 = vmax.f32 %v375, 0.0
      %v392 = vmax.f32 %v376, 0.0
      %v393 = vmax.f32 %v377, 0.0
      %v394 = vmax.f32 %v378, 0.0
      %v395 = vmax.f32 %v379, 0.0
      %v396 = vmax.f32 %v380, 0.0
      %v397 = vmax.f32 %v381, 0.0
      %v398 = vmax.f32 %v382, 0.0
      %v399 = vmax.f32 %v383, 0.0
      %v400 = vmax.f32 %v384, 0.0
      %v401 = vmax.f32 %v385, 0.0
      %v402 = vmax.f32 %v386, 0.0
      %v403 = vmax.f32 %v387, 0.0
      %v404 = vmax.f32 %v388, 0.0
      %v405 = vmax.f32 %v389, 0.0
      %v406 = vmax.f32 %v390, 0.0
      %407 = vst [vmem:[%s279] sm:$0xff] %v391
      %408 = vst [vmem:[%s279 + $0x8] sm:$0xff] %v392
      %409 = vst [vmem:[%s279 + $0x10] sm:$0xff] %v393
      %410 = vst [vmem:[%s279 + $0x18] sm:$0xff] %v394
      %411 = vst [vmem:[%s279 + $0x20] sm:$0xff] %v395
      %412 = vst [vmem:[%s279 + $0x28] sm:$0xff] %v396
      %413 = vst [vmem:[%s279 + $0x30] sm:$0xff] %v397
      %414 = vst [vmem:[%s279 + $0x38] sm:$0xff] %v398
      %415 = vst [vmem:[%s279 + $0x40] sm:$0xff] %v399
      %416 = vst [vmem:[%s279 + $0x48] sm:$0xff] %v400
      %417 = vst [vmem:[%s279 + $0x50] sm:$0xff] %v401
      %418 = vst [vmem:[%s279 + $0x58] sm:$0xff] %v402
      %419 = vst [vmem:[%s279 + $0x60] sm:$0xff] %v403
      %420 = vst [vmem:[%s279 + $0x68] sm:$0xff] %v404
      %421 = vst [vmem:[%s279 + $0x70] sm:$0xff] %v405
      %422 = vst [vmem:[%s279 + $0x78] sm:$0xff] %v406
      %s423 = sld [smem:[#allocation2]]
      %v424 = vadd.f32 %v391, 1e-07
      %v425 = vadd.f32 %v392, 1e-07
      %v426 = vadd.f32 %v393, 1e-07
      %v427 = vadd.f32 %v394, 1e-07
      %v428 = vadd.f32 %v395, 1e-07
      %v429 = vadd.f32 %v396, 1e-07
      %v430 = vadd.f32 %v397, 1e-07
      %v431 = vadd.f32 %v398, 1e-07
      %v432 = vadd.f32 %v399, 1e-07
      %v433 = vadd.f32 %v400, 1e-07
      %v434 = vadd.f32 %v401, 1e-07
      %v435 = vadd.f32 %v402, 1e-07
      %v436 = vadd.f32 %v403, 1e-07
      %v437 = vadd.f32 %v404, 1e-07
      %v438 = vadd.f32 %v405, 1e-07
      %v439 = vadd.f32 %v406, 1e-07
      %v440 = vstv %s423
      %v441 = vmul.f32 %v440, %v424
      %v442 = vmul.f32 %v440, %v425
      %v443 = vmul.f32 %v440, %v426
      %v444 = vmul.f32 %v440, %v427
      %v445 = vmul.f32 %v440, %v428
      %v446 = vmul.f32 %v440, %v429
      %v447 = vmul.f32 %v440, %v430
      %v448 = vmul.f32 %v440, %v431
      %v449 = vmul.f32 %v440, %v432
      %v450 = vmul.f32 %v440, %v433
      %v451 = vmul.f32 %v440, %v434
      %v452 = vmul.f32 %v440, %v435
      %v453 = vmul.f32 %v440, %v436
      %v454 = vmul.f32 %v440, %v437
      %v455 = vmul.f32 %v440, %v438
      %v456 = vmul.f32 %v440, %v439
      %v457 = vmax.f32 %v441, %v445
      %v458 = vmax.f32 %v442, %v446
      %v459 = vmax.f32 %v443, %v447
      %v460 = vmax.f32 %v444, %v448
      %v461 = vmax.f32 %v457, %v449
      %v462 = vmax.f32 %v458, %v450
      %v463 = vmax.f32 %v459, %v451
      %v464 = vmax.f32 %v460, %v452
      %v465 = vmax.f32 %v461, %v453
      %v466 = vmax.f32 %v462, %v454
      %v467 = vmax.f32 %v463, %v455
      %v468 = vmax.f32 %v464, %v456
      %v469 = vmax.f32 %v465, %v466
      %v470 = vmax.f32 %v467, %v468
      %v471 = vmax.f32 %v469, %v470
      %v472 = vrot.slane %v471, 4
      %v473 = vmax.f32 %v471, %v472
      %v474 = vrot.slane %v473, 2
      %v475 = vmax.f32 %v473, %v474
      %v476 = vrot.slane %v475, 1
      %v477 = vmax.f32 %v475, %v476
      %p478 = scmp.eq.s32.totalorder %s20, 0
      // Predicated region
      $region45: #{deeper_gcn_forward.7} parent=43 // pred_check
        %p479 = pneg %p478
      $region46: #{deeper_gcn_forward.7} parent=43 // pred_check_branch
        %481 = sbr.rel (%p479) target = $region48
      $region47: #{deeper_gcn_forward.7} parent=43 // pred_region
        %482 = vst [vmem:[%s7] sm:$0x1] %v477
      $region48: #{deeper_gcn_forward.7} parent=43 // pred_fallthru
        _
      %p483 = scmp.gt.s32.totalorder %s20, 0
      // Predicated region
      $region49: #{deeper_gcn_forward.7} parent=43 // pred_check
        %p484 = pneg %p483
      $region50: #{deeper_gcn_forward.7} parent=43 // pred_check_branch
        %486 = sbr.rel (%p484) target = $region52
      $region51: #{deeper_gcn_forward.7} parent=43 // pred_region
        %v487 = vld [vmem:[%s7] sm:$0x1]
        %v488 = vmax.f32 %v487, %v477
        %489 = vst [vmem:[%s7] sm:$0x1] %v488
      $region52: #{deeper_gcn_forward.7} parent=43 // pred_fallthru
        _
      %s490 = smul.u32 16, %s20
      %p491 = scmp.lt.s32.totalorder %s490, 31
      %s492 = scalar_select %p491, %s490, 31
      %s493 = smul.addr %s492, 8
      %s494 = scalar_lea.vmem %s6, %s493
      // Predicated region
      $region53: #{deeper_gcn_forward.7} parent=43 // pred_check
        %p495 = pneg %p169
      $region54: #{deeper_gcn_forward.7} parent=43 // pred_check_branch
        %497 = sbr.rel (%p495) target = $region56
      $region55: #{deeper_gcn_forward.7} parent=43 // pred_region
        %s498 = smul.u32 16, %s20
      $region56: #{deeper_gcn_forward.7} parent=43 // pred_fallthru
        _
      // Predicated region
      $region57: #{deeper_gcn_forward.7} parent=43 // pred_check
        %p499 = pneg %p190
      $region58: #{deeper_gcn_forward.7} parent=43 // pred_check_branch
        %501 = sbr.rel (%p499) target = $region60
      $region59: #{deeper_gcn_forward.7} parent=43 // pred_region
        _
      $region60: #{deeper_gcn_forward.7} parent=43 // pred_fallthru
        _
      // Predicated region
      $region61: #{deeper_gcn_forward.7} parent=43 // pred_check
        %p502 = pneg %p190
      $region62: #{deeper_gcn_forward.7} parent=43 // pred_check_branch
        %504 = sbr.rel (%p502) target = $region64
      $region63: #{deeper_gcn_forward.7} parent=43 // pred_region
        _
      $region64: #{deeper_gcn_forward.7} parent=43 // pred_fallthru
        _
    $region44: #{deeper_gcn_forward.7} parent=5 // pred_fallthru
      _
    %p505 = scmp.le.s32.totalorder 2, %s15
    // Predicated region
    $region65: #{deeper_gcn_forward.7} parent=5 // pred_check
      %p506 = pneg %p505
    $region66: #{deeper_gcn_forward.7} parent=5 // pred_check_branch
      %508 = sbr.rel (%p506) target = $region68
    $region67: #{deeper_gcn_forward.7} parent=5 // pred_region
      %s509 = ssub.s32 %s15, 2
      // Predicated region
      $region69: #{deeper_gcn_forward.7} parent=67 // pred_check
        %p510 = pneg %p175
      $region70: #{deeper_gcn_forward.7} parent=67 // pred_check_branch
        %512 = sbr.rel (%p510) target = $region72
      $region71: #{deeper_gcn_forward.7} parent=67 // pred_region
        %s513 = smul.u32 16, %s21
        %p514 = scmp.lt.s32.totalorder %s513, 31
        %s515 = scalar_select %p514, %s513, 31
        %s516 = smul.addr %s515, 8
        %s517 = scalar_lea.vmem %s6, %s516
      $region72: #{deeper_gcn_forward.7} parent=67 // pred_fallthru
        _
    $region68: #{deeper_gcn_forward.7} parent=5 // pred_fallthru
      _
  $region6: #{deeper_gcn_forward.7} parent=0 // loop_footer
    %s19 = sadd.s32 1, %s15
  $region7: #{deeper_gcn_forward.7} parent=0 // loop_footer_branch
    %14 = sbr.rel target = $region3
  $region8: #{deeper_gcn_forward.7} parent=0 // loop_exit
    _

// kernel: deeper_gcn_forward.8
$region0: #{deeper_gcn_forward.8}
  #allocation0 [shape = 'u32[]', space=smem, size = 0x4, offset = 0x4, fixed_abs, tag = 'smem constant byte address 0x4 - core index']
  #allocation1 [shape = 'u32[144,128]{1,0:T(1,128)}', space=vmem, size = 0x12000, scoped, tag = 'internal scratch']
  #allocation2 [shape = 'f32[1,1]{1,0:T(1,128)S(6)}', space=smem, size = 0x200, scoped, tag = 'scoped memory for deeper_gcn_forward.8']
  %s0 = inlined_call_operand.vmem [shape: f32[256,128], index: 0, kind: input, shape index: {}]
  %s1 = inlined_call_operand.vmem [shape: f32[1,128], index: 1, kind: input, shape index: {}]
  %s2 = inlined_call_operand.<no memory space> [shape: f32[1,1], index: 2, kind: input, shape index: {}]
  %s3 = inlined_call_operand.vmem [shape: bf16[256,256], index: 3, kind: output, shape index: {}]
  %s4 = sld [smem:[#allocation0]]
  $region45: #{deeper_gcn_forward.8} parent=0
    _
  %s6 = ssub.s32 1, %s4
  %s7 = scalar_select 0, %s6, %s4
  %8 = sst [smem:[#allocation2]] %s2
  loop: start=0, step=1, limit=4
  $region2: #{deeper_gcn_forward.8} parent=0 // loop_pre_header
    _
  $region3: #{deeper_gcn_forward.8} parent=0 // loop_header
    %s10 = sphi 0, %s14
    %p11 = scmp.ge.s32.totalorder %s10, 4
    %s20 = sphi 0, %s22
    %s23 = sphi 0, %s20
    %s24 = sphi 0, %s23
    %s40 = sphi 0, %s24
    %s44 = sphi 0, %s44
    %s46 = sphi 0, %s44
    %s47 = sphi 0, %s46
    %s61 = sphi 0, %s47
    %s65 = sphi 0, %s65
    %s67 = sphi 0, %s65
    %s68 = sphi 0, %s67
    %s82 = sphi 0, %s68
    %s88 = sphi 0, %s90
    %s91 = sphi 0, %s88
    %s92 = sphi 0, %s91
    %s108 = sphi 0, %s92
  $region4: #{deeper_gcn_forward.8} parent=0 // loop_header_branch
    %13 = sbr.rel (%p11) target = $region8
  $region5: #{deeper_gcn_forward.8} parent=0 // loop_body
    %s15 = ssub.s32 %s10, 1
    %s16 = ssub.s32 %s10, 2
    %s17 = sadd.s32 %s10, 1
    %s18 = ssub.s32 %s10, %s17
    %p19 = scmp.eq.s32.totalorder %s18, 0
    %s21 = sadd.s32 %s20, 1
    %s22 = scalar_select %p19, %s20, %s21
    %p25 = pneg %p19
    %p26 = scmp.eq.s32.totalorder %s10, 1
    %p27 = por %p25, %p26
    %p28 = scmp.ne.s32.totalorder %s20, %s23
    %p29 = scmp.eq.s32.totalorder %s10, 0
    %p30 = por %p28, %p29
    %p31 = scmp.ne.s32.totalorder %s20, %s23
    %p32 = scmp.eq.s32.totalorder %s15, 1
    %p33 = por %p31, %p32
    %p34 = scmp.ne.s32.totalorder %s23, %s24
    %p35 = scmp.eq.s32.totalorder %s15, 0
    %p36 = por %p34, %p35
    %p37 = scmp.ne.s32.totalorder %s23, %s24
    %p38 = scmp.eq.s32.totalorder %s16, 1
    %p39 = por %p37, %p38
    %p41 = scmp.ne.s32.totalorder %s24, %s40
    %p42 = scmp.eq.s32.totalorder %s16, 0
    %p43 = por %p41, %p42
    %s45 = sadd.s32 %s44, 1
    %p48 = scmp.eq.s32.totalorder %s10, 1
    %p49 = scmp.ne.s32.totalorder %s44, %s46
    %p50 = scmp.eq.s32.totalorder %s10, 0
    %p51 = por %p49, %p50
    %p52 = scmp.ne.s32.totalorder %s44, %s46
    %p53 = scmp.eq.s32.totalorder %s15, 1
    %p54 = por %p52, %p53
    %p55 = scmp.ne.s32.totalorder %s46, %s47
    %p56 = scmp.eq.s32.totalorder %s15, 0
    %p57 = por %p55, %p56
    %p58 = scmp.ne.s32.totalorder %s46, %s47
    %p59 = scmp.eq.s32.totalorder %s16, 1
    %p60 = por %p58, %p59
    %p62 = scmp.ne.s32.totalorder %s47, %s61
    %p63 = scmp.eq.s32.totalorder %s16, 0
    %p64 = por %p62, %p63
    %s66 = sadd.s32 %s65, 1
    %p69 = scmp.eq.s32.totalorder %s10, 1
    %p70 = scmp.ne.s32.totalorder %s65, %s67
    %p71 = scmp.eq.s32.totalorder %s10, 0
    %p72 = por %p70, %p71
    %p73 = scmp.ne.s32.totalorder %s65, %s67
    %p74 = scmp.eq.s32.totalorder %s15, 1
    %p75 = por %p73, %p74
    %p76 = scmp.ne.s32.totalorder %s67, %s68
    %p77 = scmp.eq.s32.totalorder %s15, 0
    %p78 = por %p76, %p77
    %p79 = scmp.ne.s32.totalorder %s67, %s68
    %p80 = scmp.eq.s32.totalorder %s16, 1
    %p81 = por %p79, %p80
    %p83 = scmp.ne.s32.totalorder %s68, %s82
    %p84 = scmp.eq.s32.totalorder %s16, 0
    %p85 = por %p83, %p84
    %s86 = ssub.s32 %s10, %s17
    %p87 = scmp.eq.s32.totalorder %s86, 0
    %s89 = sadd.s32 %s88, 1
    %s90 = scalar_select %p87, %s88, %s89
    %p93 = pneg %p87
    %p94 = scmp.eq.s32.totalorder %s10, 1
    %p95 = por %p93, %p94
    %p96 = scmp.ne.s32.totalorder %s88, %s91
    %p97 = scmp.eq.s32.totalorder %s10, 0
    %p98 = por %p96, %p97
    %p99 = scmp.ne.s32.totalorder %s88, %s91
    %p100 = scmp.eq.s32.totalorder %s15, 1
    %p101 = por %p99, %p100
    %p102 = scmp.ne.s32.totalorder %s91, %s92
    %p103 = scmp.eq.s32.totalorder %s15, 0
    %p104 = por %p102, %p103
    %p105 = scmp.ne.s32.totalorder %s91, %s92
    %p106 = scmp.eq.s32.totalorder %s16, 1
    %p107 = por %p105, %p106
    %p109 = scmp.ne.s32.totalorder %s92, %s108
    %p110 = scmp.eq.s32.totalorder %s16, 0
    %p111 = por %p109, %p110
    %p112 = scmp.le.s32.totalorder 1, %s10
    %p113 = scmp.lt.s32.totalorder %s10, 3
    %p114 = pnand %p112, %p113
    %p115 = pneg %p114
    // Predicated region
    $region9: #{deeper_gcn_forward.8} parent=5 // pred_check
      _
    $region10: #{deeper_gcn_forward.8} parent=5 // pred_check_branch
      %117 = sbr.rel (%p114) target = $region12
    $region11: #{deeper_gcn_forward.8} parent=5 // pred_region
      %s118 = ssub.s32 %s10, 1
      // Predicated region
      $region13: #{deeper_gcn_forward.8} parent=11 // pred_check
        %p119 = pneg %p57
      $region14: #{deeper_gcn_forward.8} parent=11 // pred_check_branch
        %121 = sbr.rel (%p119) target = $region16
      $region15: #{deeper_gcn_forward.8} parent=11 // pred_region
        _
      $region16: #{deeper_gcn_forward.8} parent=11 // pred_fallthru
        _
      // Predicated region
      $region17: #{deeper_gcn_forward.8} parent=11 // pred_check
        %p122 = pneg %p78
      $region18: #{deeper_gcn_forward.8} parent=11 // pred_check_branch
        %124 = sbr.rel (%p122) target = $region20
      $region19: #{deeper_gcn_forward.8} parent=11 // pred_region
        _
      $region20: #{deeper_gcn_forward.8} parent=11 // pred_fallthru
        _
    $region12: #{deeper_gcn_forward.8} parent=5 // pred_fallthru
      _
    %p125 = scmp.lt.s32.totalorder %s10, 2
    // Predicated region
    $region21: #{deeper_gcn_forward.8} parent=5 // pred_check
      %p126 = pneg %p125
    $region22: #{deeper_gcn_forward.8} parent=5 // pred_check_branch
      %128 = sbr.rel (%p126) target = $region24
    $region23: #{deeper_gcn_forward.8} parent=5 // pred_region
      // Predicated region
      $region25: #{deeper_gcn_forward.8} parent=23 // pred_check
        %p129 = pneg %p30
      $region26: #{deeper_gcn_forward.8} parent=23 // pred_check_branch
        %131 = sbr.rel (%p129) target = $region28
      $region27: #{deeper_gcn_forward.8} parent=23 // pred_region
        %s132 = smul.u32 16, %s10
        %p133 = scmp.lt.s32.totalorder %s132, 31
        %s134 = scalar_select %p133, %s132, 31
        %s135 = smul.addr %s134, 8
        %s136 = scalar_lea.vmem %s0, %s135
        %s137 = smul.u32 16, %s10
      $region28: #{deeper_gcn_forward.8} parent=23 // pred_fallthru
        _
    $region24: #{deeper_gcn_forward.8} parent=5 // pred_fallthru
      _
    %p138 = scmp.le.s32.totalorder 1, %s10
    %p139 = scmp.lt.s32.totalorder %s10, 3
    %p140 = pnand %p138, %p139
    %p141 = pneg %p140
    // Predicated region
    $region29: #{deeper_gcn_forward.8} parent=5 // pred_check
      _
    $region30: #{deeper_gcn_forward.8} parent=5 // pred_check_branch
      %143 = sbr.rel (%p140) target = $region32
    $region31: #{deeper_gcn_forward.8} parent=5 // pred_region
      %s144 = ssub.s32 %s10, 1
      %s145 = smul.u32 16, %s15
      %p146 = scmp.lt.s32.totalorder %s145, 31
      %s147 = scalar_select %p146, %s145, 31
      %s148 = smul.addr %s147, 8
      %s149 = scalar_lea.vmem %s0, %s148
      %p150 = pneg %p36
      %p151 = pneg %p33
      %p152 = pneg %p57
      %p153 = pneg %p54
      %p154 = pneg %p78
      %p155 = pneg %p75
      %p156 = pneg %p104
      %p157 = pneg %p101
      %s158 = smul.u32 16, %s15
      %p159 = scmp.lt.s32.totalorder %s158, 31
      %s160 = scalar_select %p159, %s158, 31
      %s161 = smul.addr %s160, 2
      %s162 = smul.addr %s161, 4
      %s163 = scalar_lea.vmem %s3, %s162
      %s164 = smul.u32 16, %s15
      %p165 = scmp.lt.s32.totalorder %s164, 31
      %s166 = scalar_select %p165, %s164, 31
      %s167 = smul.addr %s166, 8
      %s168 = scalar_lea.vmem %s0, %s167
      %s169 = smul.u32 16, %s15
      %s170 = smul.u32 16, %s15
      %p171 = scmp.lt.s32.totalorder %s170, 31
      %s172 = scalar_select %p171, %s170, 31
      %s173 = smul.addr %s172, 2
      %s174 = smul.addr %s173, 4
      %s175 = scalar_lea.vmem %s3, %s174
      %s176 = smul.u32 16, %s15
      %s177 = sld [smem:[#allocation2]]
      %v178 = vld [vmem:[%s168] sm:$0xff]
      %v179 = vld [vmem:[%s168 + $0x8] sm:$0xff]
      %v180 = vld [vmem:[%s168 + $0x10] sm:$0xff]
      %v181 = vld [vmem:[%s168 + $0x18] sm:$0xff]
      %v182 = vld [vmem:[%s168 + $0x20] sm:$0xff]
      %v183 = vld [vmem:[%s168 + $0x28] sm:$0xff]
      %v184 = vld [vmem:[%s168 + $0x30] sm:$0xff]
      %v185 = vld [vmem:[%s168 + $0x38] sm:$0xff]
      %v186 = vld [vmem:[%s168 + $0x40] sm:$0xff]
      %v187 = vld [vmem:[%s168 + $0x48] sm:$0xff]
      %v188 = vld [vmem:[%s168 + $0x50] sm:$0xff]
      %v189 = vld [vmem:[%s168 + $0x58] sm:$0xff]
      %v190 = vld [vmem:[%s168 + $0x60] sm:$0xff]
      %v191 = vld [vmem:[%s168 + $0x68] sm:$0xff]
      %v192 = vld [vmem:[%s168 + $0x70] sm:$0xff]
      %v193 = vld [vmem:[%s168 + $0x78] sm:$0xff]
      %v194 = vadd.f32 %v178, 1e-07
      %v195 = vadd.f32 %v179, 1e-07
      %v196 = vadd.f32 %v180, 1e-07
      %v197 = vadd.f32 %v181, 1e-07
      %v198 = vadd.f32 %v182, 1e-07
      %v199 = vadd.f32 %v183, 1e-07
      %v200 = vadd.f32 %v184, 1e-07
      %v201 = vadd.f32 %v185, 1e-07
      %v202 = vadd.f32 %v186, 1e-07
      %v203 = vadd.f32 %v187, 1e-07
      %v204 = vadd.f32 %v188, 1e-07
      %v205 = vadd.f32 %v189, 1e-07
      %v206 = vadd.f32 %v190, 1e-07
      %v207 = vadd.f32 %v191, 1e-07
      %v208 = vadd.f32 %v192, 1e-07
      %v209 = vadd.f32 %v193, 1e-07
      %v210 = vstv %s177
      %v211 = vmul.f32 %v210, %v194
      %v212 = vmul.f32 %v210, %v195
      %v213 = vmul.f32 %v210, %v196
      %v214 = vmul.f32 %v210, %v197
      %v215 = vmul.f32 %v210, %v198
      %v216 = vmul.f32 %v210, %v199
      %v217 = vmul.f32 %v210, %v200
      %v218 = vmul.f32 %v210, %v201
      %v219 = vmul.f32 %v210, %v202
      %v220 = vmul.f32 %v210, %v203
      %v221 = vmul.f32 %v210, %v204
      %v222 = vmul.f32 %v210, %v205
      %v223 = vmul.f32 %v210, %v206
      %v224 = vmul.f32 %v210, %v207
      %v225 = vmul.f32 %v210, %v208
      %v226 = vmul.f32 %v210, %v209
      %v227 = vld [vmem:[%s1] sm:$0x1]
      %v229 = vlaneseq
      %v230 = vshrl.u32 %v229, 7
      %v231 = vsub.s32 0, %v230
      %v232 = vrot.slane %v227, %v231
      %v234 = vsub.f32 %v211, %v232
      %v235 = vsub.f32 %v212, %v232
      %v236 = vsub.f32 %v213, %v232
      %v237 = vsub.f32 %v214, %v232
      %v238 = vsub.f32 %v215, %v232
      %v239 = vsub.f32 %v216, %v232
      %v240 = vsub.f32 %v217, %v232
      %v241 = vsub.f32 %v218, %v232
      %v242 = vsub.f32 %v219, %v232
      %v243 = vsub.f32 %v220, %v232
      %v244 = vsub.f32 %v221, %v232
      %v245 = vsub.f32 %v222, %v232
      %v246 = vsub.f32 %v223, %v232
      %v247 = vsub.f32 %v224, %v232
      %v248 = vsub.f32 %v225, %v232
      %v249 = vsub.f32 %v226, %v232
      %v250 = vmul.f32 %v234, 1.442695
      %v251 = vpow.pop %v250
      %v252 = vmul.f32 %v235, 1.442695
      %v253 = vpow.pop %v252
      %v254 = vmul.f32 %v236, 1.442695
      %v255 = vpow.pop %v254
      %v256 = vmul.f32 %v237, 1.442695
      %v257 = vpow.pop %v256
      %v258 = vmul.f32 %v238, 1.442695
      %v259 = vpow.pop %v258
      %v260 = vmul.f32 %v239, 1.442695
      %v261 = vpow.pop %v260
      %v262 = vmul.f32 %v240, 1.442695
      %v263 = vpow.pop %v262
      %v264 = vmul.f32 %v241, 1.442695
      %v265 = vpow.pop %v264
      %v266 = vmul.f32 %v242, 1.442695
      %v267 = vpow.pop %v266
      %v268 = vmul.f32 %v243, 1.442695
      %v269 = vpow.pop %v268
      %v270 = vmul.f32 %v244, 1.442695
      %v271 = vpow.pop %v270
      %v272 = vmul.f32 %v245, 1.442695
      %v273 = vpow.pop %v272
      %v274 = vmul.f32 %v246, 1.442695
      %v275 = vpow.pop %v274
      %v276 = vmul.f32 %v247, 1.442695
      %v277 = vpow.pop %v276
      %v278 = vmul.f32 %v248, 1.442695
      %v279 = vpow.pop %v278
      %v280 = vmul.f32 %v249, 1.442695
      %v281 = vpow.pop %v280
      %v282 = vpack.c.bf16 %v253, %v251
      %v283 = vpack.c.bf16 %v257, %v255
      %v284 = vpack.c.bf16 %v261, %v259
      %v285 = vpack.c.bf16 %v265, %v263
      %v286 = vpack.c.bf16 %v269, %v267
      %v287 = vpack.c.bf16 %v273, %v271
      %v288 = vpack.c.bf16 %v277, %v275
      %v289 = vpack.c.bf16 %v281, %v279
      %v298 = vunpack.c.l.b16 %v282
      %v299 = vunpack.c.h.b16 %v282
      %v300 = vunpack.c.l.b16 %v283
      %v301 = vunpack.c.h.b16 %v283
      %v302 = vunpack.c.l.b16 %v284
      %v303 = vunpack.c.h.b16 %v284
      %v304 = vunpack.c.l.b16 %v285
      %v305 = vunpack.c.h.b16 %v285
      %v306 = vunpack.c.l.b16 %v286
      %v307 = vunpack.c.h.b16 %v286
      %v308 = vunpack.c.l.b16 %v287
      %v309 = vunpack.c.h.b16 %v287
      %v310 = vunpack.c.l.b16 %v288
      %v311 = vunpack.c.h.b16 %v288
      %v312 = vunpack.c.l.b16 %v289
      %v313 = vunpack.c.h.b16 %v289
      %v314 = vpack.c.b16 %v298, %v298
      %v315 = vpack.c.b16 %v299, %v299
      %v316 = vpack.c.b16 %v300, %v300
      %v317 = vpack.c.b16 %v301, %v301
      %v318 = vpack.c.b16 %v302, %v302
      %v319 = vpack.c.b16 %v303, %v303
      %v320 = vpack.c.b16 %v304, %v304
      %v321 = vpack.c.b16 %v305, %v305
      %v322 = vpack.c.b16 %v306, %v306
      %v323 = vpack.c.b16 %v307, %v307
      %v324 = vpack.c.b16 %v308, %v308
      %v325 = vpack.c.b16 %v309, %v309
      %v326 = vpack.c.b16 %v310, %v310
      %v327 = vpack.c.b16 %v311, %v311
      %v328 = vpack.c.b16 %v312, %v312
      %v329 = vpack.c.b16 %v313, %v313
      %346 = vst [vmem:[%s175] sm:$0xf] %v314
      %347 = vst [vmem:[%s175 + $0x8] sm:$0xf] %v315
      %348 = vst [vmem:[%s175 + $0x10] sm:$0xf] %v316
      %349 = vst [vmem:[%s175 + $0x18] sm:$0xf] %v317
      %350 = vst [vmem:[%s175 + $0x20] sm:$0xf] %v318
      %351 = vst [vmem:[%s175 + $0x28] sm:$0xf] %v319
      %352 = vst [vmem:[%s175 + $0x30] sm:$0xf] %v320
      %353 = vst [vmem:[%s175 + $0x38] sm:$0xf] %v321
      %354 = vst [vmem:[%s175 + $0x40] sm:$0xf] %v322
      %355 = vst [vmem:[%s175 + $0x48] sm:$0xf] %v323
      %356 = vst [vmem:[%s175 + $0x50] sm:$0xf] %v324
      %357 = vst [vmem:[%s175 + $0x58] sm:$0xf] %v325
      %358 = vst [vmem:[%s175 + $0x60] sm:$0xf] %v326
      %359 = vst [vmem:[%s175 + $0x68] sm:$0xf] %v327
      %360 = vst [vmem:[%s175 + $0x70] sm:$0xf] %v328
      %361 = vst [vmem:[%s175 + $0x78] sm:$0xf] %v329
      %v362 = vmul.f32 %v251, %v194
      %v363 = vmul.f32 %v253, %v195
      %v364 = vmul.f32 %v255, %v196
      %v365 = vmul.f32 %v257, %v197
      %v366 = vmul.f32 %v259, %v198
      %v367 = vmul.f32 %v261, %v199
      %v368 = vmul.f32 %v263, %v200
      %v369 = vmul.f32 %v265, %v201
      %v370 = vmul.f32 %v267, %v202
      %v371 = vmul.f32 %v269, %v203
      %v372 = vmul.f32 %v271, %v204
      %v373 = vmul.f32 %v273, %v205
      %v374 = vmul.f32 %v275, %v206
      %v375 = vmul.f32 %v277, %v207
      %v376 = vmul.f32 %v279, %v208
      %v377 = vmul.f32 %v281, %v209
      %v378 = vpack.c.bf16 %v363, %v362
      %v379 = vpack.c.bf16 %v365, %v364
      %v380 = vpack.c.bf16 %v367, %v366
      %v381 = vpack.c.bf16 %v369, %v368
      %v382 = vpack.c.bf16 %v371, %v370
      %v383 = vpack.c.bf16 %v373, %v372
      %v384 = vpack.c.bf16 %v375, %v374
      %v385 = vpack.c.bf16 %v377, %v376
      %v394 = vunpack.c.l.b16 %v378
      %v395 = vunpack.c.h.b16 %v378
      %v396 = vunpack.c.l.b16 %v379
      %v397 = vunpack.c.h.b16 %v379
      %v398 = vunpack.c.l.b16 %v380
      %v399 = vunpack.c.h.b16 %v380
      %v400 = vunpack.c.l.b16 %v381
      %v401 = vunpack.c.h.b16 %v381
      %v402 = vunpack.c.l.b16 %v382
      %v403 = vunpack.c.h.b16 %v382
      %v404 = vunpack.c.l.b16 %v383
      %v405 = vunpack.c.h.b16 %v383
      %v406 = vunpack.c.l.b16 %v384
      %v407 = vunpack.c.h.b16 %v384
      %v408 = vunpack.c.l.b16 %v385
      %v409 = vunpack.c.h.b16 %v385
      %v410 = vpack.c.b16 %v394, %v394
      %v411 = vpack.c.b16 %v395, %v395
      %v412 = vpack.c.b16 %v396, %v396
      %v413 = vpack.c.b16 %v397, %v397
      %v414 = vpack.c.b16 %v398, %v398
      %v415 = vpack.c.b16 %v399, %v399
      %v416 = vpack.c.b16 %v400, %v400
      %v417 = vpack.c.b16 %v401, %v401
      %v418 = vpack.c.b16 %v402, %v402
      %v419 = vpack.c.b16 %v403, %v403
      %v420 = vpack.c.b16 %v404, %v404
      %v421 = vpack.c.b16 %v405, %v405
      %v422 = vpack.c.b16 %v406, %v406
      %v423 = vpack.c.b16 %v407, %v407
      %v424 = vpack.c.b16 %v408, %v408
      %v425 = vpack.c.b16 %v409, %v409
      %442 = vst [vmem:[%s175 + $0x4] sm:$0xf] %v410
      %443 = vst [vmem:[%s175 + $0xc] sm:$0xf] %v411
      %444 = vst [vmem:[%s175 + $0x14] sm:$0xf] %v412
      %445 = vst [vmem:[%s175 + $0x1c] sm:$0xf] %v413
      %446 = vst [vmem:[%s175 + $0x24] sm:$0xf] %v414
      %447 = vst [vmem:[%s175 + $0x2c] sm:$0xf] %v415
      %448 = vst [vmem:[%s175 + $0x34] sm:$0xf] %v416
      %449 = vst [vmem:[%s175 + $0x3c] sm:$0xf] %v417
      %450 = vst [vmem:[%s175 + $0x44] sm:$0xf] %v418
      %451 = vst [vmem:[%s175 + $0x4c] sm:$0xf] %v419
      %452 = vst [vmem:[%s175 + $0x54] sm:$0xf] %v420
      %453 = vst [vmem:[%s175 + $0x5c] sm:$0xf] %v421
      %454 = vst [vmem:[%s175 + $0x64] sm:$0xf] %v422
      %455 = vst [vmem:[%s175 + $0x6c] sm:$0xf] %v423
      %456 = vst [vmem:[%s175 + $0x74] sm:$0xf] %v424
      %457 = vst [vmem:[%s175 + $0x7c] sm:$0xf] %v425
      %s458 = smul.u32 16, %s15
      %p459 = scmp.lt.s32.totalorder %s458, 31
      %s460 = scalar_select %p459, %s458, 31
      %s461 = smul.addr %s460, 2
      %s462 = smul.addr %s461, 4
      %s463 = scalar_lea.vmem %s3, %s462
      // Predicated region
      $region33: #{deeper_gcn_forward.8} parent=31 // pred_check
        %p464 = pneg %p101
      $region34: #{deeper_gcn_forward.8} parent=31 // pred_check_branch
        %466 = sbr.rel (%p464) target = $region36
      $region35: #{deeper_gcn_forward.8} parent=31 // pred_region
        %s467 = smul.u32 16, %s15
      $region36: #{deeper_gcn_forward.8} parent=31 // pred_fallthru
        _
    $region32: #{deeper_gcn_forward.8} parent=5 // pred_fallthru
      _
    %p468 = scmp.le.s32.totalorder 2, %s10
    // Predicated region
    $region37: #{deeper_gcn_forward.8} parent=5 // pred_check
      %p469 = pneg %p468
    $region38: #{deeper_gcn_forward.8} parent=5 // pred_check_branch
      %471 = sbr.rel (%p469) target = $region40
    $region39: #{deeper_gcn_forward.8} parent=5 // pred_region
      %s472 = ssub.s32 %s10, 2
      // Predicated region
      $region41: #{deeper_gcn_forward.8} parent=39 // pred_check
        %p473 = pneg %p107
      $region42: #{deeper_gcn_forward.8} parent=39 // pred_check_branch
        %475 = sbr.rel (%p473) target = $region44
      $region43: #{deeper_gcn_forward.8} parent=39 // pred_region
        %s476 = smul.u32 16, %s16
        %p477 = scmp.lt.s32.totalorder %s476, 31
        %s478 = scalar_select %p477, %s476, 31
        %s479 = smul.addr %s478, 2
        %s480 = smul.addr %s479, 4
        %s481 = scalar_lea.vmem %s3, %s480
      $region44: #{deeper_gcn_forward.8} parent=39 // pred_fallthru
        _
    $region40: #{deeper_gcn_forward.8} parent=5 // pred_fallthru
      _
  $region6: #{deeper_gcn_forward.8} parent=0 // loop_footer
    %s14 = sadd.s32 1, %s10
  $region7: #{deeper_gcn_forward.8} parent=0 // loop_footer_branch
    %9 = sbr.rel target = $region3
  $region8: #{deeper_gcn_forward.8} parent=0 // loop_exit
    _

// kernel: deeper_gcn_forward.13
$region0: #{deeper_gcn_forward.13}
  #allocation0 [shape = 'u32[]', space=smem, size = 0x4, offset = 0x4, fixed_abs, tag = 'smem constant byte address 0x4 - core index']
  #allocation1 [shape = 'u32[144,128]{1,0:T(1,128)}', space=vmem, size = 0x12000, scoped, tag = 'internal scratch']
  %s0 = inlined_call_operand.vmem [shape: f32[256,128], index: 0, kind: input, shape index: {}]
  %s1 = inlined_call_operand.vmem [shape: bf16[128,128], index: 1, kind: input, shape index: {}]
  %s2 = inlined_call_operand.vmem [shape: f32[1,128], index: 2, kind: input, shape index: {}]
  %s3 = inlined_call_operand.vmem [shape: f32[256,128], index: 3, kind: output, shape index: {}]
  %s4 = sld [smem:[#allocation0]]
  $region45: #{deeper_gcn_forward.13} parent=0
    _
  %s6 = ssub.s32 1, %s4
  %s7 = scalar_select 0, %s6, %s4
  loop: start=0, step=1, limit=4
  $region2: #{deeper_gcn_forward.13} parent=0 // loop_pre_header
    _
  $region3: #{deeper_gcn_forward.13} parent=0 // loop_header
    %s9 = sphi 0, %s13
    %p10 = scmp.ge.s32.totalorder %s9, 4
    %s19 = sphi 0, %s21
    %s22 = sphi 0, %s19
    %s23 = sphi 0, %s22
    %s39 = sphi 0, %s23
    %s43 = sphi 0, %s43
    %s45 = sphi 0, %s43
    %s46 = sphi 0, %s45
    %s60 = sphi 0, %s46
    %s64 = sphi 0, %s64
    %s66 = sphi 0, %s64
    %s67 = sphi 0, %s66
    %s81 = sphi 0, %s67
    %s87 = sphi 0, %s89
    %s90 = sphi 0, %s87
    %s91 = sphi 0, %s90
    %s107 = sphi 0, %s91
  $region4: #{deeper_gcn_forward.13} parent=0 // loop_header_branch
    %12 = sbr.rel (%p10) target = $region8
  $region5: #{deeper_gcn_forward.13} parent=0 // loop_body
    %s14 = ssub.s32 %s9, 1
    %s15 = ssub.s32 %s9, 2
    %s16 = sadd.s32 %s9, 1
    %s17 = ssub.s32 %s9, %s16
    %p18 = scmp.eq.s32.totalorder %s17, 0
    %s20 = sadd.s32 %s19, 1
    %s21 = scalar_select %p18, %s19, %s20
    %p24 = pneg %p18
    %p25 = scmp.eq.s32.totalorder %s9, 1
    %p26 = por %p24, %p25
    %p27 = scmp.ne.s32.totalorder %s19, %s22
    %p28 = scmp.eq.s32.totalorder %s9, 0
    %p29 = por %p27, %p28
    %p30 = scmp.ne.s32.totalorder %s19, %s22
    %p31 = scmp.eq.s32.totalorder %s14, 1
    %p32 = por %p30, %p31
    %p33 = scmp.ne.s32.totalorder %s22, %s23
    %p34 = scmp.eq.s32.totalorder %s14, 0
    %p35 = por %p33, %p34
    %p36 = scmp.ne.s32.totalorder %s22, %s23
    %p37 = scmp.eq.s32.totalorder %s15, 1
    %p38 = por %p36, %p37
    %p40 = scmp.ne.s32.totalorder %s23, %s39
    %p41 = scmp.eq.s32.totalorder %s15, 0
    %p42 = por %p40, %p41
    %s44 = sadd.s32 %s43, 1
    %p47 = scmp.eq.s32.totalorder %s9, 1
    %p48 = scmp.ne.s32.totalorder %s43, %s45
    %p49 = scmp.eq.s32.totalorder %s9, 0
    %p50 = por %p48, %p49
    %p51 = scmp.ne.s32.totalorder %s43, %s45
    %p52 = scmp.eq.s32.totalorder %s14, 1
    %p53 = por %p51, %p52
    %p54 = scmp.ne.s32.totalorder %s45, %s46
    %p55 = scmp.eq.s32.totalorder %s14, 0
    %p56 = por %p54, %p55
    %p57 = scmp.ne.s32.totalorder %s45, %s46
    %p58 = scmp.eq.s32.totalorder %s15, 1
    %p59 = por %p57, %p58
    %p61 = scmp.ne.s32.totalorder %s46, %s60
    %p62 = scmp.eq.s32.totalorder %s15, 0
    %p63 = por %p61, %p62
    %s65 = sadd.s32 %s64, 1
    %p68 = scmp.eq.s32.totalorder %s9, 1
    %p69 = scmp.ne.s32.totalorder %s64, %s66
    %p70 = scmp.eq.s32.totalorder %s9, 0
    %p71 = por %p69, %p70
    %p72 = scmp.ne.s32.totalorder %s64, %s66
    %p73 = scmp.eq.s32.totalorder %s14, 1
    %p74 = por %p72, %p73
    %p75 = scmp.ne.s32.totalorder %s66, %s67
    %p76 = scmp.eq.s32.totalorder %s14, 0
    %p77 = por %p75, %p76
    %p78 = scmp.ne.s32.totalorder %s66, %s67
    %p79 = scmp.eq.s32.totalorder %s15, 1
    %p80 = por %p78, %p79
    %p82 = scmp.ne.s32.totalorder %s67, %s81
    %p83 = scmp.eq.s32.totalorder %s15, 0
    %p84 = por %p82, %p83
    %s85 = ssub.s32 %s9, %s16
    %p86 = scmp.eq.s32.totalorder %s85, 0
    %s88 = sadd.s32 %s87, 1
    %s89 = scalar_select %p86, %s87, %s88
    %p92 = pneg %p86
    %p93 = scmp.eq.s32.totalorder %s9, 1
    %p94 = por %p92, %p93
    %p95 = scmp.ne.s32.totalorder %s87, %s90
    %p96 = scmp.eq.s32.totalorder %s9, 0
    %p97 = por %p95, %p96
    %p98 = scmp.ne.s32.totalorder %s87, %s90
    %p99 = scmp.eq.s32.totalorder %s14, 1
    %p100 = por %p98, %p99
    %p101 = scmp.ne.s32.totalorder %s90, %s91
    %p102 = scmp.eq.s32.totalorder %s14, 0
    %p103 = por %p101, %p102
    %p104 = scmp.ne.s32.totalorder %s90, %s91
    %p105 = scmp.eq.s32.totalorder %s15, 1
    %p106 = por %p104, %p105
    %p108 = scmp.ne.s32.totalorder %s91, %s107
    %p109 = scmp.eq.s32.totalorder %s15, 0
    %p110 = por %p108, %p109
    %p111 = scmp.le.s32.totalorder 1, %s9
    %p112 = scmp.lt.s32.totalorder %s9, 3
    %p113 = pnand %p111, %p112
    %p114 = pneg %p113
    // Predicated region
    $region9: #{deeper_gcn_forward.13} parent=5 // pred_check
      _
    $region10: #{deeper_gcn_forward.13} parent=5 // pred_check_branch
      %116 = sbr.rel (%p113) target = $region12
    $region11: #{deeper_gcn_forward.13} parent=5 // pred_region
      %s117 = ssub.s32 %s9, 1
      // Predicated region
      $region13: #{deeper_gcn_forward.13} parent=11 // pred_check
        %p118 = pneg %p56
      $region14: #{deeper_gcn_forward.13} parent=11 // pred_check_branch
        %120 = sbr.rel (%p118) target = $region16
      $region15: #{deeper_gcn_forward.13} parent=11 // pred_region
        _
      $region16: #{deeper_gcn_forward.13} parent=11 // pred_fallthru
        _
      // Predicated region
      $region17: #{deeper_gcn_forward.13} parent=11 // pred_check
        %p121 = pneg %p77
      $region18: #{deeper_gcn_forward.13} parent=11 // pred_check_branch
        %123 = sbr.rel (%p121) target = $region20
      $region19: #{deeper_gcn_forward.13} parent=11 // pred_region
        _
      $region20: #{deeper_gcn_forward.13} parent=11 // pred_fallthru
        _
    $region12: #{deeper_gcn_forward.13} parent=5 // pred_fallthru
      _
    %p124 = scmp.lt.s32.totalorder %s9, 2
    // Predicated region
    $region21: #{deeper_gcn_forward.13} parent=5 // pred_check
      %p125 = pneg %p124
    $region22: #{deeper_gcn_forward.13} parent=5 // pred_check_branch
      %127 = sbr.rel (%p125) target = $region24
    $region23: #{deeper_gcn_forward.13} parent=5 // pred_region
      // Predicated region
      $region25: #{deeper_gcn_forward.13} parent=23 // pred_check
        %p128 = pneg %p29
      $region26: #{deeper_gcn_forward.13} parent=23 // pred_check_branch
        %130 = sbr.rel (%p128) target = $region28
      $region27: #{deeper_gcn_forward.13} parent=23 // pred_region
        %s131 = smul.u32 16, %s9
        %p132 = scmp.lt.s32.totalorder %s131, 31
        %s133 = scalar_select %p132, %s131, 31
        %s134 = smul.addr %s133, 8
        %s135 = scalar_lea.vmem %s0, %s134
        %s136 = smul.u32 16, %s9
      $region28: #{deeper_gcn_forward.13} parent=23 // pred_fallthru
        _
    $region24: #{deeper_gcn_forward.13} parent=5 // pred_fallthru
      _
    %p137 = scmp.le.s32.totalorder 1, %s9
    %p138 = scmp.lt.s32.totalorder %s9, 3
    %p139 = pnand %p137, %p138
    %p140 = pneg %p139
    // Predicated region
    $region29: #{deeper_gcn_forward.13} parent=5 // pred_check
      _
    $region30: #{deeper_gcn_forward.13} parent=5 // pred_check_branch
      %142 = sbr.rel (%p139) target = $region32
    $region31: #{deeper_gcn_forward.13} parent=5 // pred_region
      %s143 = ssub.s32 %s9, 1
      %s144 = smul.u32 16, %s14
      %p145 = scmp.lt.s32.totalorder %s144, 31
      %s146 = scalar_select %p145, %s144, 31
      %s147 = smul.addr %s146, 8
      %s148 = scalar_lea.vmem %s0, %s147
      %p149 = pneg %p35
      %p150 = pneg %p32
      %p151 = pneg %p56
      %p152 = pneg %p53
      %p153 = pneg %p77
      %p154 = pneg %p74
      %p155 = pneg %p103
      %p156 = pneg %p100
      %s157 = smul.u32 16, %s14
      %p158 = scmp.lt.s32.totalorder %s157, 31
      %s159 = scalar_select %p158, %s157, 31
      %s160 = smul.addr %s159, 8
      %s161 = scalar_lea.vmem %s3, %s160
      %s162 = smul.u32 16, %s14
      %p163 = scmp.lt.s32.totalorder %s162, 31
      %s164 = scalar_select %p163, %s162, 31
      %s165 = smul.addr %s164, 8
      %s166 = scalar_lea.vmem %s0, %s165
      %s167 = smul.u32 16, %s14
      %s168 = smul.u32 16, %s14
      %p169 = scmp.lt.s32.totalorder %s168, 31
      %s170 = scalar_select %p169, %s168, 31
      %s171 = smul.addr %s170, 8
      %s172 = scalar_lea.vmem %s3, %s171
      %s173 = smul.u32 16, %s14
      %v175 = vld [vmem:[%s166] sm:$0xff]
      %v176 = vld [vmem:[%s166 + $0x8] sm:$0xff]
      %v177 = vld [vmem:[%s166 + $0x10] sm:$0xff]
      %v178 = vld [vmem:[%s166 + $0x18] sm:$0xff]
      %v179 = vld [vmem:[%s166 + $0x20] sm:$0xff]
      %v180 = vld [vmem:[%s166 + $0x28] sm:$0xff]
      %v181 = vld [vmem:[%s166 + $0x30] sm:$0xff]
      %v182 = vld [vmem:[%s166 + $0x38] sm:$0xff]
      %v183 = vld [vmem:[%s166 + $0x40] sm:$0xff]
      %v184 = vld [vmem:[%s166 + $0x48] sm:$0xff]
      %v185 = vld [vmem:[%s166 + $0x50] sm:$0xff]
      %v186 = vld [vmem:[%s166 + $0x58] sm:$0xff]
      %v187 = vld [vmem:[%s166 + $0x60] sm:$0xff]
      %v188 = vld [vmem:[%s166 + $0x68] sm:$0xff]
      %v189 = vld [vmem:[%s166 + $0x70] sm:$0xff]
      %v190 = vld [vmem:[%s166 + $0x78] sm:$0xff]
      %v191 = vpack.c.bf16 %v176, %v175
      %v192 = vpack.c.bf16 %v178, %v177
      %v193 = vpack.c.bf16 %v180, %v179
      %v194 = vpack.c.bf16 %v182, %v181
      %v195 = vpack.c.bf16 %v184, %v183
      %v196 = vpack.c.bf16 %v186, %v185
      %v197 = vpack.c.bf16 %v188, %v187
      %v198 = vpack.c.bf16 %v190, %v189
      %v199 = vld [vmem:[%s1] sm:$0xf]
      %v200 = vld [vmem:[%s1 + $0x4] sm:$0xf]
      %v201 = vld [vmem:[%s1 + $0x8] sm:$0xf]
      %v202 = vld [vmem:[%s1 + $0xc] sm:$0xf]
      %v203 = vld [vmem:[%s1 + $0x10] sm:$0xf]
      %v204 = vld [vmem:[%s1 + $0x14] sm:$0xf]
      %v205 = vld [vmem:[%s1 + $0x18] sm:$0xf]
      %v206 = vld [vmem:[%s1 + $0x1c] sm:$0xf]
      %v207 = vld [vmem:[%s1 + $0x20] sm:$0xf]
      %v208 = vld [vmem:[%s1 + $0x24] sm:$0xf]
      %v209 = vld [vmem:[%s1 + $0x28] sm:$0xf]
      %v210 = vld [vmem:[%s1 + $0x2c] sm:$0xf]
      %v211 = vld [vmem:[%s1 + $0x30] sm:$0xf]
      %v212 = vld [vmem:[%s1 + $0x34] sm:$0xf]
      %v213 = vld [vmem:[%s1 + $0x38] sm:$0xf]
      %v214 = vld [vmem:[%s1 + $0x3c] sm:$0xf]
      %v215 = vld [vmem:[%s2] sm:$0x1]
      %v217 = vlaneseq
      %v218 = vshrl.u32 %v217, 7
      %v219 = vsub.s32 0, %v218
      %v220 = vrot.slane %v215, %v219
      %v238 = vunpack.c.l.b16 %v199
      %v239 = vunpack.c.l.b16 %v200
      %v240 = vunpack.c.l.b16 %v201
      %v241 = vunpack.c.l.b16 %v202
      %v242 = vunpack.c.l.b16 %v203
      %v243 = vunpack.c.l.b16 %v204
      %v244 = vunpack.c.l.b16 %v205
      %v245 = vunpack.c.l.b16 %v206
      %v246 = vunpack.c.l.b16 %v207
      %v247 = vunpack.c.l.b16 %v208
      %v248 = vunpack.c.l.b16 %v209
      %v249 = vunpack.c.l.b16 %v210
      %v250 = vunpack.c.l.b16 %v211
      %v251 = vunpack.c.l.b16 %v212
      %v252 = vunpack.c.l.b16 %v213
      %v253 = vunpack.c.l.b16 %v214
      %v254 = vpack.c.b16 %v239, %v238
      %v255 = vpack.c.b16 %v241, %v240
      %v256 = vpack.c.b16 %v243, %v242
      %v257 = vpack.c.b16 %v245, %v244
      %v258 = vpack.c.b16 %v247, %v246
      %v259 = vpack.c.b16 %v249, %v248
      %v260 = vpack.c.b16 %v251, %v250
      %v261 = vpack.c.b16 %v253, %v252
      %270 = vmatprep.subr.bf16.mxu0 0
      %271 = vmatpush1.bf16.msra.mxu0 %v254
      %272 = vmatprep.subr.bf16.mxu0 0
      %273 = vmatpush1.bf16.msra.mxu0 %v255
      %274 = vmatprep.subr.bf16.mxu0 0
      %275 = vmatpush1.bf16.msra.mxu0 %v256
      %276 = vmatprep.subr.bf16.mxu0 0
      %277 = vmatpush1.bf16.msra.mxu0 %v257
      %278 = vmatprep.subr.bf16.mxu0 0
      %279 = vmatpush1.bf16.msra.mxu0 %v258
      %280 = vmatprep.subr.bf16.mxu0 0
      %281 = vmatpush1.bf16.msra.mxu0 %v259
      %282 = vmatprep.subr.bf16.mxu0 0
      %283 = vmatpush1.bf16.msra.mxu0 %v260
      %284 = vmatprep.subr.bf16.mxu0 0
      %285 = vmatpush1.bf16.msra.mxu0 %v261
      %286 = vmatprep.subr.bf16.mxu0 0
      %287 = vmatpush1.bf16.msra.mxu0 0
      %288 = vmatprep.subr.bf16.mxu0 0
      %289 = vmatpush1.bf16.msra.mxu0 0
      %290 = vmatprep.subr.bf16.mxu0 0
      %291 = vmatpush1.bf16.msra.mxu0 0
      %292 = vmatprep.subr.bf16.mxu0 0
      %293 = vmatpush1.bf16.msra.mxu0 0
      %294 = vmatprep.subr.bf16.mxu0 0
      %295 = vmatpush1.bf16.msra.mxu0 0
      %296 = vmatprep.subr.bf16.mxu0 0
      %297 = vmatpush1.bf16.msra.mxu0 0
      %298 = vmatprep.subr.bf16.mxu0 0
      %299 = vmatpush1.bf16.msra.mxu0 0
      %300 = vmatprep.subr.bf16.mxu0 0
      %301 = vmatpush1.bf16.msra.mxu0 0
      %302 = vmatprep.mubr.bf16.mxu0 0
      %303 = vmatmul.mubr.bf16.gmra.mrb[0].mxu0 %v191
      %v304 = vpop.f32.mrb[0].mxu0
      %v305 = vadd.f32 %v220, %v304
      %v306 = vpop.f32.mrb[0].mxu0
      %v307 = vpop.f32.mrb[0].mxu0
      %v308 = vadd.f32 %v220, %v307
      %v309 = vpop.f32.mrb[0].mxu0
      %310 = vmatprep.mubr.bf16.mxu0 0
      %311 = vmatmul.mubr.bf16.gmra.mrb[0].mxu0 %v192
      %v312 = vpop.f32.mrb[0].mxu0
      %v313 = vadd.f32 %v220, %v312
      %v314 = vpop.f32.mrb[0].mxu0
      %v315 = vpop.f32.mrb[0].mxu0
      %v316 = vadd.f32 %v220, %v315
      %v317 = vpop.f32.mrb[0].mxu0
      %318 = vmatprep.mubr.bf16.mxu0 0
      %319 = vmatmul.mubr.bf16.gmra.mrb[0].mxu0 %v193
      %v320 = vpop.f32.mrb[0].mxu0
      %v321 = vadd.f32 %v220, %v320
      %v322 = vpop.f32.mrb[0].mxu0
      %v323 = vpop.f32.mrb[0].mxu0
      %v324 = vadd.f32 %v220, %v323
      %v325 = vpop.f32.mrb[0].mxu0
      %326 = vmatprep.mubr.bf16.mxu0 0
      %327 = vmatmul.mubr.bf16.gmra.mrb[0].mxu0 %v194
      %v328 = vpop.f32.mrb[0].mxu0
      %v329 = vadd.f32 %v220, %v328
      %v330 = vpop.f32.mrb[0].mxu0
      %v331 = vpop.f32.mrb[0].mxu0
      %v332 = vadd.f32 %v220, %v331
      %v333 = vpop.f32.mrb[0].mxu0
      %334 = vmatprep.mubr.bf16.mxu0 0
      %335 = vmatmul.mubr.bf16.gmra.mrb[0].mxu0 %v195
      %v336 = vpop.f32.mrb[0].mxu0
      %v337 = vadd.f32 %v220, %v336
      %v338 = vpop.f32.mrb[0].mxu0
      %v339 = vpop.f32.mrb[0].mxu0
      %v340 = vadd.f32 %v220, %v339
      %v341 = vpop.f32.mrb[0].mxu0
      %342 = vmatprep.mubr.bf16.mxu0 0
      %343 = vmatmul.mubr.bf16.gmra.mrb[0].mxu0 %v196
      %v344 = vpop.f32.mrb[0].mxu0
      %v345 = vadd.f32 %v220, %v344
      %v346 = vpop.f32.mrb[0].mxu0
      %v347 = vpop.f32.mrb[0].mxu0
      %v348 = vadd.f32 %v220, %v347
      %v349 = vpop.f32.mrb[0].mxu0
      %350 = vmatprep.mubr.bf16.mxu0 0
      %351 = vmatmul.mubr.bf16.gmra.mrb[0].mxu0 %v197
      %v352 = vpop.f32.mrb[0].mxu0
      %v353 = vadd.f32 %v220, %v352
      %v354 = vpop.f32.mrb[0].mxu0
      %v355 = vpop.f32.mrb[0].mxu0
      %v356 = vadd.f32 %v220, %v355
      %v357 = vpop.f32.mrb[0].mxu0
      %358 = vmatprep.mubr.bf16.mxu0 0
      %359 = vmatmul.mubr.bf16.gmra.mrb[0].mxu0 %v198
      %v360 = vpop.f32.mrb[0].mxu0
      %v361 = vadd.f32 %v220, %v360
      %v362 = vpop.f32.mrb[0].mxu0
      %v363 = vpop.f32.mrb[0].mxu0
      %v364 = vadd.f32 %v220, %v363
      %v365 = vpop.f32.mrb[0].mxu0
      %366 = vdwg.mxu0
      %367 = vst [vmem:[%s172] sm:$0xff] %v305
      %368 = vst [vmem:[%s172 + $0x8] sm:$0xff] %v308
      %369 = vst [vmem:[%s172 + $0x10] sm:$0xff] %v313
      %370 = vst [vmem:[%s172 + $0x18] sm:$0xff] %v316
      %371 = vst [vmem:[%s172 + $0x20] sm:$0xff] %v321
      %372 = vst [vmem:[%s172 + $0x28] sm:$0xff] %v324
      %373 = vst [vmem:[%s172 + $0x30] sm:$0xff] %v329
      %374 = vst [vmem:[%s172 + $0x38] sm:$0xff] %v332
      %375 = vst [vmem:[%s172 + $0x40] sm:$0xff] %v337
      %376 = vst [vmem:[%s172 + $0x48] sm:$0xff] %v340
      %377 = vst [vmem:[%s172 + $0x50] sm:$0xff] %v345
      %378 = vst [vmem:[%s172 + $0x58] sm:$0xff] %v348
      %379 = vst [vmem:[%s172 + $0x60] sm:$0xff] %v353
      %380 = vst [vmem:[%s172 + $0x68] sm:$0xff] %v356
      %381 = vst [vmem:[%s172 + $0x70] sm:$0xff] %v361
      %382 = vst [vmem:[%s172 + $0x78] sm:$0xff] %v364
      %s383 = smul.u32 16, %s14
      %p384 = scmp.lt.s32.totalorder %s383, 31
      %s385 = scalar_select %p384, %s383, 31
      %s386 = smul.addr %s385, 8
      %s387 = scalar_lea.vmem %s3, %s386
      // Predicated region
      $region33: #{deeper_gcn_forward.13} parent=31 // pred_check
        %p388 = pneg %p100
      $region34: #{deeper_gcn_forward.13} parent=31 // pred_check_branch
        %390 = sbr.rel (%p388) target = $region36
      $region35: #{deeper_gcn_forward.13} parent=31 // pred_region
        %s391 = smul.u32 16, %s14
      $region36: #{deeper_gcn_forward.13} parent=31 // pred_fallthru
        _
    $region32: #{deeper_gcn_forward.13} parent=5 // pred_fallthru
      _
    %p392 = scmp.le.s32.totalorder 2, %s9
    // Predicated region
    $region37: #{deeper_gcn_forward.13} parent=5 // pred_check
      %p393 = pneg %p392
    $region38: #{deeper_gcn_forward.13} parent=5 // pred_check_branch
      %395 = sbr.rel (%p393) target = $region40
    $region39: #{deeper_gcn_forward.13} parent=5 // pred_region
      %s396 = ssub.s32 %s9, 2
      // Predicated region
      $region41: #{deeper_gcn_forward.13} parent=39 // pred_check
        %p397 = pneg %p106
      $region42: #{deeper_gcn_forward.13} parent=39 // pred_check_branch
        %399 = sbr.rel (%p397) target = $region44
      $region43: #{deeper_gcn_forward.13} parent=39 // pred_region
        %s400 = smul.u32 16, %s15
        %p401 = scmp.lt.s32.totalorder %s400, 31
        %s402 = scalar_select %p401, %s400, 31
        %s403 = smul.addr %s402, 8
        %s404 = scalar_lea.vmem %s3, %s403
      $region44: #{deeper_gcn_forward.13} parent=39 // pred_fallthru
        _
    $region40: #{deeper_gcn_forward.13} parent=5 // pred_fallthru
      _
  $region6: #{deeper_gcn_forward.13} parent=0 // loop_footer
    %s13 = sadd.s32 1, %s9
  $region7: #{deeper_gcn_forward.13} parent=0 // loop_footer_branch
    %8 = sbr.rel target = $region3
  $region8: #{deeper_gcn_forward.13} parent=0 // loop_exit
    _

// kernel: deeper_gcn_forward.9
$region0: #{deeper_gcn_forward.9}
  #allocation0 [shape = 'u32[]', space=smem, size = 0x4, offset = 0x4, fixed_abs, tag = 'smem constant byte address 0x4 - core index']
  #allocation1 [shape = 'u32[144,128]{1,0:T(1,128)}', space=vmem, size = 0x12000, scoped, tag = 'internal scratch']
  #allocation2 [shape = 'f32[128,256]{1,0:T(8,128)}', space=vmem, size = 0x20000, scoped, tag = 'scratch operand']
  %s0 = inlined_call_operand.vmem [shape: bf16[256,256], index: 0, kind: input, shape index: {}]
  %s1 = inlined_call_operand.vmem [shape: bf16[256,256], index: 1, kind: input, shape index: {}]
  %s2 = inlined_call_operand.vmem [shape: f32[256,128], index: 2, kind: input, shape index: {}]
  %s3 = inlined_call_operand.vmem [shape: f32[256,128], index: 3, kind: input, shape index: {}]
  %s4 = inlined_call_operand.vmem [shape: bf16[128,128], index: 4, kind: input, shape index: {}]
  %s5 = inlined_call_operand.vmem [shape: f32[1,128], index: 5, kind: input, shape index: {}]
  %s6 = inlined_call_operand.vmem [shape: f32[1,128], index: 6, kind: input, shape index: {}]
  %s7 = inlined_call_operand.vmem [shape: f32[1,128], index: 7, kind: input, shape index: {}]
  %s8 = inlined_call_operand.vmem [shape: bf16[128,128], index: 8, kind: input, shape index: {}]
  %s9 = inlined_call_operand.vmem [shape: f32[1,128], index: 9, kind: input, shape index: {}]
  %s10 = inlined_call_operand.vmem [shape: f32[256,128], index: 10, kind: output, shape index: {}]
  %s11 = sld [smem:[#allocation0]]
  $region122: #{deeper_gcn_forward.9} parent=0
    _
  %s13 = ssub.s32 1, %s11
  %s14 = scalar_select 0, %s13, %s11
  $region1: #{deeper_gcn_forward.9} parent=0
    #allocation3 [shape = 'u8[65536]{0}', space=vmem, size = 0x10000, scoped, tag = 'input window, operand 0']
    loop: start=0, step=1, limit=6
    $region2: #{deeper_gcn_forward.9} parent=1 // loop_pre_header
      _
    $region3: #{deeper_gcn_forward.9} parent=1 // loop_header
      %s16 = sphi 0, %s20
      %p17 = scmp.ge.s32.totalorder %s16, 6
      %s23 = sphi 0, %s35
      %s24 = sphi 0, %s31
      %s25 = sphi 0, %s23
      %s26 = sphi 0, %s24
      %s27 = sphi 0, %s25
      %s28 = sphi 0, %s26
      %s40 = sphi 0, %s42
      %s43 = sphi 0, %s40
      %s44 = sphi 0, %s43
      %s60 = sphi 0, %s44
      %s66 = sphi 0, %s68
      %s69 = sphi 0, %s66
      %s70 = sphi 0, %s69
      %s86 = sphi 0, %s70
      %s92 = sphi 0, %s94
      %s95 = sphi 0, %s92
      %s96 = sphi 0, %s95
      %s112 = sphi 0, %s96
      %s118 = sphi 0, %s120
      %s121 = sphi 0, %s118
      %s122 = sphi 0, %s121
      %s138 = sphi 0, %s122
      %s142 = sphi 0, %s142
      %s144 = sphi 0, %s142
      %s145 = sphi 0, %s144
      %s159 = sphi 0, %s145
      %s163 = sphi 0, %s163
      %s165 = sphi 0, %s163
      %s166 = sphi 0, %s165
      %s180 = sphi 0, %s166
      %s184 = sphi 0, %s184
      %s186 = sphi 0, %s184
      %s187 = sphi 0, %s186
      %s201 = sphi 0, %s187
      %s205 = sphi 0, %s205
      %s207 = sphi 0, %s205
      %s208 = sphi 0, %s207
      %s222 = sphi 0, %s208
      %s226 = sphi 0, %s226
      %s228 = sphi 0, %s226
      %s229 = sphi 0, %s228
      %s243 = sphi 0, %s229
      %s247 = sphi 0, %s247
      %s249 = sphi 0, %s247
      %s250 = sphi 0, %s249
      %s264 = sphi 0, %s250
      %s270 = sphi 0, %s272
      %s273 = sphi 0, %s270
      %s274 = sphi 0, %s273
      %s290 = sphi 0, %s274
    $region4: #{deeper_gcn_forward.9} parent=1 // loop_header_branch
      %19 = sbr.rel (%p17) target = $region8
    $region5: #{deeper_gcn_forward.9} parent=1 // loop_body
      %s21 = ssub.s32 %s16, 1
      %s22 = ssub.s32 %s16, 2
      %s29 = sadd.s32 1, %s24
      %p30 = scmp.ge.s32.totalorder %s29, 2
      %s31 = scalar_select %p30, 0, %s29
      %s32 = sadd.s32 1, %s23
      %s33 = scalar_select %p30, %s32, %s23
      %p34 = scmp.ge.s32.totalorder %s33, 2
      %s35 = scalar_select %p34, 0, %s33
      %s36 = ssub.s32 %s23, %s35
      %s37 = ssub.s32 %s24, %s31
      %s38 = sor.u32 %s36, %s37
      %p39 = scmp.eq.s32.totalorder %s38, 0
      %s41 = sadd.s32 %s40, 1
      %s42 = scalar_select %p39, %s40, %s41
      %p45 = pneg %p39
      %p46 = scmp.eq.s32.totalorder %s16, 3
      %p47 = por %p45, %p46
      %p48 = scmp.ne.s32.totalorder %s40, %s43
      %p49 = scmp.eq.s32.totalorder %s16, 0
      %p50 = por %p48, %p49
      %p51 = scmp.ne.s32.totalorder %s40, %s43
      %p52 = scmp.eq.s32.totalorder %s21, 3
      %p53 = por %p51, %p52
      %p54 = scmp.ne.s32.totalorder %s43, %s44
      %p55 = scmp.eq.s32.totalorder %s21, 0
      %p56 = por %p54, %p55
      %p57 = scmp.ne.s32.totalorder %s43, %s44
      %p58 = scmp.eq.s32.totalorder %s22, 3
      %p59 = por %p57, %p58
      %p61 = scmp.ne.s32.totalorder %s44, %s60
      %p62 = scmp.eq.s32.totalorder %s22, 0
      %p63 = por %p61, %p62
      %s64 = ssub.s32 %s24, %s31
      %p65 = scmp.eq.s32.totalorder %s64, 0
      %s67 = sadd.s32 %s66, 1
      %s68 = scalar_select %p65, %s66, %s67
      %p71 = pneg %p65
      %p72 = scmp.eq.s32.totalorder %s16, 3
      %p73 = por %p71, %p72
      %p74 = scmp.ne.s32.totalorder %s66, %s69
      %p75 = scmp.eq.s32.totalorder %s16, 0
      %p76 = por %p74, %p75
      %p77 = scmp.ne.s32.totalorder %s66, %s69
      %p78 = scmp.eq.s32.totalorder %s21, 3
      %p79 = por %p77, %p78
      %p80 = scmp.ne.s32.totalorder %s69, %s70
      %p81 = scmp.eq.s32.totalorder %s21, 0
      %p82 = por %p80, %p81
      %p83 = scmp.ne.s32.totalorder %s69, %s70
      %p84 = scmp.eq.s32.totalorder %s22, 3
      %p85 = por %p83, %p84
      %p87 = scmp.ne.s32.totalorder %s70, %s86
      %p88 = scmp.eq.s32.totalorder %s22, 0
      %p89 = por %p87, %p88
      %s90 = ssub.s32 %s23, %s35
      %p91 = scmp.eq.s32.totalorder %s90, 0
      %s93 = sadd.s32 %s92, 1
      %s94 = scalar_select %p91, %s92, %s93
      %p97 = pneg %p91
      %p98 = scmp.eq.s32.totalorder %s16, 3
      %p99 = por %p97, %p98
      %p100 = scmp.ne.s32.totalorder %s92, %s95
      %p101 = scmp.eq.s32.totalorder %s16, 0
      %p102 = por %p100, %p101
      %p103 = scmp.ne.s32.totalorder %s92, %s95
      %p104 = scmp.eq.s32.totalorder %s21, 3
      %p105 = por %p103, %p104
      %p106 = scmp.ne.s32.totalorder %s95, %s96
      %p107 = scmp.eq.s32.totalorder %s21, 0
      %p108 = por %p106, %p107
      %p109 = scmp.ne.s32.totalorder %s95, %s96
      %p110 = scmp.eq.s32.totalorder %s22, 3
      %p111 = por %p109, %p110
      %p113 = scmp.ne.s32.totalorder %s96, %s112
      %p114 = scmp.eq.s32.totalorder %s22, 0
      %p115 = por %p113, %p114
      %s116 = ssub.s32 %s23, %s35
      %p117 = scmp.eq.s32.totalorder %s116, 0
      %s119 = sadd.s32 %s118, 1
      %s120 = scalar_select %p117, %s118, %s119
      %p123 = pneg %p117
      %p124 = scmp.eq.s32.totalorder %s16, 3
      %p125 = por %p123, %p124
      %p126 = scmp.ne.s32.totalorder %s118, %s121
      %p127 = scmp.eq.s32.totalorder %s16, 0
      %p128 = por %p126, %p127
      %p129 = scmp.ne.s32.totalorder %s118, %s121
      %p130 = scmp.eq.s32.totalorder %s21, 3
      %p131 = por %p129, %p130
      %p132 = scmp.ne.s32.totalorder %s121, %s122
      %p133 = scmp.eq.s32.totalorder %s21, 0
      %p134 = por %p132, %p133
      %p135 = scmp.ne.s32.totalorder %s121, %s122
      %p136 = scmp.eq.s32.totalorder %s22, 3
      %p137 = por %p135, %p136
      %p139 = scmp.ne.s32.totalorder %s122, %s138
      %p140 = scmp.eq.s32.totalorder %s22, 0
      %p141 = por %p139, %p140
      %s143 = sadd.s32 %s142, 1
      %p146 = scmp.eq.s32.totalorder %s16, 3
      %p147 = scmp.ne.s32.totalorder %s142, %s144
      %p148 = scmp.eq.s32.totalorder %s16, 0
      %p149 = por %p147, %p148
      %p150 = scmp.ne.s32.totalorder %s142, %s144
      %p151 = scmp.eq.s32.totalorder %s21, 3
      %p152 = por %p150, %p151
      %p153 = scmp.ne.s32.totalorder %s144, %s145
      %p154 = scmp.eq.s32.totalorder %s21, 0
      %p155 = por %p153, %p154
      %p156 = scmp.ne.s32.totalorder %s144, %s145
      %p157 = scmp.eq.s32.totalorder %s22, 3
      %p158 = por %p156, %p157
      %p160 = scmp.ne.s32.totalorder %s145, %s159
      %p161 = scmp.eq.s32.totalorder %s22, 0
      %p162 = por %p160, %p161
      %s164 = sadd.s32 %s163, 1
      %p167 = scmp.eq.s32.totalorder %s16, 3
      %p168 = scmp.ne.s32.totalorder %s163, %s165
      %p169 = scmp.eq.s32.totalorder %s16, 0
      %p170 = por %p168, %p169
      %p171 = scmp.ne.s32.totalorder %s163, %s165
      %p172 = scmp.eq.s32.totalorder %s21, 3
      %p173 = por %p171, %p172
      %p174 = scmp.ne.s32.totalorder %s165, %s166
      %p175 = scmp.eq.s32.totalorder %s21, 0
      %p176 = por %p174, %p175
      %p177 = scmp.ne.s32.totalorder %s165, %s166
      %p178 = scmp.eq.s32.totalorder %s22, 3
      %p179 = por %p177, %p178
      %p181 = scmp.ne.s32.totalorder %s166, %s180
      %p182 = scmp.eq.s32.totalorder %s22, 0
      %p183 = por %p181, %p182
      %s185 = sadd.s32 %s184, 1
      %p188 = scmp.eq.s32.totalorder %s16, 3
      %p189 = scmp.ne.s32.totalorder %s184, %s186
      %p190 = scmp.eq.s32.totalorder %s16, 0
      %p191 = por %p189, %p190
      %p192 = scmp.ne.s32.totalorder %s184, %s186
      %p193 = scmp.eq.s32.totalorder %s21, 3
      %p194 = por %p192, %p193
      %p195 = scmp.ne.s32.totalorder %s186, %s187
      %p196 = scmp.eq.s32.totalorder %s21, 0
      %p197 = por %p195, %p196
      %p198 = scmp.ne.s32.totalorder %s186, %s187
      %p199 = scmp.eq.s32.totalorder %s22, 3
      %p200 = por %p198, %p199
      %p202 = scmp.ne.s32.totalorder %s187, %s201
      %p203 = scmp.eq.s32.totalorder %s22, 0
      %p204 = por %p202, %p203
      %s206 = sadd.s32 %s205, 1
      %p209 = scmp.eq.s32.totalorder %s16, 3
      %p210 = scmp.ne.s32.totalorder %s205, %s207
      %p211 = scmp.eq.s32.totalorder %s16, 0
      %p212 = por %p210, %p211
      %p213 = scmp.ne.s32.totalorder %s205, %s207
      %p214 = scmp.eq.s32.totalorder %s21, 3
      %p215 = por %p213, %p214
      %p216 = scmp.ne.s32.totalorder %s207, %s208
      %p217 = scmp.eq.s32.totalorder %s21, 0
      %p218 = por %p216, %p217
      %p219 = scmp.ne.s32.totalorder %s207, %s208
      %p220 = scmp.eq.s32.totalorder %s22, 3
      %p221 = por %p219, %p220
      %p223 = scmp.ne.s32.totalorder %s208, %s222
      %p224 = scmp.eq.s32.totalorder %s22, 0
      %p225 = por %p223, %p224
      %s227 = sadd.s32 %s226, 1
      %p230 = scmp.eq.s32.totalorder %s16, 3
      %p231 = scmp.ne.s32.totalorder %s226, %s228
      %p232 = scmp.eq.s32.totalorder %s16, 0
      %p233 = por %p231, %p232
      %p234 = scmp.ne.s32.totalorder %s226, %s228
      %p235 = scmp.eq.s32.totalorder %s21, 3
      %p236 = por %p234, %p235
      %p237 = scmp.ne.s32.totalorder %s228, %s229
      %p238 = scmp.eq.s32.totalorder %s21, 0
      %p239 = por %p237, %p238
      %p240 = scmp.ne.s32.totalorder %s228, %s229
      %p241 = scmp.eq.s32.totalorder %s22, 3
      %p242 = por %p240, %p241
      %p244 = scmp.ne.s32.totalorder %s229, %s243
      %p245 = scmp.eq.s32.totalorder %s22, 0
      %p246 = por %p244, %p245
      %s248 = sadd.s32 %s247, 1
      %p251 = scmp.eq.s32.totalorder %s16, 3
      %p252 = scmp.ne.s32.totalorder %s247, %s249
      %p253 = scmp.eq.s32.totalorder %s16, 0
      %p254 = por %p252, %p253
      %p255 = scmp.ne.s32.totalorder %s247, %s249
      %p256 = scmp.eq.s32.totalorder %s21, 3
      %p257 = por %p255, %p256
      %p258 = scmp.ne.s32.totalorder %s249, %s250
      %p259 = scmp.eq.s32.totalorder %s21, 0
      %p260 = por %p258, %p259
      %p261 = scmp.ne.s32.totalorder %s249, %s250
      %p262 = scmp.eq.s32.totalorder %s22, 3
      %p263 = por %p261, %p262
      %p265 = scmp.ne.s32.totalorder %s250, %s264
      %p266 = scmp.eq.s32.totalorder %s22, 0
      %p267 = por %p265, %p266
      %s268 = ssub.s32 %s23, %s35
      %p269 = scmp.eq.s32.totalorder %s268, 0
      %s271 = sadd.s32 %s270, 1
      %s272 = scalar_select %p269, %s270, %s271
      %p275 = pneg %p269
      %p276 = scmp.eq.s32.totalorder %s16, 3
      %p277 = por %p275, %p276
      %p278 = scmp.ne.s32.totalorder %s270, %s273
      %p279 = scmp.eq.s32.totalorder %s16, 0
      %p280 = por %p278, %p279
      %p281 = scmp.ne.s32.totalorder %s270, %s273
      %p282 = scmp.eq.s32.totalorder %s21, 3
      %p283 = por %p281, %p282
      %p284 = scmp.ne.s32.totalorder %s273, %s274
      %p285 = scmp.eq.s32.totalorder %s21, 0
      %p286 = por %p284, %p285
      %p287 = scmp.ne.s32.totalorder %s273, %s274
      %p288 = scmp.eq.s32.totalorder %s22, 3
      %p289 = por %p287, %p288
      %p291 = scmp.ne.s32.totalorder %s274, %s290
      %p292 = scmp.eq.s32.totalorder %s22, 0
      %p293 = por %p291, %p292
      %p294 = scmp.le.s32.totalorder 1, %s16
      %p295 = scmp.lt.s32.totalorder %s16, 5
      %p296 = pnand %p294, %p295
      %p297 = pneg %p296
      // Predicated region
      $region9: #{deeper_gcn_forward.9} parent=5 // pred_check
        _
      $region10: #{deeper_gcn_forward.9} parent=5 // pred_check_branch
        %299 = sbr.rel (%p296) target = $region12
      $region11: #{deeper_gcn_forward.9} parent=5 // pred_region
        %s300 = ssub.s32 %s16, 1
        // Predicated region
        $region13: #{deeper_gcn_forward.9} parent=11 // pred_check
          %p301 = pneg %p155
        $region14: #{deeper_gcn_forward.9} parent=11 // pred_check_branch
          %303 = sbr.rel (%p301) target = $region16
        $region15: #{deeper_gcn_forward.9} parent=11 // pred_region
          _
        $region16: #{deeper_gcn_forward.9} parent=11 // pred_fallthru
          _
        // Predicated region
        $region17: #{deeper_gcn_forward.9} parent=11 // pred_check
          %p304 = pneg %p176
        $region18: #{deeper_gcn_forward.9} parent=11 // pred_check_branch
          %306 = sbr.rel (%p304) target = $region20
        $region19: #{deeper_gcn_forward.9} parent=11 // pred_region
          _
        $region20: #{deeper_gcn_forward.9} parent=11 // pred_fallthru
          _
        // Predicated region
        $region21: #{deeper_gcn_forward.9} parent=11 // pred_check
          %p307 = pneg %p197
        $region22: #{deeper_gcn_forward.9} parent=11 // pred_check_branch
          %309 = sbr.rel (%p307) target = $region24
        $region23: #{deeper_gcn_forward.9} parent=11 // pred_region
          _
        $region24: #{deeper_gcn_forward.9} parent=11 // pred_fallthru
          _
        // Predicated region
        $region25: #{deeper_gcn_forward.9} parent=11 // pred_check
          %p310 = pneg %p218
        $region26: #{deeper_gcn_forward.9} parent=11 // pred_check_branch
          %312 = sbr.rel (%p310) target = $region28
        $region27: #{deeper_gcn_forward.9} parent=11 // pred_region
          _
        $region28: #{deeper_gcn_forward.9} parent=11 // pred_fallthru
          _
        // Predicated region
        $region29: #{deeper_gcn_forward.9} parent=11 // pred_check
          %p313 = pneg %p239
        $region30: #{deeper_gcn_forward.9} parent=11 // pred_check_branch
          %315 = sbr.rel (%p313) target = $region32
        $region31: #{deeper_gcn_forward.9} parent=11 // pred_region
          _
        $region32: #{deeper_gcn_forward.9} parent=11 // pred_fallthru
          _
        // Predicated region
        $region33: #{deeper_gcn_forward.9} parent=11 // pred_check
          %p316 = pneg %p260
        $region34: #{deeper_gcn_forward.9} parent=11 // pred_check_branch
          %318 = sbr.rel (%p316) target = $region36
        $region35: #{deeper_gcn_forward.9} parent=11 // pred_region
          _
        $region36: #{deeper_gcn_forward.9} parent=11 // pred_fallthru
          _
      $region12: #{deeper_gcn_forward.9} parent=5 // pred_fallthru
        _
      %p319 = scmp.lt.s32.totalorder %s16, 4
      // Predicated region
      $region37: #{deeper_gcn_forward.9} parent=5 // pred_check
        %p320 = pneg %p319
      $region38: #{deeper_gcn_forward.9} parent=5 // pred_check_branch
        %322 = sbr.rel (%p320) target = $region40
      $region39: #{deeper_gcn_forward.9} parent=5 // pred_region
        // Predicated region
        $region41: #{deeper_gcn_forward.9} parent=39 // pred_check
          %p323 = pneg %p50
        $region42: #{deeper_gcn_forward.9} parent=39 // pred_check_branch
          %325 = sbr.rel (%p323) target = $region44
        $region43: #{deeper_gcn_forward.9} parent=39 // pred_region
          %s326 = sand.u32 %s40, 1
          %s327 = sand.u32 %s40, 1
          %s328 = smul.addr %s327, 64
          %s329 = scalar_lea.vmem [#allocation3], %s328
          %s330 = smul.u32 16, %s23
          %s331 = smul.addr %s330, 2
          %s332 = sadd.s32 %s24, %s331
          %s333 = smul.addr %s332, 4
          %s334 = scalar_lea.vmem %s0, %s333
          // Predicated region
          $region45: #{deeper_gcn_forward.9} parent=43 // pred_check
            _
          $region46: #{deeper_gcn_forward.9} parent=43 // pred_check_branch
            %336 = sbr.rel (0) target = $region48
          $region47: #{deeper_gcn_forward.9} parent=43 // pred_region
            // Predicated region
            $region49: #{deeper_gcn_forward.9} parent=47 // pred_check
              _
            $region50: #{deeper_gcn_forward.9} parent=47 // pred_check_branch
              %338 = sbr.rel target = $region52
            $region51: #{deeper_gcn_forward.9} parent=47 // pred_region
              // Predicated region
              $region64: #{deeper_gcn_forward.9} parent=51 // pred_check
                _
              $region65: #{deeper_gcn_forward.9} parent=51 // pred_check_branch
                %383 = sbr.rel (0) target = $region67
              $region66: #{deeper_gcn_forward.9} parent=51 // pred_region
                loop: start=0, step=1, limit=1
                $region68: #{deeper_gcn_forward.9} parent=66 // loop_pre_header
                  _
                $region69: #{deeper_gcn_forward.9} parent=66 // loop_header
                  %s385 = sphi 0, %s389
                  %p386 = scmp.ge.s32.totalorder %s385, 1
                  %s390 = sphi %s334, %s334
                  %s391 = sphi %s329, %s329
                $region70: #{deeper_gcn_forward.9} parent=66 // loop_header_branch
                  %388 = sbr.rel (%p386) target = $region74
                $region71: #{deeper_gcn_forward.9} parent=66 // loop_body
                  _
                $region72: #{deeper_gcn_forward.9} parent=66 // loop_footer
                  %s389 = sadd.s32 1, %s385
                $region73: #{deeper_gcn_forward.9} parent=66 // loop_footer_branch
                  %384 = sbr.rel target = $region69
                $region74: #{deeper_gcn_forward.9} parent=66 // loop_exit
                  _
                loop: start=0, step=1, limit=1
                $region75: #{deeper_gcn_forward.9} parent=66 // loop_pre_header
                  _
                $region76: #{deeper_gcn_forward.9} parent=66 // loop_header
                  %s394 = sphi 0, %s398
                  %p395 = scmp.ge.s32.totalorder %s394, 1
                  %s399 = sphi %s334, %s334
                  %s400 = sphi %s329, %s329
                $region77: #{deeper_gcn_forward.9} parent=66 // loop_header_branch
                  %397 = sbr.rel (%p395) target = $region81
                $region78: #{deeper_gcn_forward.9} parent=66 // loop_body
                  %v401 = vld [vmem:[%s399] sm:$0xf]
                  %402 = vst [vmem:[%s400] sm:$0xf] %v401
                  %v403 = vld [vmem:[%s399 + $0x8] sm:$0xf]
                  %404 = vst [vmem:[%s400 + $0x4] sm:$0xf] %v403
                  %v405 = vld [vmem:[%s399 + $0x10] sm:$0xf]
                  %406 = vst [vmem:[%s400 + $0x8] sm:$0xf] %v405
                  %v407 = vld [vmem:[%s399 + $0x18] sm:$0xf]
                  %408 = vst [vmem:[%s400 + $0xc] sm:$0xf] %v407
                  %v409 = vld [vmem:[%s399 + $0x20] sm:$0xf]
                  %410 = vst [vmem:[%s400 + $0x10] sm:$0xf] %v409
                  %v411 = vld [vmem:[%s399 + $0x28] sm:$0xf]
                  %412 = vst [vmem:[%s400 + $0x14] sm:$0xf] %v411
                  %v413 = vld [vmem:[%s399 + $0x30] sm:$0xf]
                  %414 = vst [vmem:[%s400 + $0x18] sm:$0xf] %v413
                  %v415 = vld [vmem:[%s399 + $0x38] sm:$0xf]
                  %416 = vst [vmem:[%s400 + $0x1c] sm:$0xf] %v415
                  %v417 = vld [vmem:[%s399 + $0x40] sm:$0xf]
                  %418 = vst [vmem:[%s400 + $0x20] sm:$0xf] %v417
                  %v419 = vld [vmem:[%s399 + $0x48] sm:$0xf]
                  %420 = vst [vmem:[%s400 + $0x24] sm:$0xf] %v419
                  %v421 = vld [vmem:[%s399 + $0x50] sm:$0xf]
                  %422 = vst [vmem:[%s400 + $0x28] sm:$0xf] %v421
                  %v423 = vld [vmem:[%s399 + $0x58] sm:$0xf]
                  %424 = vst [vmem:[%s400 + $0x2c] sm:$0xf] %v423
                  %v425 = vld [vmem:[%s399 + $0x60] sm:$0xf]
                  %426 = vst [vmem:[%s400 + $0x30] sm:$0xf] %v425
                  %v427 = vld [vmem:[%s399 + $0x68] sm:$0xf]
                  %428 = vst [vmem:[%s400 + $0x34] sm:$0xf] %v427
                  %v429 = vld [vmem:[%s399 + $0x70] sm:$0xf]
                  %430 = vst [vmem:[%s400 + $0x38] sm:$0xf] %v429
                  %v431 = vld [vmem:[%s399 + $0x78] sm:$0xf]
                  %432 = vst [vmem:[%s400 + $0x3c] sm:$0xf] %v431
                $region79: #{deeper_gcn_forward.9} parent=66 // loop_footer
                  %s398 = sadd.s32 1, %s394
                $region80: #{deeper_gcn_forward.9} parent=66 // loop_footer_branch
                  %393 = sbr.rel target = $region76
                $region81: #{deeper_gcn_forward.9} parent=66 // loop_exit
                  _
              $region67: #{deeper_gcn_forward.9} parent=51 // pred_fallthru
                _
            $region52: #{deeper_gcn_forward.9} parent=47 // pred_fallthru
              _
            // Predicated region
            $region53: #{deeper_gcn_forward.9} parent=47 // pred_check
              _
            $region54: #{deeper_gcn_forward.9} parent=47 // pred_check_branch
              %340 = sbr.rel (0) target = $region56
            $region55: #{deeper_gcn_forward.9} parent=47 // pred_region
              loop: start=0, step=1, limit=1
              $region57: #{deeper_gcn_forward.9} parent=55 // loop_pre_header
                _
              $region58: #{deeper_gcn_forward.9} parent=55 // loop_header
                %s343 = sphi 0, %s347
                %p344 = scmp.ge.s32.totalorder %s343, 1
                %s348 = sphi %s334, %s334
                %s349 = sphi %s329, %s329
              $region59: #{deeper_gcn_forward.9} parent=55 // loop_header_branch
                %346 = sbr.rel (%p344) target = $region63
              $region60: #{deeper_gcn_forward.9} parent=55 // loop_body
                %v350 = vld [vmem:[%s348] sm:$0xf]
                %351 = vst [vmem:[%s349] sm:$0xf] %v350
                %v352 = vld [vmem:[%s348 + $0x8] sm:$0xf]
                %353 = vst [vmem:[%s349 + $0x4] sm:$0xf] %v352
                %v354 = vld [vmem:[%s348 + $0x10] sm:$0xf]
                %355 = vst [vmem:[%s349 + $0x8] sm:$0xf] %v354
                %v356 = vld [vmem:[%s348 + $0x18] sm:$0xf]
                %357 = vst [vmem:[%s349 + $0xc] sm:$0xf] %v356
                %v358 = vld [vmem:[%s348 + $0x20] sm:$0xf]
                %359 = vst [vmem:[%s349 + $0x10] sm:$0xf] %v358
                %v360 = vld [vmem:[%s348 + $0x28] sm:$0xf]
                %361 = vst [vmem:[%s349 + $0x14] sm:$0xf] %v360
                %v362 = vld [vmem:[%s348 + $0x30] sm:$0xf]
                %363 = vst [vmem:[%s349 + $0x18] sm:$0xf] %v362
                %v364 = vld [vmem:[%s348 + $0x38] sm:$0xf]
                %365 = vst [vmem:[%s349 + $0x1c] sm:$0xf] %v364
                %v366 = vld [vmem:[%s348 + $0x40] sm:$0xf]
                %367 = vst [vmem:[%s349 + $0x20] sm:$0xf] %v366
                %v368 = vld [vmem:[%s348 + $0x48] sm:$0xf]
                %369 = vst [vmem:[%s349 + $0x24] sm:$0xf] %v368
                %v370 = vld [vmem:[%s348 + $0x50] sm:$0xf]
                %371 = vst [vmem:[%s349 + $0x28] sm:$0xf] %v370
                %v372 = vld [vmem:[%s348 + $0x58] sm:$0xf]
                %373 = vst [vmem:[%s349 + $0x2c] sm:$0xf] %v372
                %v374 = vld [vmem:[%s348 + $0x60] sm:$0xf]
                %375 = vst [vmem:[%s349 + $0x30] sm:$0xf] %v374
                %v376 = vld [vmem:[%s348 + $0x68] sm:$0xf]
                %377 = vst [vmem:[%s349 + $0x34] sm:$0xf] %v376
                %v378 = vld [vmem:[%s348 + $0x70] sm:$0xf]
                %379 = vst [vmem:[%s349 + $0x38] sm:$0xf] %v378
                %v380 = vld [vmem:[%s348 + $0x78] sm:$0xf]
                %381 = vst [vmem:[%s349 + $0x3c] sm:$0xf] %v380
              $region61: #{deeper_gcn_forward.9} parent=55 // loop_footer
                %s347 = sadd.s32 1, %s343
              $region62: #{deeper_gcn_forward.9} parent=55 // loop_footer_branch
                %342 = sbr.rel target = $region58
              $region63: #{deeper_gcn_forward.9} parent=55 // loop_exit
                _
            $region56: #{deeper_gcn_forward.9} parent=47 // pred_fallthru
              _
          $region48: #{deeper_gcn_forward.9} parent=43 // pred_fallthru
            _
          %433 = vnop
        $region44: #{deeper_gcn_forward.9} parent=39 // pred_fallthru
          _
        // Predicated region
        $region82: #{deeper_gcn_forward.9} parent=39 // pred_check
          %p434 = pneg %p76
        $region83: #{deeper_gcn_forward.9} parent=39 // pred_check_branch
          %436 = sbr.rel (%p434) target = $region85
        $region84: #{deeper_gcn_forward.9} parent=39 // pred_region
          %s437 = smul.u32 16, %s24
          %p438 = scmp.lt.s32.totalorder %s437, 31
          %s439 = scalar_select %p438, %s437, 31
          %s440 = smul.addr %s439, 2
          %s441 = smul.addr %s440, 4
          %s442 = scalar_lea.vmem %s1, %s441
          %s443 = smul.u32 16, %s24
        $region85: #{deeper_gcn_forward.9} parent=39 // pred_fallthru
          _
        // Predicated region
        $region86: #{deeper_gcn_forward.9} parent=39 // pred_check
          %p444 = pneg %p102
        $region87: #{deeper_gcn_forward.9} parent=39 // pred_check_branch
          %446 = sbr.rel (%p444) target = $region89
        $region88: #{deeper_gcn_forward.9} parent=39 // pred_region
          %s447 = smul.u32 16, %s23
          %p448 = scmp.lt.s32.totalorder %s447, 31
          %s449 = scalar_select %p448, %s447, 31
          %s450 = smul.addr %s449, 8
          %s451 = scalar_lea.vmem %s2, %s450
          %s452 = smul.u32 16, %s23
        $region89: #{deeper_gcn_forward.9} parent=39 // pred_fallthru
          _
        // Predicated region
        $region90: #{deeper_gcn_forward.9} parent=39 // pred_check
          %p453 = pneg %p128
        $region91: #{deeper_gcn_forward.9} parent=39 // pred_check_branch
          %455 = sbr.rel (%p453) target = $region93
        $region92: #{deeper_gcn_forward.9} parent=39 // pred_region
          %s456 = smul.u32 16, %s23
          %p457 = scmp.lt.s32.totalorder %s456, 31
          %s458 = scalar_select %p457, %s456, 31
          %s459 = smul.addr %s458, 8
          %s460 = scalar_lea.vmem %s3, %s459
          %s461 = smul.u32 16, %s23
        $region93: #{deeper_gcn_forward.9} parent=39 // pred_fallthru
          _
      $region40: #{deeper_gcn_forward.9} parent=5 // pred_fallthru
        _
      %p462 = scmp.le.s32.totalorder 1, %s16
      %p463 = scmp.lt.s32.totalorder %s16, 5
      %p464 = pnand %p462, %p463
      %p465 = pneg %p464
      // Predicated region
      $region94: #{deeper_gcn_forward.9} parent=5 // pred_check
        _
      $region95: #{deeper_gcn_forward.9} parent=5 // pred_check_branch
        %467 = sbr.rel (%p464) target = $region97
      $region96: #{deeper_gcn_forward.9} parent=5 // pred_region
        %s468 = ssub.s32 %s16, 1
        %s469 = sand.u32 %s43, 1
        %s470 = sand.u32 %s43, 1
        %s471 = smul.addr %s470, 64
        %s472 = scalar_lea.vmem [#allocation3], %s471
        // Predicated region
        $region98: #{deeper_gcn_forward.9} parent=96 // pred_check
          %p473 = pneg %p56
        $region99: #{deeper_gcn_forward.9} parent=96 // pred_check_branch
          %475 = sbr.rel (%p473) target = $region101
        $region100: #{deeper_gcn_forward.9} parent=96 // pred_region
          _
        $region101: #{deeper_gcn_forward.9} parent=96 // pred_fallthru
          _
        %s476 = sand.u32 %s43, 1
        %s477 = sand.u32 %s43, 1
        %s478 = smul.addr %s477, 64
        %s479 = scalar_lea.vmem [#allocation3], %s478
        %p480 = pneg %p56
        %p481 = pneg %p53
        %s482 = smul.u32 16, %s26
        %p483 = scmp.lt.s32.totalorder %s482, 31
        %s484 = scalar_select %p483, %s482, 31
        %s485 = smul.addr %s484, 2
        %s486 = smul.addr %s485, 4
        %s487 = scalar_lea.vmem %s1, %s486
        %p488 = pneg %p82
        %p489 = pneg %p79
        %s490 = smul.u32 16, %s25
        %p491 = scmp.lt.s32.totalorder %s490, 31
        %s492 = scalar_select %p491, %s490, 31
        %s493 = smul.addr %s492, 8
        %s494 = scalar_lea.vmem %s2, %s493
        %p495 = pneg %p108
        %p496 = pneg %p105
        %s497 = smul.u32 16, %s25
        %p498 = scmp.lt.s32.totalorder %s497, 31
        %s499 = scalar_select %p498, %s497, 31
        %s500 = smul.addr %s499, 8
        %s501 = scalar_lea.vmem %s3, %s500
        %p502 = pneg %p134
        %p503 = pneg %p131
        %p504 = pneg %p155
        %p505 = pneg %p152
        %p506 = pneg %p176
        %p507 = pneg %p173
        %p508 = pneg %p197
        %p509 = pneg %p194
        %p510 = pneg %p218
        %p511 = pneg %p215
        %p512 = pneg %p239
        %p513 = pneg %p236
        %p514 = pneg %p260
        %p515 = pneg %p257
        %p516 = pneg %p286
        %p517 = pneg %p283
        %s518 = smul.u32 16, %s25
        %p519 = scmp.lt.s32.totalorder %s518, 31
        %s520 = scalar_select %p519, %s518, 31
        %s521 = smul.addr %s520, 8
        %s522 = scalar_lea.vmem %s10, %s521
        %s523 = smul.u32 16, %s25
        %s524 = smul.u32 16, %s26
        %p525 = scmp.lt.s32.totalorder %s524, 31
        %s526 = scalar_select %p525, %s524, 31
        %s527 = smul.addr %s526, 2
        %s528 = smul.addr %s527, 4
        %s529 = scalar_lea.vmem %s1, %s528
        %s530 = smul.u32 16, %s26
        %s531 = smul.u32 16, %s25
        %p532 = scmp.lt.s32.totalorder %s531, 31
        %s533 = scalar_select %p532, %s531, 31
        %s534 = smul.addr %s533, 8
        %s535 = scalar_lea.vmem %s2, %s534
        %s536 = smul.u32 16, %s25
        %s537 = smul.u32 16, %s25
        %p538 = scmp.lt.s32.totalorder %s537, 31
        %s539 = scalar_select %p538, %s537, 31
        %s540 = smul.addr %s539, 8
        %s541 = scalar_lea.vmem %s3, %s540
        %s542 = smul.u32 16, %s25
        %s543 = smul.u32 16, %s25
        %p544 = scmp.lt.s32.totalorder %s543, 31
        %s545 = scalar_select %p544, %s543, 31
        %s546 = smul.addr %s545, 8
        %s547 = scalar_lea.vmem %s10, %s546
        %s548 = smul.u32 16, %s25
        %p550 = scmp.eq.s32.totalorder %s26, 0
        // Predicated region
        $region102: #{deeper_gcn_forward.9} parent=96 // pred_check
          %p551 = pneg %p550
        $region103: #{deeper_gcn_forward.9} parent=96 // pred_check_branch
          %553 = sbr.rel (%p551) target = $region105
        $region104: #{deeper_gcn_forward.9} parent=96 // pred_region
          %554 = vst [vmem:[#allocation2] sm:$0xff] 0.0
          %555 = vst [vmem:[#allocation2 + $0x8] sm:$0xff] 0.0
          %556 = vst [vmem:[#allocation2 + $0x10] sm:$0xff] 0.0
          %557 = vst [vmem:[#allocation2 + $0x18] sm:$0xff] 0.0
          %558 = vst [vmem:[#allocation2 + $0x20] sm:$0xff] 0.0
          %559 = vst [vmem:[#allocation2 + $0x28] sm:$0xff] 0.0
          %560 = vst [vmem:[#allocation2 + $0x30] sm:$0xff] 0.0
          %561 = vst [vmem:[#allocation2 + $0x38] sm:$0xff] 0.0
          %562 = vst [vmem:[#allocation2 + $0x40] sm:$0xff] 0.0
          %563 = vst [vmem:[#allocation2 + $0x48] sm:$0xff] 0.0
          %564 = vst [vmem:[#allocation2 + $0x50] sm:$0xff] 0.0
          %565 = vst [vmem:[#allocation2 + $0x58] sm:$0xff] 0.0
          %566 = vst [vmem:[#allocation2 + $0x60] sm:$0xff] 0.0
          %567 = vst [vmem:[#allocation2 + $0x68] sm:$0xff] 0.0
          %568 = vst [vmem:[#allocation2 + $0x70] sm:$0xff] 0.0
          %569 = vst [vmem:[#allocation2 + $0x78] sm:$0xff] 0.0
          %570 = vst [vmem:[#allocation2 + $0x80] sm:$0xff] 0.0
          %571 = vst [vmem:[#allocation2 + $0x88] sm:$0xff] 0.0
          %572 = vst [vmem:[#allocation2 + $0x90] sm:$0xff] 0.0
          %573 = vst [vmem:[#allocation2 + $0x98] sm:$0xff] 0.0
          %574 = vst [vmem:[#allocation2 + $0xa0] sm:$0xff] 0.0
          %575 = vst [vmem:[#allocation2 + $0xa8] sm:$0xff] 0.0
          %576 = vst [vmem:[#allocation2 + $0xb0] sm:$0xff] 0.0
          %577 = vst [vmem:[#allocation2 + $0xb8] sm:$0xff] 0.0
          %578 = vst [vmem:[#allocation2 + $0xc0] sm:$0xff] 0.0
          %579 = vst [vmem:[#allocation2 + $0xc8] sm:$0xff] 0.0
          %580 = vst [vmem:[#allocation2 + $0xd0] sm:$0xff] 0.0
          %581 = vst [vmem:[#allocation2 + $0xd8] sm:$0xff] 0.0
          %582 = vst [vmem:[#allocation2 + $0xe0] sm:$0xff] 0.0
          %583 = vst [vmem:[#allocation2 + $0xe8] sm:$0xff] 0.0
          %584 = vst [vmem:[#allocation2 + $0xf0] sm:$0xff] 0.0
          %585 = vst [vmem:[#allocation2 + $0xf8] sm:$0xff] 0.0
        $region105: #{deeper_gcn_forward.9} parent=96 // pred_fallthru
          _
        %v586 = vld [vmem:[#allocation2] sm:$0xff]
        %v587 = vld [vmem:[#allocation2 + $0x8] sm:$0xff]
        %v588 = vld [vmem:[#allocation2 + $0x10] sm:$0xff]
        %v589 = vld [vmem:[#allocation2 + $0x18] sm:$0xff]
        %v590 = vld [vmem:[#allocation2 + $0x20] sm:$0xff]
        %v591 = vld [vmem:[#allocation2 + $0x28] sm:$0xff]
        %v592 = vld [vmem:[#allocation2 + $0x30] sm:$0xff]
        %v593 = vld [vmem:[#allocation2 + $0x38] sm:$0xff]
        %v594 = vld [vmem:[#allocation2 + $0x40] sm:$0xff]
        %v595 = vld [vmem:[#allocation2 + $0x48] sm:$0xff]
        %v596 = vld [vmem:[#allocation2 + $0x50] sm:$0xff]
        %v597 = vld [vmem:[#allocation2 + $0x58] sm:$0xff]
        %v598 = vld [vmem:[#allocation2 + $0x60] sm:$0xff]
        %v599 = vld [vmem:[#allocation2 + $0x68] sm:$0xff]
        %v600 = vld [vmem:[#allocation2 + $0x70] sm:$0xff]
        %v601 = vld [vmem:[#allocation2 + $0x78] sm:$0xff]
        %v602 = vld [vmem:[#allocation2 + $0x80] sm:$0xff]
        %v603 = vld [vmem:[#allocation2 + $0x88] sm:$0xff]
        %v604 = vld [vmem:[#allocation2 + $0x90] sm:$0xff]
        %v605 = vld [vmem:[#allocation2 + $0x98] sm:$0xff]
        %v606 = vld [vmem:[#allocation2 + $0xa0] sm:$0xff]
        %v607 = vld [vmem:[#allocation2 + $0xa8] sm:$0xff]
        %v608 = vld [vmem:[#allocation2 + $0xb0] sm:$0xff]
        %v609 = vld [vmem:[#allocation2 + $0xb8] sm:$0xff]
        %v610 = vld [vmem:[#allocation2 + $0xc0] sm:$0xff]
        %v611 = vld [vmem:[#allocation2 + $0xc8] sm:$0xff]
        %v612 = vld [vmem:[#allocation2 + $0xd0] sm:$0xff]
        %v613 = vld [vmem:[#allocation2 + $0xd8] sm:$0xff]
        %v614 = vld [vmem:[#allocation2 + $0xe0] sm:$0xff]
        %v615 = vld [vmem:[#allocation2 + $0xe8] sm:$0xff]
        %v616 = vld [vmem:[#allocation2 + $0xf0] sm:$0xff]
        %v617 = vld [vmem:[#allocation2 + $0xf8] sm:$0xff]
        %v618 = vld [vmem:[%s472] sm:$0xf]
        %v619 = vld [vmem:[%s472 + $0x4] sm:$0xf]
        %v620 = vld [vmem:[%s472 + $0x8] sm:$0xf]
        %v621 = vld [vmem:[%s472 + $0xc] sm:$0xf]
        %v622 = vld [vmem:[%s472 + $0x10] sm:$0xf]
        %v623 = vld [vmem:[%s472 + $0x14] sm:$0xf]
        %v624 = vld [vmem:[%s472 + $0x18] sm:$0xf]
        %v625 = vld [vmem:[%s472 + $0x1c] sm:$0xf]
        %v626 = vld [vmem:[%s472 + $0x20] sm:$0xf]
        %v627 = vld [vmem:[%s472 + $0x24] sm:$0xf]
        %v628 = vld [vmem:[%s472 + $0x28] sm:$0xf]
        %v629 = vld [vmem:[%s472 + $0x2c] sm:$0xf]
        %v630 = vld [vmem:[%s472 + $0x30] sm:$0xf]
        %v631 = vld [vmem:[%s472 + $0x34] sm:$0xf]
        %v632 = vld [vmem:[%s472 + $0x38] sm:$0xf]
        %v633 = vld [vmem:[%s472 + $0x3c] sm:$0xf]
        %v634 = vld [vmem:[%s529] sm:$0xff]
        %v635 = vld [vmem:[%s529 + $0x8] sm:$0xff]
        %v636 = vld [vmem:[%s529 + $0x10] sm:$0xff]
        %v637 = vld [vmem:[%s529 + $0x18] sm:$0xff]
        %v638 = vld [vmem:[%s529 + $0x20] sm:$0xff]
        %v639 = vld [vmem:[%s529 + $0x28] sm:$0xff]
        %v640 = vld [vmem:[%s529 + $0x30] sm:$0xff]
        %v641 = vld [vmem:[%s529 + $0x38] sm:$0xff]
        %v642 = vld [vmem:[%s529 + $0x40] sm:$0xff]
        %v643 = vld [vmem:[%s529 + $0x48] sm:$0xff]
        %v644 = vld [vmem:[%s529 + $0x50] sm:$0xff]
        %v645 = vld [vmem:[%s529 + $0x58] sm:$0xff]
        %v646 = vld [vmem:[%s529 + $0x60] sm:$0xff]
        %v647 = vld [vmem:[%s529 + $0x68] sm:$0xff]
        %v648 = vld [vmem:[%s529 + $0x70] sm:$0xff]
        %v649 = vld [vmem:[%s529 + $0x78] sm:$0xff]
        %v666 = vunpack.c.l.b16 %v618
        %v667 = vunpack.c.l.b16 %v619
        %v668 = vunpack.c.l.b16 %v620
        %v669 = vunpack.c.l.b16 %v621
        %v670 = vunpack.c.l.b16 %v622
        %v671 = vunpack.c.l.b16 %v623
        %v672 = vunpack.c.l.b16 %v624
        %v673 = vunpack.c.l.b16 %v625
        %v674 = vunpack.c.l.b16 %v626
        %v675 = vunpack.c.l.b16 %v627
        %v676 = vunpack.c.l.b16 %v628
        %v677 = vunpack.c.l.b16 %v629
        %v678 = vunpack.c.l.b16 %v630
        %v679 = vunpack.c.l.b16 %v631
        %v680 = vunpack.c.l.b16 %v632
        %v681 = vunpack.c.l.b16 %v633
        %v682 = vpack.c.b16 %v667, %v666
        %v683 = vpack.c.b16 %v669, %v668
        %v684 = vpack.c.b16 %v671, %v670
        %v685 = vpack.c.b16 %v673, %v672
        %v686 = vpack.c.b16 %v675, %v674
        %v687 = vpack.c.b16 %v677, %v676
        %v688 = vpack.c.b16 %v679, %v678
        %v689 = vpack.c.b16 %v681, %v680
        %v714 = vunpack.c.l.b16 %v634
        %v715 = vunpack.c.h.b16 %v634
        %v716 = vunpack.c.l.b16 %v635
        %v717 = vunpack.c.h.b16 %v635
        %v718 = vunpack.c.l.b16 %v636
        %v719 = vunpack.c.h.b16 %v636
        %v720 = vunpack.c.l.b16 %v637
        %v721 = vunpack.c.h.b16 %v637
        %v722 = vunpack.c.l.b16 %v638
        %v723 = vunpack.c.h.b16 %v638
        %v724 = vunpack.c.l.b16 %v639
        %v725 = vunpack.c.h.b16 %v639
        %v726 = vunpack.c.l.b16 %v640
        %v727 = vunpack.c.h.b16 %v640
        %v728 = vunpack.c.l.b16 %v641
        %v729 = vunpack.c.h.b16 %v641
        %v730 = vunpack.c.l.b16 %v642
        %v731 = vunpack.c.h.b16 %v642
        %v732 = vunpack.c.l.b16 %v643
        %v733 = vunpack.c.h.b16 %v643
        %v734 = vunpack.c.l.b16 %v644
        %v735 = vunpack.c.h.b16 %v644
        %v736 = vunpack.c.l.b16 %v645
        %v737 = vunpack.c.h.b16 %v645
        %v738 = vunpack.c.l.b16 %v646
        %v739 = vunpack.c.h.b16 %v646
        %v740 = vunpack.c.l.b16 %v647
        %v741 = vunpack.c.h.b16 %v647
        %v742 = vunpack.c.l.b16 %v648
        %v743 = vunpack.c.h.b16 %v648
        %v744 = vunpack.c.l.b16 %v649
        %v745 = vunpack.c.h.b16 %v649
        %v746 = vpack.c.b16 %v716, %v714
        %v747 = vpack.c.b16 %v717, %v715
        %v748 = vpack.c.b16 %v720, %v718
        %v749 = vpack.c.b16 %v721, %v719
        %v750 = vpack.c.b16 %v724, %v722
        %v751 = vpack.c.b16 %v725, %v723
        %v752 = vpack.c.b16 %v728, %v726
        %v753 = vpack.c.b16 %v729, %v727
        %v754 = vpack.c.b16 %v732, %v730
        %v755 = vpack.c.b16 %v733, %v731
        %v756 = vpack.c.b16 %v736, %v734
        %v757 = vpack.c.b16 %v737, %v735
        %v758 = vpack.c.b16 %v740, %v738
        %v759 = vpack.c.b16 %v741, %v739
        %v760 = vpack.c.b16 %v744, %v742
        %v761 = vpack.c.b16 %v745, %v743
        %778 = vmatprep.subr.bf16.mxu0 %v747
        %779 = vmatpush1.bf16.msra.mxu0 %v746
        %780 = vmatprep.subr.bf16.mxu0 %v749
        %781 = vmatpush1.bf16.msra.mxu0 %v748
        %782 = vmatprep.subr.bf16.mxu0 %v751
        %783 = vmatpush1.bf16.msra.mxu0 %v750
        %784 = vmatprep.subr.bf16.mxu0 %v753
        %785 = vmatpush1.bf16.msra.mxu0 %v752
        %786 = vmatprep.subr.bf16.mxu0 %v755
        %787 = vmatpush1.bf16.msra.mxu0 %v754
        %788 = vmatprep.subr.bf16.mxu0 %v757
        %789 = vmatpush1.bf16.msra.mxu0 %v756
        %790 = vmatprep.subr.bf16.mxu0 %v759
        %791 = vmatpush1.bf16.msra.mxu0 %v758
        %792 = vmatprep.subr.bf16.mxu0 %v761
        %793 = vmatpush1.bf16.msra.mxu0 %v760
        %794 = vmatprep.subr.bf16.mxu0 0
        %795 = vmatpush1.bf16.msra.mxu0 0
        %796 = vmatprep.subr.bf16.mxu0 0
        %797 = vmatpush1.bf16.msra.mxu0 0
        %798 = vmatprep.subr.bf16.mxu0 0
        %799 = vmatpush1.bf16.msra.mxu0 0
        %800 = vmatprep.subr.bf16.mxu0 0
        %801 = vmatpush1.bf16.msra.mxu0 0
        %802 = vmatprep.subr.bf16.mxu0 0
        %803 = vmatpush1.bf16.msra.mxu0 0
        %804 = vmatprep.subr.bf16.mxu0 0
        %805 = vmatpush1.bf16.msra.mxu0 0
        %806 = vmatprep.subr.bf16.mxu0 0
        %807 = vmatpush1.bf16.msra.mxu0 0
        %808 = vmatprep.subr.bf16.mxu0 0
        %809 = vmatpush1.bf16.msra.mxu0 0
        %810 = vmatprep.mubr.bf16.mxu0 0
        %811 = vmatmul.mubr.bf16.gmra.mrb[0].mxu0 %v682
        %v812 = vpop.f32.mrb[0].mxu0
        %v813 = vadd.f32 0.0, %v812
        %v814 = vpop.f32.mrb[0].mxu0
        %v815 = vadd.f32 0.0, %v814
        %v816 = vpop.f32.mrb[0].mxu0
        %v817 = vadd.f32 0.0, %v816
        %v818 = vpop.f32.mrb[0].mxu0
        %v819 = vadd.f32 0.0, %v818
        %820 = vmatprep.mubr.bf16.mxu0 0
        %821 = vmatmul.mubr.bf16.gmra.mrb[0].mxu0 %v683
        %v822 = vpop.f32.mrb[0].mxu0
        %v823 = vadd.f32 0.0, %v822
        %v824 = vpop.f32.mrb[0].mxu0
        %v825 = vadd.f32 0.0, %v824
        %v826 = vpop.f32.mrb[0].mxu0
        %v827 = vadd.f32 0.0, %v826
        %v828 = vpop.f32.mrb[0].mxu0
        %v829 = vadd.f32 0.0, %v828
        %830 = vmatprep.mubr.bf16.mxu0 0
        %831 = vmatmul.mubr.bf16.gmra.mrb[0].mxu0 %v684
        %v832 = vpop.f32.mrb[0].mxu0
        %v833 = vadd.f32 0.0, %v832
        %v834 = vpop.f32.mrb[0].mxu0
        %v835 = vadd.f32 0.0, %v834
        %v836 = vpop.f32.mrb[0].mxu0
        %v837 = vadd.f32 0.0, %v836
        %v838 = vpop.f32.mrb[0].mxu0
        %v839 = vadd.f32 0.0, %v838
        %840 = vmatprep.mubr.bf16.mxu0 0
        %841 = vmatmul.mubr.bf16.gmra.mrb[0].mxu0 %v685
        %v842 = vpop.f32.mrb[0].mxu0
        %v843 = vadd.f32 0.0, %v842
        %v844 = vpop.f32.mrb[0].mxu0
        %v845 = vadd.f32 0.0, %v844
        %v846 = vpop.f32.mrb[0].mxu0
        %v847 = vadd.f32 0.0, %v846
        %v848 = vpop.f32.mrb[0].mxu0
        %v849 = vadd.f32 0.0, %v848
        %850 = vmatprep.mubr.bf16.mxu0 0
        %851 = vmatmul.mubr.bf16.gmra.mrb[0].mxu0 %v686
        %v852 = vpop.f32.mrb[0].mxu0
        %v853 = vadd.f32 0.0, %v852
        %v854 = vpop.f32.mrb[0].mxu0
        %v855 = vadd.f32 0.0, %v854
        %v856 = vpop.f32.mrb[0].mxu0
        %v857 = vadd.f32 0.0, %v856
        %v858 = vpop.f32.mrb[0].mxu0
        %v859 = vadd.f32 0.0, %v858
        %860 = vmatprep.mubr.bf16.mxu0 0
        %861 = vmatmul.mubr.bf16.gmra.mrb[0].mxu0 %v687
        %v862 = vpop.f32.mrb[0].mxu0
        %v863 = vadd.f32 0.0, %v862
        %v864 = vpop.f32.mrb[0].mxu0
        %v865 = vadd.f32 0.0, %v864
        %v866 = vpop.f32.mrb[0].mxu0
        %v867 = vadd.f32 0.0, %v866
        %v868 = vpop.f32.mrb[0].mxu0
        %v869 = vadd.f32 0.0, %v868
        %870 = vmatprep.mubr.bf16.mxu0 0
        %871 = vmatmul.mubr.bf16.gmra.mrb[0].mxu0 %v688
        %v872 = vpop.f32.mrb[0].mxu0
        %v873 = vadd.f32 0.0, %v872
        %v874 = vpop.f32.mrb[0].mxu0
        %v875 = vadd.f32 0.0, %v874
        %v876 = vpop.f32.mrb[0].mxu0
        %v877 = vadd.f32 0.0, %v876
        %v878 = vpop.f32.mrb[0].mxu0
        %v879 = vadd.f32 0.0, %v878
        %880 = vmatprep.mubr.bf16.mxu0 0
        %881 = vmatmul.mubr.bf16.gmra.mrb[0].mxu0 %v689
        %v882 = vpop.f32.mrb[0].mxu0
        %v883 = vadd.f32 0.0, %v882
        %v884 = vpop.f32.mrb[0].mxu0
        %v885 = vadd.f32 0.0, %v884
        %v886 = vpop.f32.mrb[0].mxu0
        %v887 = vadd.f32 0.0, %v886
        %v888 = vpop.f32.mrb[0].mxu0
        %v889 = vadd.f32 0.0, %v888
        %890 = vdwg.mxu0
        %v891 = vadd.f32 %v586, %v813
        %v892 = vadd.f32 %v587, %v815
        %v893 = vadd.f32 %v588, %v817
        %v894 = vadd.f32 %v589, %v819
        %v895 = vadd.f32 %v590, %v823
        %v896 = vadd.f32 %v591, %v825
        %v897 = vadd.f32 %v592, %v827
        %v898 = vadd.f32 %v593, %v829
        %v899 = vadd.f32 %v594, %v833
        %v900 = vadd.f32 %v595, %v835
        %v901 = vadd.f32 %v596, %v837
        %v902 = vadd.f32 %v597, %v839
        %v903 = vadd.f32 %v598, %v843
        %v904 = vadd.f32 %v599, %v845
        %v905 = vadd.f32 %v600, %v847
        %v906 = vadd.f32 %v601, %v849
        %v907 = vadd.f32 %v602, %v853
        %v908 = vadd.f32 %v603, %v855
        %v909 = vadd.f32 %v604, %v857
        %v910 = vadd.f32 %v605, %v859
        %v911 = vadd.f32 %v606, %v863
        %v912 = vadd.f32 %v607, %v865
        %v913 = vadd.f32 %v608, %v867
        %v914 = vadd.f32 %v609, %v869
        %v915 = vadd.f32 %v610, %v873
        %v916 = vadd.f32 %v611, %v875
        %v917 = vadd.f32 %v612, %v877
        %v918 = vadd.f32 %v613, %v879
        %v919 = vadd.f32 %v614, %v883
        %v920 = vadd.f32 %v615, %v885
        %v921 = vadd.f32 %v616, %v887
        %v922 = vadd.f32 %v617, %v889
        %923 = vst [vmem:[#allocation2] sm:$0xff] %v891
        %924 = vst [vmem:[#allocation2 + $0x8] sm:$0xff] %v892
        %925 = vst [vmem:[#allocation2 + $0x10] sm:$0xff] %v893
        %926 = vst [vmem:[#allocation2 + $0x18] sm:$0xff] %v894
        %927 = vst [vmem:[#allocation2 + $0x20] sm:$0xff] %v895
        %928 = vst [vmem:[#allocation2 + $0x28] sm:$0xff] %v896
        %929 = vst [vmem:[#allocation2 + $0x30] sm:$0xff] %v897
        %930 = vst [vmem:[#allocation2 + $0x38] sm:$0xff] %v898
        %931 = vst [vmem:[#allocation2 + $0x40] sm:$0xff] %v899
        %932 = vst [vmem:[#allocation2 + $0x48] sm:$0xff] %v900
        %933 = vst [vmem:[#allocation2 + $0x50] sm:$0xff] %v901
        %934 = vst [vmem:[#allocation2 + $0x58] sm:$0xff] %v902
        %935 = vst [vmem:[#allocation2 + $0x60] sm:$0xff] %v903
        %936 = vst [vmem:[#allocation2 + $0x68] sm:$0xff] %v904
        %937 = vst [vmem:[#allocation2 + $0x70] sm:$0xff] %v905
        %938 = vst [vmem:[#allocation2 + $0x78] sm:$0xff] %v906
        %939 = vst [vmem:[#allocation2 + $0x80] sm:$0xff] %v907
        %940 = vst [vmem:[#allocation2 + $0x88] sm:$0xff] %v908
        %941 = vst [vmem:[#allocation2 + $0x90] sm:$0xff] %v909
        %942 = vst [vmem:[#allocation2 + $0x98] sm:$0xff] %v910
        %943 = vst [vmem:[#allocation2 + $0xa0] sm:$0xff] %v911
        %944 = vst [vmem:[#allocation2 + $0xa8] sm:$0xff] %v912
        %945 = vst [vmem:[#allocation2 + $0xb0] sm:$0xff] %v913
        %946 = vst [vmem:[#allocation2 + $0xb8] sm:$0xff] %v914
        %947 = vst [vmem:[#allocation2 + $0xc0] sm:$0xff] %v915
        %948 = vst [vmem:[#allocation2 + $0xc8] sm:$0xff] %v916
        %949 = vst [vmem:[#allocation2 + $0xd0] sm:$0xff] %v917
        %950 = vst [vmem:[#allocation2 + $0xd8] sm:$0xff] %v918
        %951 = vst [vmem:[#allocation2 + $0xe0] sm:$0xff] %v919
        %952 = vst [vmem:[#allocation2 + $0xe8] sm:$0xff] %v920
        %953 = vst [vmem:[#allocation2 + $0xf0] sm:$0xff] %v921
        %954 = vst [vmem:[#allocation2 + $0xf8] sm:$0xff] %v922
        %p955 = scmp.eq.s32.totalorder %s26, 1
        // Predicated region
        $region106: #{deeper_gcn_forward.9} parent=96 // pred_check
          %p956 = pneg %p955
        $region107: #{deeper_gcn_forward.9} parent=96 // pred_check_branch
          %958 = sbr.rel (%p956) target = $region109
        $region108: #{deeper_gcn_forward.9} parent=96 // pred_region
          %v959 = vld [vmem:[#allocation2] sm:$0xff]
          %v960 = vld [vmem:[#allocation2 + $0x10] sm:$0xff]
          %v961 = vld [vmem:[#allocation2 + $0x20] sm:$0xff]
          %v962 = vld [vmem:[#allocation2 + $0x30] sm:$0xff]
          %v963 = vld [vmem:[#allocation2 + $0x40] sm:$0xff]
          %v964 = vld [vmem:[#allocation2 + $0x50] sm:$0xff]
          %v965 = vld [vmem:[#allocation2 + $0x60] sm:$0xff]
          %v966 = vld [vmem:[#allocation2 + $0x70] sm:$0xff]
          %v967 = vld [vmem:[#allocation2 + $0x80] sm:$0xff]
          %v968 = vld [vmem:[#allocation2 + $0x90] sm:$0xff]
          %v969 = vld [vmem:[#allocation2 + $0xa0] sm:$0xff]
          %v970 = vld [vmem:[#allocation2 + $0xb0] sm:$0xff]
          %v971 = vld [vmem:[#allocation2 + $0xc0] sm:$0xff]
          %v972 = vld [vmem:[#allocation2 + $0xd0] sm:$0xff]
          %v973 = vld [vmem:[#allocation2 + $0xe0] sm:$0xff]
          %v974 = vld [vmem:[#allocation2 + $0xf0] sm:$0xff]
          %v975 = vld [vmem:[#allocation2 + $0x8] sm:$0xff]
          %v976 = vld [vmem:[#allocation2 + $0x18] sm:$0xff]
          %v977 = vld [vmem:[#allocation2 + $0x28] sm:$0xff]
          %v978 = vld [vmem:[#allocation2 + $0x38] sm:$0xff]
          %v979 = vld [vmem:[#allocation2 + $0x48] sm:$0xff]
          %v980 = vld [vmem:[#allocation2 + $0x58] sm:$0xff]
          %v981 = vld [vmem:[#allocation2 + $0x68] sm:$0xff]
          %v982 = vld [vmem:[#allocation2 + $0x78] sm:$0xff]
          %v983 = vld [vmem:[#allocation2 + $0x88] sm:$0xff]
          %v984 = vld [vmem:[#allocation2 + $0x98] sm:$0xff]
          %v985 = vld [vmem:[#allocation2 + $0xa8] sm:$0xff]
          %v986 = vld [vmem:[#allocation2 + $0xb8] sm:$0xff]
          %v987 = vld [vmem:[#allocation2 + $0xc8] sm:$0xff]
          %v988 = vld [vmem:[#allocation2 + $0xd8] sm:$0xff]
          %v989 = vld [vmem:[#allocation2 + $0xe8] sm:$0xff]
          %v990 = vld [vmem:[#allocation2 + $0xf8] sm:$0xff]
          %vm991 = vcmp.gt.f32.partialorder %v959, 0.0
          %vm992 = vcmp.gt.f32.partialorder %v960, 0.0
          %vm993 = vcmp.gt.f32.partialorder %v961, 0.0
          %vm994 = vcmp.gt.f32.partialorder %v962, 0.0
          %vm995 = vcmp.gt.f32.partialorder %v963, 0.0
          %vm996 = vcmp.gt.f32.partialorder %v964, 0.0
          %vm997 = vcmp.gt.f32.partialorder %v965, 0.0
          %vm998 = vcmp.gt.f32.partialorder %v966, 0.0
          %vm999 = vcmp.gt.f32.partialorder %v967, 0.0
          %vm1000 = vcmp.gt.f32.partialorder %v968, 0.0
          %vm1001 = vcmp.gt.f32.partialorder %v969, 0.0
          %vm1002 = vcmp.gt.f32.partialorder %v970, 0.0
          %vm1003 = vcmp.gt.f32.partialorder %v971, 0.0
          %vm1004 = vcmp.gt.f32.partialorder %v972, 0.0
          %vm1005 = vcmp.gt.f32.partialorder %v973, 0.0
          %vm1006 = vcmp.gt.f32.partialorder %v974, 0.0
          %v1007 = vrcp.pop %v959
          %v1008 = vmul.f32 %v975, %v1007
          %v1009 = vrcp.pop %v960
          %v1010 = vmul.f32 %v976, %v1009
          %v1011 = vrcp.pop %v961
          %v1012 = vmul.f32 %v977, %v1011
          %v1013 = vrcp.pop %v962
          %v1014 = vmul.f32 %v978, %v1013
          %v1015 = vrcp.pop %v963
          %v1016 = vmul.f32 %v979, %v1015
          %v1017 = vrcp.pop %v964
          %v1018 = vmul.f32 %v980, %v1017
          %v1019 = vrcp.pop %v965
          %v1020 = vmul.f32 %v981, %v1019
          %v1021 = vrcp.pop %v966
          %v1022 = vmul.f32 %v982, %v1021
          %v1023 = vrcp.pop %v967
          %v1024 = vmul.f32 %v983, %v1023
          %v1025 = vrcp.pop %v968
          %v1026 = vmul.f32 %v984, %v1025
          %v1027 = vrcp.pop %v969
          %v1028 = vmul.f32 %v985, %v1027
          %v1029 = vrcp.pop %v970
          %v1030 = vmul.f32 %v986, %v1029
          %v1031 = vrcp.pop %v971
          %v1032 = vmul.f32 %v987, %v1031
          %v1033 = vrcp.pop %v972
          %v1034 = vmul.f32 %v988, %v1033
          %v1035 = vrcp.pop %v973
          %v1036 = vmul.f32 %v989, %v1035
          %v1037 = vrcp.pop %v974
          %v1038 = vmul.f32 %v990, %v1037
          %v1039 = vsel %vm991, %v1008, 0.0
          %v1040 = vsel %vm992, %v1010, 0.0
          %v1041 = vsel %vm993, %v1012, 0.0
          %v1042 = vsel %vm994, %v1014, 0.0
          %v1043 = vsel %vm995, %v1016, 0.0
          %v1044 = vsel %vm996, %v1018, 0.0
          %v1045 = vsel %vm997, %v1020, 0.0
          %v1046 = vsel %vm998, %v1022, 0.0
          %v1047 = vsel %vm999, %v1024, 0.0
          %v1048 = vsel %vm1000, %v1026, 0.0
          %v1049 = vsel %vm1001, %v1028, 0.0
          %v1050 = vsel %vm1002, %v1030, 0.0
          %v1051 = vsel %vm1003, %v1032, 0.0
          %v1052 = vsel %vm1004, %v1034, 0.0
          %v1053 = vsel %vm1005, %v1036, 0.0
          %v1054 = vsel %vm1006, %v1038, 0.0
          %v1055 = vld [vmem:[%s535] sm:$0xff]
          %v1056 = vld [vmem:[%s535 + $0x8] sm:$0xff]
          %v1057 = vld [vmem:[%s535 + $0x10] sm:$0xff]
          %v1058 = vld [vmem:[%s535 + $0x18] sm:$0xff]
          %v1059 = vld [vmem:[%s535 + $0x20] sm:$0xff]
          %v1060 = vld [vmem:[%s535 + $0x28] sm:$0xff]
          %v1061 = vld [vmem:[%s535 + $0x30] sm:$0xff]
          %v1062 = vld [vmem:[%s535 + $0x38] sm:$0xff]
          %v1063 = vld [vmem:[%s535 + $0x40] sm:$0xff]
          %v1064 = vld [vmem:[%s535 + $0x48] sm:$0xff]
          %v1065 = vld [vmem:[%s535 + $0x50] sm:$0xff]
          %v1066 = vld [vmem:[%s535 + $0x58] sm:$0xff]
          %v1067 = vld [vmem:[%s535 + $0x60] sm:$0xff]
          %v1068 = vld [vmem:[%s535 + $0x68] sm:$0xff]
          %v1069 = vld [vmem:[%s535 + $0x70] sm:$0xff]
          %v1070 = vld [vmem:[%s535 + $0x78] sm:$0xff]
          %v1071 = vadd.f32 %v1039, %v1055
          %v1072 = vadd.f32 %v1040, %v1056
          %v1073 = vadd.f32 %v1041, %v1057
          %v1074 = vadd.f32 %v1042, %v1058
          %v1075 = vadd.f32 %v1043, %v1059
          %v1076 = vadd.f32 %v1044, %v1060
          %v1077 = vadd.f32 %v1045, %v1061
          %v1078 = vadd.f32 %v1046, %v1062
          %v1079 = vadd.f32 %v1047, %v1063
          %v1080 = vadd.f32 %v1048, %v1064
          %v1081 = vadd.f32 %v1049, %v1065
          %v1082 = vadd.f32 %v1050, %v1066
          %v1083 = vadd.f32 %v1051, %v1067
          %v1084 = vadd.f32 %v1052, %v1068
          %v1085 = vadd.f32 %v1053, %v1069
          %v1086 = vadd.f32 %v1054, %v1070
          %v1087 = vpack.c.bf16 %v1072, %v1071
          %v1088 = vpack.c.bf16 %v1074, %v1073
          %v1089 = vpack.c.bf16 %v1076, %v1075
          %v1090 = vpack.c.bf16 %v1078, %v1077
          %v1091 = vpack.c.bf16 %v1080, %v1079
          %v1092 = vpack.c.bf16 %v1082, %v1081
          %v1093 = vpack.c.bf16 %v1084, %v1083
          %v1094 = vpack.c.bf16 %v1086, %v1085
          %v1095 = vld [vmem:[%s4] sm:$0xf]
          %v1096 = vld [vmem:[%s4 + $0x4] sm:$0xf]
          %v1097 = vld [vmem:[%s4 + $0x8] sm:$0xf]
          %v1098 = vld [vmem:[%s4 + $0xc] sm:$0xf]
          %v1099 = vld [vmem:[%s4 + $0x10] sm:$0xf]
          %v1100 = vld [vmem:[%s4 + $0x14] sm:$0xf]
          %v1101 = vld [vmem:[%s4 + $0x18] sm:$0xf]
          %v1102 = vld [vmem:[%s4 + $0x1c] sm:$0xf]
          %v1103 = vld [vmem:[%s4 + $0x20] sm:$0xf]
          %v1104 = vld [vmem:[%s4 + $0x24] sm:$0xf]
          %v1105 = vld [vmem:[%s4 + $0x28] sm:$0xf]
          %v1106 = vld [vmem:[%s4 + $0x2c] sm:$0xf]
          %v1107 = vld [vmem:[%s4 + $0x30] sm:$0xf]
          %v1108 = vld [vmem:[%s4 + $0x34] sm:$0xf]
          %v1109 = vld [vmem:[%s4 + $0x38] sm:$0xf]
          %v1110 = vld [vmem:[%s4 + $0x3c] sm:$0xf]
          %v1111 = vld [vmem:[%s5] sm:$0x1]
          %v1113 = vlaneseq
          %v1114 = vshrl.u32 %v1113, 7
          %v1115 = vsub.s32 0, %v1114
          %v1116 = vrot.slane %v1111, %v1115
          %v1134 = vunpack.c.l.b16 %v1095
          %v1135 = vunpack.c.l.b16 %v1096
          %v1136 = vunpack.c.l.b16 %v1097
          %v1137 = vunpack.c.l.b16 %v1098
          %v1138 = vunpack.c.l.b16 %v1099
          %v1139 = vunpack.c.l.b16 %v1100
          %v1140 = vunpack.c.l.b16 %v1101
          %v1141 = vunpack.c.l.b16 %v1102
          %v1142 = vunpack.c.l.b16 %v1103
          %v1143 = vunpack.c.l.b16 %v1104
          %v1144 = vunpack.c.l.b16 %v1105
          %v1145 = vunpack.c.l.b16 %v1106
          %v1146 = vunpack.c.l.b16 %v1107
          %v1147 = vunpack.c.l.b16 %v1108
          %v1148 = vunpack.c.l.b16 %v1109
          %v1149 = vunpack.c.l.b16 %v1110
          %v1150 = vpack.c.b16 %v1135, %v1134
          %v1151 = vpack.c.b16 %v1137, %v1136
          %v1152 = vpack.c.b16 %v1139, %v1138
          %v1153 = vpack.c.b16 %v1141, %v1140
          %v1154 = vpack.c.b16 %v1143, %v1142
          %v1155 = vpack.c.b16 %v1145, %v1144
          %v1156 = vpack.c.b16 %v1147, %v1146
          %v1157 = vpack.c.b16 %v1149, %v1148
          %1166 = vmatprep.subr.bf16.mxu0 0
          %1167 = vmatpush1.bf16.msra.mxu0 %v1150
          %1168 = vmatprep.subr.bf16.mxu0 0
          %1169 = vmatpush1.bf16.msra.mxu0 %v1151
          %1170 = vmatprep.subr.bf16.mxu0 0
          %1171 = vmatpush1.bf16.msra.mxu0 %v1152
          %1172 = vmatprep.subr.bf16.mxu0 0
          %1173 = vmatpush1.bf16.msra.mxu0 %v1153
          %1174 = vmatprep.subr.bf16.mxu0 0
          %1175 = vmatpush1.bf16.msra.mxu0 %v1154
          %1176 = vmatprep.subr.bf16.mxu0 0
          %1177 = vmatpush1.bf16.msra.mxu0 %v1155
          %1178 = vmatprep.subr.bf16.mxu0 0
          %1179 = vmatpush1.bf16.msra.mxu0 %v1156
          %1180 = vmatprep.subr.bf16.mxu0 0
          %1181 = vmatpush1.bf16.msra.mxu0 %v1157
          %1182 = vmatprep.subr.bf16.mxu0 0
          %1183 = vmatpush1.bf16.msra.mxu0 0
          %1184 = vmatprep.subr.bf16.mxu0 0
          %1185 = vmatpush1.bf16.msra.mxu0 0
          %1186 = vmatprep.subr.bf16.mxu0 0
          %1187 = vmatpush1.bf16.msra.mxu0 0
          %1188 = vmatprep.subr.bf16.mxu0 0
          %1189 = vmatpush1.bf16.msra.mxu0 0
          %1190 = vmatprep.subr.bf16.mxu0 0
          %1191 = vmatpush1.bf16.msra.mxu0 0
          %1192 = vmatprep.subr.bf16.mxu0 0
          %1193 = vmatpush1.bf16.msra.mxu0 0
          %1194 = vmatprep.subr.bf16.mxu0 0
          %1195 = vmatpush1.bf16.msra.mxu0 0
          %1196 = vmatprep.subr.bf16.mxu0 0
          %1197 = vmatpush1.bf16.msra.mxu0 0
          %1198 = vmatprep.mubr.bf16.mxu0 0
          %1199 = vmatmul.mubr.bf16.gmra.mrb[0].mxu0 %v1087
          %v1200 = vpop.f32.mrb[0].mxu0
          %v1201 = vadd.f32 %v1116, %v1200
          %v1202 = vpop.f32.mrb[0].mxu0
          %v1203 = vpop.f32.mrb[0].mxu0
          %v1204 = vadd.f32 %v1116, %v1203
          %v1205 = vpop.f32.mrb[0].mxu0
          %1206 = vmatprep.mubr.bf16.mxu0 0
          %1207 = vmatmul.mubr.bf16.gmra.mrb[0].mxu0 %v1088
          %v1208 = vpop.f32.mrb[0].mxu0
          %v1209 = vadd.f32 %v1116, %v1208
          %v1210 = vpop.f32.mrb[0].mxu0
          %v1211 = vpop.f32.mrb[0].mxu0
          %v1212 = vadd.f32 %v1116, %v1211
          %v1213 = vpop.f32.mrb[0].mxu0
          %1214 = vmatprep.mubr.bf16.mxu0 0
          %1215 = vmatmul.mubr.bf16.gmra.mrb[0].mxu0 %v1089
          %v1216 = vpop.f32.mrb[0].mxu0
          %v1217 = vadd.f32 %v1116, %v1216
          %v1218 = vpop.f32.mrb[0].mxu0
          %v1219 = vpop.f32.mrb[0].mxu0
          %v1220 = vadd.f32 %v1116, %v1219
          %v1221 = vpop.f32.mrb[0].mxu0
          %1222 = vmatprep.mubr.bf16.mxu0 0
          %1223 = vmatmul.mubr.bf16.gmra.mrb[0].mxu0 %v1090
          %v1224 = vpop.f32.mrb[0].mxu0
          %v1225 = vadd.f32 %v1116, %v1224
          %v1226 = vpop.f32.mrb[0].mxu0
          %v1227 = vpop.f32.mrb[0].mxu0
          %v1228 = vadd.f32 %v1116, %v1227
          %v1229 = vpop.f32.mrb[0].mxu0
          %1230 = vmatprep.mubr.bf16.mxu0 0
          %1231 = vmatmul.mubr.bf16.gmra.mrb[0].mxu0 %v1091
          %v1232 = vpop.f32.mrb[0].mxu0
          %v1233 = vadd.f32 %v1116, %v1232
          %v1234 = vpop.f32.mrb[0].mxu0
          %v1235 = vpop.f32.mrb[0].mxu0
          %v1236 = vadd.f32 %v1116, %v1235
          %v1237 = vpop.f32.mrb[0].mxu0
          %1238 = vmatprep.mubr.bf16.mxu0 0
          %1239 = vmatmul.mubr.bf16.gmra.mrb[0].mxu0 %v1092
          %v1240 = vpop.f32.mrb[0].mxu0
          %v1241 = vadd.f32 %v1116, %v1240
          %v1242 = vpop.f32.mrb[0].mxu0
          %v1243 = vpop.f32.mrb[0].mxu0
          %v1244 = vadd.f32 %v1116, %v1243
          %v1245 = vpop.f32.mrb[0].mxu0
          %1246 = vmatprep.mubr.bf16.mxu0 0
          %1247 = vmatmul.mubr.bf16.gmra.mrb[0].mxu0 %v1093
          %v1248 = vpop.f32.mrb[0].mxu0
          %v1249 = vadd.f32 %v1116, %v1248
          %v1250 = vpop.f32.mrb[0].mxu0
          %v1251 = vpop.f32.mrb[0].mxu0
          %v1252 = vadd.f32 %v1116, %v1251
          %v1253 = vpop.f32.mrb[0].mxu0
          %1254 = vmatprep.mubr.bf16.mxu0 0
          %1255 = vmatmul.mubr.bf16.gmra.mrb[0].mxu0 %v1094
          %v1256 = vpop.f32.mrb[0].mxu0
          %v1257 = vadd.f32 %v1116, %v1256
          %v1258 = vpop.f32.mrb[0].mxu0
          %v1259 = vpop.f32.mrb[0].mxu0
          %v1260 = vadd.f32 %v1116, %v1259
          %v1261 = vpop.f32.mrb[0].mxu0
          %1262 = vdwg.mxu0
          %1263 = vadd.xlane.f32.xlu0 %v1201
          %v1264 = vpop.xlane.xlu0 %1263
          %1265 = vadd.xlane.f32.xlu0 %v1204
          %v1266 = vpop.xlane.xlu0 %1265
          %1267 = vadd.xlane.f32.xlu0 %v1209
          %v1268 = vpop.xlane.xlu0 %1267
          %1269 = vadd.xlane.f32.xlu0 %v1212
          %v1270 = vpop.xlane.xlu0 %1269
          %1271 = vadd.xlane.f32.xlu0 %v1217
          %v1272 = vpop.xlane.xlu0 %1271
          %1273 = vadd.xlane.f32.xlu0 %v1220
          %v1274 = vpop.xlane.xlu0 %1273
          %1275 = vadd.xlane.f32.xlu0 %v1225
          %v1276 = vpop.xlane.xlu0 %1275
          %1277 = vadd.xlane.f32.xlu0 %v1228
          %v1278 = vpop.xlane.xlu0 %1277
          %1279 = vadd.xlane.f32.xlu0 %v1233
          %v1280 = vpop.xlane.xlu0 %1279
          %1281 = vadd.xlane.f32.xlu0 %v1236
          %v1282 = vpop.xlane.xlu0 %1281
          %1283 = vadd.xlane.f32.xlu0 %v1241
          %v1284 = vpop.xlane.xlu0 %1283
          %1285 = vadd.xlane.f32.xlu0 %v1244
          %v1286 = vpop.xlane.xlu0 %1285
          %1287 = vadd.xlane.f32.xlu0 %v1249
          %v1288 = vpop.xlane.xlu0 %1287
          %1289 = vadd.xlane.f32.xlu0 %v1252
          %v1290 = vpop.xlane.xlu0 %1289
          %1291 = vadd.xlane.f32.xlu0 %v1257
          %v1292 = vpop.xlane.xlu0 %1291
          %1293 = vadd.xlane.f32.xlu0 %v1260
          %v1294 = vpop.xlane.xlu0 %1293
          %v1295 = vmul.f32 %v1264, 0.015625
          %v1296 = vmul.f32 %v1266, 0.015625
          %v1297 = vmul.f32 %v1268, 0.015625
          %v1298 = vmul.f32 %v1270, 0.015625
          %v1299 = vmul.f32 %v1272, 0.015625
          %v1300 = vmul.f32 %v1274, 0.015625
          %v1301 = vmul.f32 %v1276, 0.015625
          %v1302 = vmul.f32 %v1278, 0.015625
          %v1303 = vmul.f32 %v1280, 0.015625
          %v1304 = vmul.f32 %v1282, 0.015625
          %v1305 = vmul.f32 %v1284, 0.015625
          %v1306 = vmul.f32 %v1286, 0.015625
          %v1307 = vmul.f32 %v1288, 0.015625
          %v1308 = vmul.f32 %v1290, 0.015625
          %v1309 = vmul.f32 %v1292, 0.015625
          %v1310 = vmul.f32 %v1294, 0.015625
          %v1311 = vmul.f32 %v1201, %v1201
          %v1312 = vmul.f32 %v1204, %v1204
          %v1313 = vmul.f32 %v1209, %v1209
          %v1314 = vmul.f32 %v1212, %v1212
          %v1315 = vmul.f32 %v1217, %v1217
          %v1316 = vmul.f32 %v1220, %v1220
          %v1317 = vmul.f32 %v1225, %v1225
          %v1318 = vmul.f32 %v1228, %v1228
          %v1319 = vmul.f32 %v1233, %v1233
          %v1320 = vmul.f32 %v1236, %v1236
          %v1321 = vmul.f32 %v1241, %v1241
          %v1322 = vmul.f32 %v1244, %v1244
          %v1323 = vmul.f32 %v1249, %v1249
          %v1324 = vmul.f32 %v1252, %v1252
          %v1325 = vmul.f32 %v1257, %v1257
          %v1326 = vmul.f32 %v1260, %v1260
          %1327 = vadd.xlane.f32.xlu0 %v1311
          %v1328 = vpop.xlane.xlu0 %1327
          %1329 = vadd.xlane.f32.xlu0 %v1312
          %v1330 = vpop.xlane.xlu0 %1329
          %1331 = vadd.xlane.f32.xlu0 %v1313
          %v1332 = vpop.xlane.xlu0 %1331
          %1333 = vadd.xlane.f32.xlu0 %v1314
          %v1334 = vpop.xlane.xlu0 %1333
          %1335 = vadd.xlane.f32.xlu0 %v1315
          %v1336 = vpop.xlane.xlu0 %1335
          %1337 = vadd.xlane.f32.xlu0 %v1316
          %v1338 = vpop.xlane.xlu0 %1337
          %1339 = vadd.xlane.f32.xlu0 %v1317
          %v1340 = vpop.xlane.xlu0 %1339
          %1341 = vadd.xlane.f32.xlu0 %v1318
          %v1342 = vpop.xlane.xlu0 %1341
          %1343 = vadd.xlane.f32.xlu0 %v1319
          %v1344 = vpop.xlane.xlu0 %1343
          %1345 = vadd.xlane.f32.xlu0 %v1320
          %v1346 = vpop.xlane.xlu0 %1345
          %1347 = vadd.xlane.f32.xlu0 %v1321
          %v1348 = vpop.xlane.xlu0 %1347
          %1349 = vadd.xlane.f32.xlu0 %v1322
          %v1350 = vpop.xlane.xlu0 %1349
          %1351 = vadd.xlane.f32.xlu0 %v1323
          %v1352 = vpop.xlane.xlu0 %1351
          %1353 = vadd.xlane.f32.xlu0 %v1324
          %v1354 = vpop.xlane.xlu0 %1353
          %1355 = vadd.xlane.f32.xlu0 %v1325
          %v1356 = vpop.xlane.xlu0 %1355
          %1357 = vadd.xlane.f32.xlu0 %v1326
          %v1358 = vpop.xlane.xlu0 %1357
          %v1359 = vmul.f32 %v1328, 0.015625
          %v1360 = vmul.f32 %v1330, 0.015625
          %v1361 = vmul.f32 %v1332, 0.015625
          %v1362 = vmul.f32 %v1334, 0.015625
          %v1363 = vmul.f32 %v1336, 0.015625
          %v1364 = vmul.f32 %v1338, 0.015625
          %v1365 = vmul.f32 %v1340, 0.015625
          %v1366 = vmul.f32 %v1342, 0.015625
          %v1367 = vmul.f32 %v1344, 0.015625
          %v1368 = vmul.f32 %v1346, 0.015625
          %v1369 = vmul.f32 %v1348, 0.015625
          %v1370 = vmul.f32 %v1350, 0.015625
          %v1371 = vmul.f32 %v1352, 0.015625
          %v1372 = vmul.f32 %v1354, 0.015625
          %v1373 = vmul.f32 %v1356, 0.015625
          %v1374 = vmul.f32 %v1358, 0.015625
          %v1375 = vmul.f32 %v1295, %v1295
          %v1376 = vmul.f32 %v1296, %v1296
          %v1377 = vmul.f32 %v1297, %v1297
          %v1378 = vmul.f32 %v1298, %v1298
          %v1379 = vmul.f32 %v1299, %v1299
          %v1380 = vmul.f32 %v1300, %v1300
          %v1381 = vmul.f32 %v1301, %v1301
          %v1382 = vmul.f32 %v1302, %v1302
          %v1383 = vmul.f32 %v1303, %v1303
          %v1384 = vmul.f32 %v1304, %v1304
          %v1385 = vmul.f32 %v1305, %v1305
          %v1386 = vmul.f32 %v1306, %v1306
          %v1387 = vmul.f32 %v1307, %v1307
          %v1388 = vmul.f32 %v1308, %v1308
          %v1389 = vmul.f32 %v1309, %v1309
          %v1390 = vmul.f32 %v1310, %v1310
          %v1391 = vsub.f32 %v1359, %v1375
          %v1392 = vsub.f32 %v1360, %v1376
          %v1393 = vsub.f32 %v1361, %v1377
          %v1394 = vsub.f32 %v1362, %v1378
          %v1395 = vsub.f32 %v1363, %v1379
          %v1396 = vsub.f32 %v1364, %v1380
          %v1397 = vsub.f32 %v1365, %v1381
          %v1398 = vsub.f32 %v1366, %v1382
          %v1399 = vsub.f32 %v1367, %v1383
          %v1400 = vsub.f32 %v1368, %v1384
          %v1401 = vsub.f32 %v1369, %v1385
          %v1402 = vsub.f32 %v1370, %v1386
          %v1403 = vsub.f32 %v1371, %v1387
          %v1404 = vsub.f32 %v1372, %v1388
          %v1405 = vsub.f32 %v1373, %v1389
          %v1406 = vsub.f32 %v1374, %v1390
          %v1407 = vmax.f32 %v1391, 0.0
          %v1408 = vmax.f32 %v1392, 0.0
          %v1409 = vmax.f32 %v1393, 0.0
          %v1410 = vmax.f32 %v1394, 0.0
          %v1411 = vmax.f32 %v1395, 0.0
          %v1412 = vmax.f32 %v1396, 0.0
          %v1413 = vmax.f32 %v1397, 0.0
          %v1414 = vmax.f32 %v1398, 0.0
          %v1415 = vmax.f32 %v1399, 0.0
          %v1416 = vmax.f32 %v1400, 0.0
          %v1417 = vmax.f32 %v1401, 0.0
          %v1418 = vmax.f32 %v1402, 0.0
          %v1419 = vmax.f32 %v1403, 0.0
          %v1420 = vmax.f32 %v1404, 0.0
          %v1421 = vmax.f32 %v1405, 0.0
          %v1422 = vmax.f32 %v1406, 0.0
          %v1423 = vsub.f32 %v1201, %v1295
          %v1424 = vsub.f32 %v1204, %v1296
          %v1425 = vsub.f32 %v1209, %v1297
          %v1426 = vsub.f32 %v1212, %v1298
          %v1427 = vsub.f32 %v1217, %v1299
          %v1428 = vsub.f32 %v1220, %v1300
          %v1429 = vsub.f32 %v1225, %v1301
          %v1430 = vsub.f32 %v1228, %v1302
          %v1431 = vsub.f32 %v1233, %v1303
          %v1432 = vsub.f32 %v1236, %v1304
          %v1433 = vsub.f32 %v1241, %v1305
          %v1434 = vsub.f32 %v1244, %v1306
          %v1435 = vsub.f32 %v1249, %v1307
          %v1436 = vsub.f32 %v1252, %v1308
          %v1437 = vsub.f32 %v1257, %v1309
          %v1438 = vsub.f32 %v1260, %v1310
          %v1439 = vadd.f32 %v1407, 1e-05
          %v1440 = vadd.f32 %v1408, 1e-05
          %v1441 = vadd.f32 %v1409, 1e-05
          %v1442 = vadd.f32 %v1410, 1e-05
          %v1443 = vadd.f32 %v1411, 1e-05
          %v1444 = vadd.f32 %v1412, 1e-05
          %v1445 = vadd.f32 %v1413, 1e-05
          %v1446 = vadd.f32 %v1414, 1e-05
          %v1447 = vadd.f32 %v1415, 1e-05
          %v1448 = vadd.f32 %v1416, 1e-05
          %v1449 = vadd.f32 %v1417, 1e-05
          %v1450 = vadd.f32 %v1418, 1e-05
          %v1451 = vadd.f32 %v1419, 1e-05
          %v1452 = vadd.f32 %v1420, 1e-05
          %v1453 = vadd.f32 %v1421, 1e-05
          %v1454 = vadd.f32 %v1422, 1e-05
          %v1455 = vrsqrt.pop %v1439
          %v1456 = vrsqrt.pop %v1440
          %v1457 = vrsqrt.pop %v1441
          %v1458 = vrsqrt.pop %v1442
          %v1459 = vrsqrt.pop %v1443
          %v1460 = vrsqrt.pop %v1444
          %v1461 = vrsqrt.pop %v1445
          %v1462 = vrsqrt.pop %v1446
          %v1463 = vrsqrt.pop %v1447
          %v1464 = vrsqrt.pop %v1448
          %v1465 = vrsqrt.pop %v1449
          %v1466 = vrsqrt.pop %v1450
          %v1467 = vrsqrt.pop %v1451
          %v1468 = vrsqrt.pop %v1452
          %v1469 = vrsqrt.pop %v1453
          %v1470 = vrsqrt.pop %v1454
          %v1471 = vmul.f32 %v1423, %v1455
          %v1472 = vmul.f32 %v1424, %v1456
          %v1473 = vmul.f32 %v1425, %v1457
          %v1474 = vmul.f32 %v1426, %v1458
          %v1475 = vmul.f32 %v1427, %v1459
          %v1476 = vmul.f32 %v1428, %v1460
          %v1477 = vmul.f32 %v1429, %v1461
          %v1478 = vmul.f32 %v1430, %v1462
          %v1479 = vmul.f32 %v1431, %v1463
          %v1480 = vmul.f32 %v1432, %v1464
          %v1481 = vmul.f32 %v1433, %v1465
          %v1482 = vmul.f32 %v1434, %v1466
          %v1483 = vmul.f32 %v1435, %v1467
          %v1484 = vmul.f32 %v1436, %v1468
          %v1485 = vmul.f32 %v1437, %v1469
          %v1486 = vmul.f32 %v1438, %v1470
          %v1487 = vld [vmem:[%s6] sm:$0x1]
          %v1489 = vlaneseq
          %v1490 = vshrl.u32 %v1489, 7
          %v1491 = vsub.s32 0, %v1490
          %v1492 = vrot.slane %v1487, %v1491
          %v1494 = vmul.f32 %v1471, %v1492
          %v1495 = vmul.f32 %v1472, %v1492
          %v1496 = vmul.f32 %v1473, %v1492
          %v1497 = vmul.f32 %v1474, %v1492
          %v1498 = vmul.f32 %v1475, %v1492
          %v1499 = vmul.f32 %v1476, %v1492
          %v1500 = vmul.f32 %v1477, %v1492
          %v1501 = vmul.f32 %v1478, %v1492
          %v1502 = vmul.f32 %v1479, %v1492
          %v1503 = vmul.f32 %v1480, %v1492
          %v1504 = vmul.f32 %v1481, %v1492
          %v1505 = vmul.f32 %v1482, %v1492
          %v1506 = vmul.f32 %v1483, %v1492
          %v1507 = vmul.f32 %v1484, %v1492
          %v1508 = vmul.f32 %v1485, %v1492
          %v1509 = vmul.f32 %v1486, %v1492
          %v1510 = vld [vmem:[%s7] sm:$0x1]
          %v1512 = vlaneseq
          %v1513 = vshrl.u32 %v1512, 7
          %v1514 = vsub.s32 0, %v1513
          %v1515 = vrot.slane %v1510, %v1514
          %v1517 = vadd.f32 %v1494, %v1515
          %v1518 = vadd.f32 %v1495, %v1515
          %v1519 = vadd.f32 %v1496, %v1515
          %v1520 = vadd.f32 %v1497, %v1515
          %v1521 = vadd.f32 %v1498, %v1515
          %v1522 = vadd.f32 %v1499, %v1515
          %v1523 = vadd.f32 %v1500, %v1515
          %v1524 = vadd.f32 %v1501, %v1515
          %v1525 = vadd.f32 %v1502, %v1515
          %v1526 = vadd.f32 %v1503, %v1515
          %v1527 = vadd.f32 %v1504, %v1515
          %v1528 = vadd.f32 %v1505, %v1515
          %v1529 = vadd.f32 %v1506, %v1515
          %v1530 = vadd.f32 %v1507, %v1515
          %v1531 = vadd.f32 %v1508, %v1515
          %v1532 = vadd.f32 %v1509, %v1515
          %v1533 = vmax.f32 %v1517, 0.0
          %v1534 = vmax.f32 %v1518, 0.0
          %v1535 = vmax.f32 %v1519, 0.0
          %v1536 = vmax.f32 %v1520, 0.0
          %v1537 = vmax.f32 %v1521, 0.0
          %v1538 = vmax.f32 %v1522, 0.0
          %v1539 = vmax.f32 %v1523, 0.0
          %v1540 = vmax.f32 %v1524, 0.0
          %v1541 = vmax.f32 %v1525, 0.0
          %v1542 = vmax.f32 %v1526, 0.0
          %v1543 = vmax.f32 %v1527, 0.0
          %v1544 = vmax.f32 %v1528, 0.0
          %v1545 = vmax.f32 %v1529, 0.0
          %v1546 = vmax.f32 %v1530, 0.0
          %v1547 = vmax.f32 %v1531, 0.0
          %v1548 = vmax.f32 %v1532, 0.0
          %v1549 = vpack.c.bf16 %v1534, %v1533
          %v1550 = vpack.c.bf16 %v1536, %v1535
          %v1551 = vpack.c.bf16 %v1538, %v1537
          %v1552 = vpack.c.bf16 %v1540, %v1539
          %v1553 = vpack.c.bf16 %v1542, %v1541
          %v1554 = vpack.c.bf16 %v1544, %v1543
          %v1555 = vpack.c.bf16 %v1546, %v1545
          %v1556 = vpack.c.bf16 %v1548, %v1547
          %v1557 = vld [vmem:[%s8] sm:$0xf]
          %v1558 = vld [vmem:[%s8 + $0x4] sm:$0xf]
          %v1559 = vld [vmem:[%s8 + $0x8] sm:$0xf]
          %v1560 = vld [vmem:[%s8 + $0xc] sm:$0xf]
          %v1561 = vld [vmem:[%s8 + $0x10] sm:$0xf]
          %v1562 = vld [vmem:[%s8 + $0x14] sm:$0xf]
          %v1563 = vld [vmem:[%s8 + $0x18] sm:$0xf]
          %v1564 = vld [vmem:[%s8 + $0x1c] sm:$0xf]
          %v1565 = vld [vmem:[%s8 + $0x20] sm:$0xf]
          %v1566 = vld [vmem:[%s8 + $0x24] sm:$0xf]
          %v1567 = vld [vmem:[%s8 + $0x28] sm:$0xf]
          %v1568 = vld [vmem:[%s8 + $0x2c] sm:$0xf]
          %v1569 = vld [vmem:[%s8 + $0x30] sm:$0xf]
          %v1570 = vld [vmem:[%s8 + $0x34] sm:$0xf]
          %v1571 = vld [vmem:[%s8 + $0x38] sm:$0xf]
          %v1572 = vld [vmem:[%s8 + $0x3c] sm:$0xf]
          %v1573 = vld [vmem:[%s9] sm:$0x1]
          %v1575 = vlaneseq
          %v1576 = vshrl.u32 %v1575, 7
          %v1577 = vsub.s32 0, %v1576
          %v1578 = vrot.slane %v1573, %v1577
          %v1596 = vunpack.c.l.b16 %v1557
          %v1597 = vunpack.c.l.b16 %v1558
          %v1598 = vunpack.c.l.b16 %v1559
          %v1599 = vunpack.c.l.b16 %v1560
          %v1600 = vunpack.c.l.b16 %v1561
          %v1601 = vunpack.c.l.b16 %v1562
          %v1602 = vunpack.c.l.b16 %v1563
          %v1603 = vunpack.c.l.b16 %v1564
          %v1604 = vunpack.c.l.b16 %v1565
          %v1605 = vunpack.c.l.b16 %v1566
          %v1606 = vunpack.c.l.b16 %v1567
          %v1607 = vunpack.c.l.b16 %v1568
          %v1608 = vunpack.c.l.b16 %v1569
          %v1609 = vunpack.c.l.b16 %v1570
          %v1610 = vunpack.c.l.b16 %v1571
          %v1611 = vunpack.c.l.b16 %v1572
          %v1612 = vpack.c.b16 %v1597, %v1596
          %v1613 = vpack.c.b16 %v1599, %v1598
          %v1614 = vpack.c.b16 %v1601, %v1600
          %v1615 = vpack.c.b16 %v1603, %v1602
          %v1616 = vpack.c.b16 %v1605, %v1604
          %v1617 = vpack.c.b16 %v1607, %v1606
          %v1618 = vpack.c.b16 %v1609, %v1608
          %v1619 = vpack.c.b16 %v1611, %v1610
          %1628 = vmatprep.subr.bf16.mxu0 0
          %1629 = vmatpush1.bf16.msra.mxu0 %v1612
          %1630 = vmatprep.subr.bf16.mxu0 0
          %1631 = vmatpush1.bf16.msra.mxu0 %v1613
          %1632 = vmatprep.subr.bf16.mxu0 0
          %1633 = vmatpush1.bf16.msra.mxu0 %v1614
          %1634 = vmatprep.subr.bf16.mxu0 0
          %1635 = vmatpush1.bf16.msra.mxu0 %v1615
          %1636 = vmatprep.subr.bf16.mxu0 0
          %1637 = vmatpush1.bf16.msra.mxu0 %v1616
          %1638 = vmatprep.subr.bf16.mxu0 0
          %1639 = vmatpush1.bf16.msra.mxu0 %v1617
          %1640 = vmatprep.subr.bf16.mxu0 0
          %1641 = vmatpush1.bf16.msra.mxu0 %v1618
          %1642 = vmatprep.subr.bf16.mxu0 0
          %1643 = vmatpush1.bf16.msra.mxu0 %v1619
          %1644 = vmatprep.subr.bf16.mxu0 0
          %1645 = vmatpush1.bf16.msra.mxu0 0
          %1646 = vmatprep.subr.bf16.mxu0 0
          %1647 = vmatpush1.bf16.msra.mxu0 0
          %1648 = vmatprep.subr.bf16.mxu0 0
          %1649 = vmatpush1.bf16.msra.mxu0 0
          %1650 = vmatprep.subr.bf16.mxu0 0
          %1651 = vmatpush1.bf16.msra.mxu0 0
          %1652 = vmatprep.subr.bf16.mxu0 0
          %1653 = vmatpush1.bf16.msra.mxu0 0
          %1654 = vmatprep.subr.bf16.mxu0 0
          %1655 = vmatpush1.bf16.msra.mxu0 0
          %1656 = vmatprep.subr.bf16.mxu0 0
          %1657 = vmatpush1.bf16.msra.mxu0 0
          %1658 = vmatprep.subr.bf16.mxu0 0
          %1659 = vmatpush1.bf16.msra.mxu0 0
          %1660 = vmatprep.mubr.bf16.mxu0 0
          %1661 = vmatmul.mubr.bf16.gmra.mrb[0].mxu0 %v1549
          %v1662 = vpop.f32.mrb[0].mxu0
          %v1663 = vadd.f32 %v1578, %v1662
          %v1664 = vpop.f32.mrb[0].mxu0
          %v1665 = vpop.f32.mrb[0].mxu0
          %v1666 = vadd.f32 %v1578, %v1665
          %v1667 = vpop.f32.mrb[0].mxu0
          %1668 = vmatprep.mubr.bf16.mxu0 0
          %1669 = vmatmul.mubr.bf16.gmra.mrb[0].mxu0 %v1550
          %v1670 = vpop.f32.mrb[0].mxu0
          %v1671 = vadd.f32 %v1578, %v1670
          %v1672 = vpop.f32.mrb[0].mxu0
          %v1673 = vpop.f32.mrb[0].mxu0
          %v1674 = vadd.f32 %v1578, %v1673
          %v1675 = vpop.f32.mrb[0].mxu0
          %1676 = vmatprep.mubr.bf16.mxu0 0
          %1677 = vmatmul.mubr.bf16.gmra.mrb[0].mxu0 %v1551
          %v1678 = vpop.f32.mrb[0].mxu0
          %v1679 = vadd.f32 %v1578, %v1678
          %v1680 = vpop.f32.mrb[0].mxu0
          %v1681 = vpop.f32.mrb[0].mxu0
          %v1682 = vadd.f32 %v1578, %v1681
          %v1683 = vpop.f32.mrb[0].mxu0
          %1684 = vmatprep.mubr.bf16.mxu0 0
          %1685 = vmatmul.mubr.bf16.gmra.mrb[0].mxu0 %v1552
          %v1686 = vpop.f32.mrb[0].mxu0
          %v1687 = vadd.f32 %v1578, %v1686
          %v1688 = vpop.f32.mrb[0].mxu0
          %v1689 = vpop.f32.mrb[0].mxu0
          %v1690 = vadd.f32 %v1578, %v1689
          %v1691 = vpop.f32.mrb[0].mxu0
          %1692 = vmatprep.mubr.bf16.mxu0 0
          %1693 = vmatmul.mubr.bf16.gmra.mrb[0].mxu0 %v1553
          %v1694 = vpop.f32.mrb[0].mxu0
          %v1695 = vadd.f32 %v1578, %v1694
          %v1696 = vpop.f32.mrb[0].mxu0
          %v1697 = vpop.f32.mrb[0].mxu0
          %v1698 = vadd.f32 %v1578, %v1697
          %v1699 = vpop.f32.mrb[0].mxu0
          %1700 = vmatprep.mubr.bf16.mxu0 0
          %1701 = vmatmul.mubr.bf16.gmra.mrb[0].mxu0 %v1554
          %v1702 = vpop.f32.mrb[0].mxu0
          %v1703 = vadd.f32 %v1578, %v1702
          %v1704 = vpop.f32.mrb[0].mxu0
          %v1705 = vpop.f32.mrb[0].mxu0
          %v1706 = vadd.f32 %v1578, %v1705
          %v1707 = vpop.f32.mrb[0].mxu0
          %1708 = vmatprep.mubr.bf16.mxu0 0
          %1709 = vmatmul.mubr.bf16.gmra.mrb[0].mxu0 %v1555
          %v1710 = vpop.f32.mrb[0].mxu0
          %v1711 = vadd.f32 %v1578, %v1710
          %v1712 = vpop.f32.mrb[0].mxu0
          %v1713 = vpop.f32.mrb[0].mxu0
          %v1714 = vadd.f32 %v1578, %v1713
          %v1715 = vpop.f32.mrb[0].mxu0
          %1716 = vmatprep.mubr.bf16.mxu0 0
          %1717 = vmatmul.mubr.bf16.gmra.mrb[0].mxu0 %v1556
          %v1718 = vpop.f32.mrb[0].mxu0
          %v1719 = vadd.f32 %v1578, %v1718
          %v1720 = vpop.f32.mrb[0].mxu0
          %v1721 = vpop.f32.mrb[0].mxu0
          %v1722 = vadd.f32 %v1578, %v1721
          %v1723 = vpop.f32.mrb[0].mxu0
          %1724 = vdwg.mxu0
          %v1725 = vld [vmem:[%s541] sm:$0xff]
          %v1726 = vld [vmem:[%s541 + $0x8] sm:$0xff]
          %v1727 = vld [vmem:[%s541 + $0x10] sm:$0xff]
          %v1728 = vld [vmem:[%s541 + $0x18] sm:$0xff]
          %v1729 = vld [vmem:[%s541 + $0x20] sm:$0xff]
          %v1730 = vld [vmem:[%s541 + $0x28] sm:$0xff]
          %v1731 = vld [vmem:[%s541 + $0x30] sm:$0xff]
          %v1732 = vld [vmem:[%s541 + $0x38] sm:$0xff]
          %v1733 = vld [vmem:[%s541 + $0x40] sm:$0xff]
          %v1734 = vld [vmem:[%s541 + $0x48] sm:$0xff]
          %v1735 = vld [vmem:[%s541 + $0x50] sm:$0xff]
          %v1736 = vld [vmem:[%s541 + $0x58] sm:$0xff]
          %v1737 = vld [vmem:[%s541 + $0x60] sm:$0xff]
          %v1738 = vld [vmem:[%s541 + $0x68] sm:$0xff]
          %v1739 = vld [vmem:[%s541 + $0x70] sm:$0xff]
          %v1740 = vld [vmem:[%s541 + $0x78] sm:$0xff]
          %v1741 = vadd.f32 %v1725, %v1663
          %v1742 = vadd.f32 %v1726, %v1666
          %v1743 = vadd.f32 %v1727, %v1671
          %v1744 = vadd.f32 %v1728, %v1674
          %v1745 = vadd.f32 %v1729, %v1679
          %v1746 = vadd.f32 %v1730, %v1682
          %v1747 = vadd.f32 %v1731, %v1687
          %v1748 = vadd.f32 %v1732, %v1690
          %v1749 = vadd.f32 %v1733, %v1695
          %v1750 = vadd.f32 %v1734, %v1698
          %v1751 = vadd.f32 %v1735, %v1703
          %v1752 = vadd.f32 %v1736, %v1706
          %v1753 = vadd.f32 %v1737, %v1711
          %v1754 = vadd.f32 %v1738, %v1714
          %v1755 = vadd.f32 %v1739, %v1719
          %v1756 = vadd.f32 %v1740, %v1722
          %1757 = vst [vmem:[%s547] sm:$0xff] %v1741
          %1758 = vst [vmem:[%s547 + $0x8] sm:$0xff] %v1742
          %1759 = vst [vmem:[%s547 + $0x10] sm:$0xff] %v1743
          %1760 = vst [vmem:[%s547 + $0x18] sm:$0xff] %v1744
          %1761 = vst [vmem:[%s547 + $0x20] sm:$0xff] %v1745
          %1762 = vst [vmem:[%s547 + $0x28] sm:$0xff] %v1746
          %1763 = vst [vmem:[%s547 + $0x30] sm:$0xff] %v1747
          %1764 = vst [vmem:[%s547 + $0x38] sm:$0xff] %v1748
          %1765 = vst [vmem:[%s547 + $0x40] sm:$0xff] %v1749
          %1766 = vst [vmem:[%s547 + $0x48] sm:$0xff] %v1750
          %1767 = vst [vmem:[%s547 + $0x50] sm:$0xff] %v1751
          %1768 = vst [vmem:[%s547 + $0x58] sm:$0xff] %v1752
          %1769 = vst [vmem:[%s547 + $0x60] sm:$0xff] %v1753
          %1770 = vst [vmem:[%s547 + $0x68] sm:$0xff] %v1754
          %1771 = vst [vmem:[%s547 + $0x70] sm:$0xff] %v1755
          %1772 = vst [vmem:[%s547 + $0x78] sm:$0xff] %v1756
        $region109: #{deeper_gcn_forward.9} parent=96 // pred_fallthru
          _
        %s1773 = smul.u32 16, %s25
        %p1774 = scmp.lt.s32.totalorder %s1773, 31
        %s1775 = scalar_select %p1774, %s1773, 31
        %s1776 = smul.addr %s1775, 8
        %s1777 = scalar_lea.vmem %s10, %s1776
        // Predicated region
        $region110: #{deeper_gcn_forward.9} parent=96 // pred_check
          %p1778 = pneg %p283
        $region111: #{deeper_gcn_forward.9} parent=96 // pred_check_branch
          %1780 = sbr.rel (%p1778) target = $region113
        $region112: #{deeper_gcn_forward.9} parent=96 // pred_region
          %s1781 = smul.u32 16, %s25
        $region113: #{deeper_gcn_forward.9} parent=96 // pred_fallthru
          _
      $region97: #{deeper_gcn_forward.9} parent=5 // pred_fallthru
        _
      %p1782 = scmp.le.s32.totalorder 2, %s16
      // Predicated region
      $region114: #{deeper_gcn_forward.9} parent=5 // pred_check
        %p1783 = pneg %p1782
      $region115: #{deeper_gcn_forward.9} parent=5 // pred_check_branch
        %1785 = sbr.rel (%p1783) target = $region117
      $region116: #{deeper_gcn_forward.9} parent=5 // pred_region
        %s1786 = ssub.s32 %s16, 2
        // Predicated region
        $region118: #{deeper_gcn_forward.9} parent=116 // pred_check
          %p1787 = pneg %p289
        $region119: #{deeper_gcn_forward.9} parent=116 // pred_check_branch
          %1789 = sbr.rel (%p1787) target = $region121
        $region120: #{deeper_gcn_forward.9} parent=116 // pred_region
          %s1790 = smul.u32 16, %s27
          %p1791 = scmp.lt.s32.totalorder %s1790, 31
          %s1792 = scalar_select %p1791, %s1790, 31
          %s1793 = smul.addr %s1792, 8
          %s1794 = scalar_lea.vmem %s10, %s1793
        $region121: #{deeper_gcn_forward.9} parent=116 // pred_fallthru
          _
      $region117: #{deeper_gcn_forward.9} parent=5 // pred_fallthru
        _
    $region6: #{deeper_gcn_forward.9} parent=1 // loop_footer
      %s20 = sadd.s32 1, %s16
    $region7: #{deeper_gcn_forward.9} parent=1 // loop_footer_branch
      %15 = sbr.rel target = $region3
    $region8: #{deeper_gcn_forward.9} parent=1 // loop_exit
      _

</llo_original>
